<compile_context>
chip_gen: v7x
topology: tpu7x:2x2x1
jax: 0.10.0
libtpu: 0.0.40
codegen_flags: <defaults>
</compile_context>

<pallas_src>
import numpy as np
import jax
import jax.numpy as jnp
from jax import lax
from jax.experimental import pallas as pl
from jax.experimental.pallas import tpu as pltpu

# EEG-style frequency bands used by mngs.dsp.rfft_bands
_BANDS_HZ = (
    (0.5, 4.0),    # delta
    (4.0, 8.0),    # theta
    (8.0, 10.0),   # low alpha
    (10.0, 13.0),  # high alpha
    (13.0, 32.0),  # beta
    (32.0, 75.0),  # gamma
)
_N_BANDS = len(_BANDS_HZ)
_N_SCALAR = 8                          # mean,std,skew,kurt,median,q25,q75,rms
_N_FEATS = _N_SCALAR + _N_BANDS + 1    # 15
_OUT_PAD = 128                         # lane-dense output width (sliced in wrapper)
_BEYOND_LANE = _N_SCALAR + _N_BANDS    # 14
_SUM_LANE = _N_FEATS                   # 15: amp_sum column (sliced away in wrapper)


def _round_up(v, m):
    return ((v + m - 1) // m) * m


def _dft_tables(seq_len, samp_rate, f_blk, n_fblk):
    """bf16 real-DFT table (frequency-blocked [cos|-sin] layout) + bf16 band table.

    trig: (T, n_fblk * 2 * f_blk); block k holds [cos_k | -sin_k] for the
          frequencies [k*f_blk, (k+1)*f_blk), so a (T, 2*f_blk) BlockSpec with
          index (0, k) streams one frequency block.
    band: (n_fblk * f_blk, 128); rows are absolute frequency indices. Columns
          _N_SCALAR.._N_SCALAR+5 hold the band-averaging weights (so amp @ band
          drops the band means directly into their output lanes) and column
          _SUM_LANE is all-ones, folding the amp_sum reduction into the matmul.
    """
    T = seq_len
    F = T // 2 + 1
    F_tot = f_blk * n_fblk

    t = np.arange(T, dtype=np.float64)[:, None]
    k = np.arange(F, dtype=np.float64)[None, :]
    ang = 2.0 * np.pi * t * k / T
    cos_full = np.zeros((T, F_tot), np.float64)
    sin_full = np.zeros((T, F_tot), np.float64)
    cos_full[:, :F] = np.cos(ang)
    sin_full[:, :F] = -np.sin(ang)

    trig = np.zeros((T, n_fblk * 2 * f_blk), np.float32)
    for kb in range(n_fblk):
        sl = slice(kb * f_blk, (kb + 1) * f_blk)
        trig[:, kb * 2 * f_blk: kb * 2 * f_blk + f_blk] = cos_full[:, sl]
        trig[:, kb * 2 * f_blk + f_blk: (kb + 1) * 2 * f_blk] = sin_full[:, sl]

    freqs = np.fft.rfftfreq(T, d=1.0 / samp_rate)
    band = np.zeros((F_tot, _OUT_PAD), np.float32)
    for j, (lo, hi) in enumerate(_BANDS_HZ):
        m = (freqs >= lo) & (freqs < hi)
        if m.sum() == 0:
            raise ValueError(f"empty band {lo}-{hi} Hz for T={T}, fs={samp_rate}")
        band[:F, _N_SCALAR + j] = m.astype(np.float32) / float(m.sum())
    band[:F, _SUM_LANE] = 1.0   # amp_sum folded into the matmul (review item)

    # bf16 DFT + bf16 band operands: native MXU bf16 x bf16 -> f32 path.
    return (jnp.asarray(trig, dtype=jnp.bfloat16),
            jnp.asarray(band, dtype=jnp.bfloat16))


def _make_feature_kernel(seq_len, f_blk):
    n = seq_len
    pos25 = 0.25 * (n - 1)                       # torch.quantile linear interp
    pos75 = 0.75 * (n - 1)
    w25 = float(pos25 - np.floor(pos25))
    w75 = float(pos75 - np.floor(pos75))
    inv_n = 1.0 / n
    inv_nm1 = 1.0 / max(n - 1, 1)

    def kernel(x_ref, q_ref, trig_ref, band_ref, o_ref, acc_ref):
        k = pl.program_id(1)

        @pl.when(k == 0)
        def _():
            acc_ref[...] = jnp.zeros_like(acc_ref)

        # ---- rfft band amplitudes for this frequency block --------------------
        # one fused [cos|-sin] bf16 matmul on the MXU, f32 accumulation
        xb = x_ref[...].astype(jnp.bfloat16)                  # (rows, T) bf16
        y = jnp.dot(xb, trig_ref[...],
                    preferred_element_type=jnp.float32)       # (rows, 2*f_blk)
        re = y[:, :f_blk]
        im = y[:, f_blk:]
        amp = jnp.sqrt(re * re + im * im)
        # bf16 band matmul (review): band means land at lanes 8..13 of the
        # lane-dense 128-wide slab; the ones column at lane 15 yields amp_sum.
        acc_ref[...] += jnp.dot(amp.astype(jnp.bfloat16), band_ref[...],
                                preferred_element_type=jnp.float32)

        @pl.when(k == pl.num_programs(1) - 1)
        def _():
            x = x_ref[...]                                    # (rows, T) f32

            # ---- moment features: one pass of centered power sums ------------
            mean = jnp.sum(x, axis=-1, keepdims=True) * inv_n
            xc = x - mean
            xc2 = xc * xc
            s2 = jnp.sum(xc2, axis=-1, keepdims=True)
            s3 = jnp.sum(xc2 * xc, axis=-1, keepdims=True)
            s4 = jnp.sum(xc2 * xc2, axis=-1, keepdims=True)
            var_u = s2 * inv_nm1                              # unbiased (torch.std)
            std = jnp.sqrt(var_u)
            inv_std = jnp.where(std > 0.0, 1.0 / std, 0.0)    # guard constant rows
            inv_std2 = inv_std * inv_std
            skew = s3 * inv_n * inv_std2 * inv_std
            kurt = s4 * inv_n * inv_std2 * inv_std2 - 3.0
            rms = jnp.sqrt(s2 * inv_n + mean * mean)          # no 2nd full reduction
            beyond = jnp.sum((xc2 > 4.0 * var_u).astype(jnp.float32),
                             axis=-1, keepdims=True) * inv_n  # |x-mean| > 2*std

            # ---- order statistics from pre-sorted columns (sorted in XLA) ----
            q = q_ref[...]                                    # (rows, 128)
            median = q[:, 0:1]                                # lower-middle (torch)
            q25 = (1.0 - w25) * q[:, 1:2] + w25 * q[:, 2:3]
            q75 = (1.0 - w75) * q[:, 3:4] + w75 * q[:, 4:5]

            # ---- normalize band lanes by the folded amp_sum -------------------
            acc = acc_ref[...]
            amp_sum = acc[:, _SUM_LANE:_SUM_LANE + 1]
            inv_amp = jnp.where(amp_sum > 0.0, 1.0 / amp_sum, 0.0)
            out = acc * inv_amp

            # ---- drop the 9 scalar features into their lanes; one wide store -
            lane = lax.broadcasted_iota(jnp.int32, out.shape, 1)
            for idx, val in ((0, mean), (1, std), (2, skew), (3, kurt),
                             (4, median), (5, q25), (6, q75), (7, rms),
                             (_BEYOND_LANE, beyond)):
                out = jnp.where(lane == idx, val, out)
            o_ref[...] = out

    return kernel


def _vmem_estimate(rb, T, f_blk, n_fblk):
    """Rough per-step VMEM estimate (generous on in-kernel temporaries)."""
    table_bufs = 1 if n_fblk == 1 else 2          # resident vs. streamed
    trig_bytes = table_bufs * T * 2 * f_blk * 2   # bf16
    band_bytes = table_bufs * f_blk * _OUT_PAD * 2
    x_bytes = 2 * rb * T * 4
    q_bytes = 2 * rb * _OUT_PAD * 4
    out_bytes = 2 * rb * _OUT_PAD * 4
    acc_bytes = rb * _OUT_PAD * 4
    # y/amp (+bf16 copies) ~ 20*f_blk per row; centered-moment chain ~ 24*T
    tmp_bytes = rb * (20 * f_blk + 24 * T)
    return (trig_bytes + band_bytes + x_bytes + q_bytes + out_bytes + acc_bytes
            + tmp_bytes + (2 << 20))


def _pick_f_block(T, vmem_budget, f_block=None):
    """Choose the frequency-block width (multiple of 128) and block count."""
    F = T // 2 + 1
    F_pad_full = _round_up(F, 128)
    if f_block is not None:
        f_blk = min(max(128, _round_up(int(f_block), 128)), F_pad_full)
    else:
        f_blk = F_pad_full
        # A single-buffered full trig table may use at most ~40% of the budget;
        # otherwise stream it (double-buffered) over an 'arbitrary' freq axis.
        def trig_cost(fb):
            bufs = 1 if fb >= F_pad_full else 2
            return bufs * T * 2 * fb * 2
        while f_blk > 128 and trig_cost(f_blk) > int(0.4 * vmem_budget):
            f_blk = max(128, _round_up(f_blk // 2, 128))
    n_fblk = pl.cdiv(F_pad_full, f_blk)
    return f_blk, n_fblk


def _pick_row_block(R, T, f_blk, n_fblk, vmem_budget, row_block=None):
    """Row tile: big enough to amortize ~0.35us/step, >=2 grid steps, fits VMEM."""
    if row_block is not None:
        return max(8, (int(row_block) // 8) * 8)
    R8 = _round_up(max(R, 1), 8)
    rb = 512 if T <= 512 else (256 if T <= 1024 else 128)
    if R8 >= 16:
        rb = min(rb, max(8, ((R8 // 2) // 8) * 8))   # keep >=2 row steps (megacore)
    else:
        rb = 8
    while rb > 8 and _vmem_estimate(rb, T, f_blk, n_fblk) > vmem_budget:
        rb = max(8, ((rb // 2) // 8) * 8)
    return rb


def feature_extractor_pallas(x, samp_rate, row_block=None, f_block=None):
    """x: (batch, channels, time) -> (batch, channels, 15) float32."""
    B, C, T = x.shape
    R = B * C
    x2 = x.reshape(R, T).astype(jnp.float32)

    # Per-generation VMEM budget (v7x: 64 MiB/TC) with ~8 MiB headroom.
    try:
        vmem_cap = int(getattr(pltpu.get_tpu_info(), "vmem_capacity_bytes"))
        if vmem_cap <= 0:
            raise ValueError
    except Exception:
        vmem_cap = 64 << 20   # conservative fallback: v7x per-TensorCore VMEM
    vmem_budget = max(16 << 20, vmem_cap - (8 << 20))

    f_blk, n_fblk = _pick_f_block(T, vmem_budget, f_block)
    rb = _pick_row_block(R, T, f_blk, n_fblk, vmem_budget, row_block)

    R_pad = _round_up(R, rb)
    if R_pad != R:
        x2 = jnp.pad(x2, ((0, R_pad - R), (0, 0)))

    # TODO(synk): lax.sort has no Pallas/Mosaic TPU lowering; the per-row sort
    # runs in XLA and may dominate wall-clock for moderate T (profile full jit).
    k_med = (T - 1) // 2
    lo25 = int(np.floor(0.25 * (T - 1))); hi25 = min(lo25 + 1, T - 1)
    lo75 = int(np.floor(0.75 * (T - 1))); hi75 = min(lo75 + 1, T - 1)
    xs = jnp.sort(x2, axis=-1)
    qcols = xs[:, np.array([k_med, lo25, hi25, lo75, hi75])]
    qcols = jnp.pad(qcols, ((0, 0), (0, _OUT_PAD - 5)))   # lane-dense (R_pad, 128)

    trig, band = _dft_tables(T, samp_rate, f_blk, n_fblk)
    kernel = _make_feature_kernel(T, f_blk)

    est = _vmem_estimate(rb, T, f_blk, n_fblk)
    vmem_limit = int(min(vmem_budget, max(32 << 20, est)))

    if n_fblk == 1:
        # Grid-invariant tables: whole-array VMEM residency (single copy, no
        # double buffering) — avoids duplicating the largest resident operand.
        trig_spec = pl.BlockSpec(memory_space=pltpu.MemorySpace.VMEM)
        band_spec = pl.BlockSpec(memory_space=pltpu.MemorySpace.VMEM)
    else:
        # Large-T path: stream the DFT table over the 'arbitrary' frequency axis.
        trig_spec = pl.BlockSpec((T, 2 * f_blk), lambda i, k: (0, k))
        band_spec = pl.BlockSpec((f_blk, _OUT_PAD), lambda i, k: (k, 0))

    out_pad = pl.pallas_call(
        kernel,
        out_shape=jax.ShapeDtypeStruct((R_pad, _OUT_PAD), jnp.float32),
        grid_spec=pltpu.PrefetchScalarGridSpec(
            num_scalar_prefetch=0,
            grid=(R_pad // rb, n_fblk),
            in_specs=[
                pl.BlockSpec((rb, T), lambda i, k: (i, 0)),           # signal rows
                pl.BlockSpec((rb, _OUT_PAD), lambda i, k: (i, 0)),    # sorted cols
                trig_spec,                                            # [cos | -sin]
                band_spec,                                            # band weights
            ],
            out_specs=pl.BlockSpec((rb, _OUT_PAD), lambda i, k: (i, 0)),
            scratch_shapes=[pltpu.VMEM((rb, _OUT_PAD), jnp.float32)],  # band accum
        ),
        compiler_params=pltpu.CompilerParams(
            dimension_semantics=("parallel", "arbitrary"),
            vmem_limit_bytes=vmem_limit),
    )(x2, qcols, trig, band)

    return out_pad[:R, :_N_FEATS].reshape(B, C, _N_FEATS)


def feature_extractor_reference(x, samp_rate):
    """Pure-JAX mirror of the feature math (for correctness checking)."""
    B, C, T = x.shape
    n = T
    x2 = x.reshape(B * C, T).astype(jnp.float32)
    mean = jnp.mean(x2, -1, keepdims=True)
    xc = x2 - mean
    std = jnp.sqrt(jnp.sum(xc * xc, -1, keepdims=True) / (n - 1))
    z = xc / std
    skew = jnp.mean(z ** 3, -1, keepdims=True)
    kurt = jnp.mean(z ** 4, -1, keepdims=True) - 3.0
    xs = jnp.sort(x2, axis=-1)
    median = xs[:, (n - 1) // 2][:, None]

    def quant(p):
        pos = p * (n - 1)
        lo = int(np.floor(pos))
        f = pos - lo
        hi = min(lo + 1, n - 1)
        return ((1.0 - f) * xs[:, lo] + f * xs[:, hi])[:, None]

    q25, q75 = quant(0.25), quant(0.75)
    rms = jnp.sqrt(jnp.mean(x2 * x2, -1, keepdims=True))

    spec = jnp.abs(jnp.fft.rfft(x2, axis=-1))
    spec = spec / jnp.sum(spec, -1, keepdims=True)
    freqs = np.fft.rfftfreq(T, d=1.0 / samp_rate)
    bands = []
    for lo_hz, hi_hz in _BANDS_HZ:
        m = (freqs >= lo_hz) & (freqs < hi_hz)
        bands.append(jnp.mean(spec[:, m], -1, keepdims=True))
    bands = jnp.concatenate(bands, -1)

    beyond = jnp.mean((jnp.abs(xc) > 2.0 * std).astype(jnp.float32),
                      -1, keepdims=True)
    feats = jnp.concatenate(
        [mean, std, skew, kurt, median, q25, q75, rms, bands, beyond], axis=-1)
    return feats.reshape(B, C, _N_FEATS)


if __name__ == "__main__":
    key = jax.random.PRNGKey(0)
    B, C, T = 4, 64, 256          # 256 rows -> two row-tile grid steps
    samp_rate = 256               # 1 Hz rfft resolution; all bands populated
    x = jax.random.normal(key, (B, C, T), dtype=jnp.float32)

    ref = feature_extractor_reference(x, samp_rate)

    # Default path: full DFT table, VMEM-resident (n_fblk == 1).
    out = jax.block_until_ready(feature_extractor_pallas(x, samp_rate))
    np.testing.assert_allclose(np.asarray(out), np.asarray(ref),
                               rtol=5e-3, atol=5e-3)
    assert out.shape == (B, C, _N_FEATS)

    # Frequency-blocked path (what large T uses on v7x), forced here to be
    # exercised and validated at a small shape.
    out_blk = jax.block_until_ready(
        feature_extractor_pallas(x, samp_rate, f_block=128))
    np.testing.assert_allclose(np.asarray(out_blk), np.asarray(ref),
                               rtol=5e-3, atol=5e-3)

    print("KERNEL_OK")
</pallas_src>

<mosaic_0001>
module attributes {stable_mosaic.version = 11 : i64} {
  func.func @kernel(%arg0: i32, %arg1: i32, %arg2: memref<128x256xf32, #tpu.memory_space<vmem>>, %arg3: memref<128x128xf32, #tpu.memory_space<vmem>>, %arg4: memref<256x512xbf16, #tpu.memory_space<vmem>>, %arg5: memref<256x128xbf16, #tpu.memory_space<vmem>>, %arg6: memref<128x128xf32, #tpu.memory_space<vmem>>, %arg7: memref<128x128xf32, #tpu.memory_space<vmem>>) attributes {dimension_semantics = [#tpu.dimension_semantics<parallel>, #tpu.dimension_semantics<arbitrary>], iteration_bounds = array<i64: 2, 1>, scalar_prefetch = 0 : i64, scratch_operands = 1 : i64, tpu.core_type = #tpu.core_type<tc>, window_params = [{transform_indices = @transform_0, window_bounds = array<i64: 128, 256>}, {transform_indices = @transform_1, window_bounds = array<i64: 128, 128>}, {pipeline_mode = #tpu.pipeline_mode<synchronous>, transform_indices = @transform_2, window_bounds = array<i64: 256, 512>}, {pipeline_mode = #tpu.pipeline_mode<synchronous>, transform_indices = @transform_3, window_bounds = array<i64: 256, 128>}, {transform_indices = @transform_4, window_bounds = array<i64: 128, 128>}]} {
    %c0_i32 = arith.constant 0 : i32
    %0 = arith.cmpi eq, %arg1, %c0_i32 : i32
    %1 = arith.extui %0 : i1 to i32
    %c0_i32_0 = arith.constant 0 : i32
    %2 = arith.cmpi ne, %1, %c0_i32_0 : i32
    scf.if %2 {
      %cst_13 = arith.constant 0.000000e+00 : f32
      %22 = vector.broadcast %cst_13 : f32 to vector<128x128xf32>
      %c0_14 = arith.constant 0 : index
      %c0_15 = arith.constant 0 : index
      %23 = vector.load %arg7[%c0_14, %c0_15] : memref<128x128xf32, #tpu.memory_space<vmem>>, vector<128x128xf32>
      tpu.vector_store %arg7[%c0_14, %c0_15], %22 {strides = array<i32>} : memref<128x128xf32, #tpu.memory_space<vmem>>, vector<128x128xf32>,
    } else {
    }
    %c0 = arith.constant 0 : index
    %c0_1 = arith.constant 0 : index
    %3 = vector.load %arg2[%c0, %c0_1] : memref<128x256xf32, #tpu.memory_space<vmem>>, vector<128x256xf32>
    %4 = arith.truncf %3 : vector<128x256xf32> to vector<128x256xbf16>
    %c0_2 = arith.constant 0 : index
    %c0_3 = arith.constant 0 : index
    %5 = vector.load %arg4[%c0_2, %c0_3] : memref<256x512xbf16, #tpu.memory_space<vmem>>, vector<256x512xbf16>
    %cst = arith.constant dense<0.000000e+00> : vector<128x512xf32>
    %6 = tpu.matmul %4, %5, %cst {dimension_numbers = #tpu.dot_dimension_numbers<[1], [0], [0], [1], [0, 0, 1, 1], [], []>} : vector<128x256xbf16>, vector<256x512xbf16>, vector<128x512xf32> -> vector<128x512xf32>
    %7 = vector.extract_strided_slice %6 {offsets = [0, 0], sizes = [128, 256], strides = [1, 1]} : vector<128x512xf32> to vector<128x256xf32>
    %8 = vector.extract_strided_slice %6 {offsets = [0, 256], sizes = [128, 256], strides = [1, 1]} : vector<128x512xf32> to vector<128x256xf32>
    %9 = arith.mulf %7, %7 : vector<128x256xf32>
    %10 = arith.mulf %8, %8 : vector<128x256xf32>
    %11 = arith.addf %9, %10 : vector<128x256xf32>
    %12 = math.sqrt %11 : vector<128x256xf32>
    %c0_4 = arith.constant 0 : index
    %c0_5 = arith.constant 0 : index
    %13 = vector.load %arg7[%c0_4, %c0_5] : memref<128x128xf32, #tpu.memory_space<vmem>>, vector<128x128xf32>
    %14 = arith.truncf %12 : vector<128x256xf32> to vector<128x256xbf16>
    %c0_6 = arith.constant 0 : index
    %c0_7 = arith.constant 0 : index
    %15 = vector.load %arg5[%c0_6, %c0_7] : memref<256x128xbf16, #tpu.memory_space<vmem>>, vector<256x128xbf16>
    %cst_8 = arith.constant dense<0.000000e+00> : vector<128x128xf32>
    %16 = tpu.matmul %14, %15, %cst_8 {dimension_numbers = #tpu.dot_dimension_numbers<[1], [0], [0], [1], [0, 0, 1, 1], [], []>} : vector<128x256xbf16>, vector<256x128xbf16>, vector<128x128xf32> -> vector<128x128xf32>
    %17 = arith.addf %13, %16 : vector<128x128xf32>
    %c0_9 = arith.constant 0 : index
    %c0_10 = arith.constant 0 : index
    %18 = vector.load %arg7[%c0_9, %c0_10] : memref<128x128xf32, #tpu.memory_space<vmem>>, vector<128x128xf32>
    tpu.vector_store %arg7[%c0_9, %c0_10], %17 {strides = array<i32>} : memref<128x128xf32, #tpu.memory_space<vmem>>, vector<128x128xf32>,
    %c0_i32_11 = arith.constant 0 : i32
    %19 = arith.cmpi eq, %arg1, %c0_i32_11 : i32
    %20 = arith.extui %19 : i1 to i32
    %c0_i32_12 = arith.constant 0 : i32
    %21 = arith.cmpi ne, %20, %c0_i32_12 : i32
    scf.if %21 {
      %c0_13 = arith.constant 0 : index
      %c0_14 = arith.constant 0 : index
      %22 = vector.load %arg2[%c0_13, %c0_14] : memref<128x256xf32, #tpu.memory_space<vmem>>, vector<128x256xf32>
      %cst_15 = arith.constant dense<0.000000e+00> : vector<128xf32>
      %23 = vector.multi_reduction <add>, %22, %cst_15 [1] : vector<128x256xf32> to vector<128xf32>
      %24 = vector.shape_cast %23 : vector<128xf32> to vector<128x1xf32>
      %cst_16 = arith.constant 3.906250e-03 : f32
      %25 = vector.broadcast %cst_16 : f32 to vector<128x1xf32>
      %26 = arith.mulf %24, %25 : vector<128x1xf32>
      %27 = vector.broadcast %26 : vector<128x1xf32> to vector<128x256xf32>
      %28 = arith.subf %22, %27 : vector<128x256xf32>
      %29 = arith.mulf %28, %28 : vector<128x256xf32>
      %cst_17 = arith.constant dense<0.000000e+00> : vector<128xf32>
      %30 = vector.multi_reduction <add>, %29, %cst_17 [1] : vector<128x256xf32> to vector<128xf32>
      %31 = vector.shape_cast %30 : vector<128xf32> to vector<128x1xf32>
      %32 = arith.mulf %29, %28 : vector<128x256xf32>
      %cst_18 = arith.constant dense<0.000000e+00> : vector<128xf32>
      %33 = vector.multi_reduction <add>, %32, %cst_18 [1] : vector<128x256xf32> to vector<128xf32>
      %34 = vector.shape_cast %33 : vector<128xf32> to vector<128x1xf32>
      %35 = arith.mulf %29, %29 : vector<128x256xf32>
      %cst_19 = arith.constant dense<0.000000e+00> : vector<128xf32>
      %36 = vector.multi_reduction <add>, %35, %cst_19 [1] : vector<128x256xf32> to vector<128xf32>
      %37 = vector.shape_cast %36 : vector<128xf32> to vector<128x1xf32>
      %cst_20 = arith.constant 0.00392156886 : f32
      %38 = vector.broadcast %cst_20 : f32 to vector<128x1xf32>
      %39 = arith.mulf %31, %38 : vector<128x1xf32>
      %40 = math.sqrt %39 : vector<128x1xf32>
      %cst_21 = arith.constant 0.000000e+00 : f32
      %41 = vector.broadcast %cst_21 : f32 to vector<128x1xf32>
      %42 = arith.cmpf ogt, %40, %41 : vector<128x1xf32>
      %cst_22 = arith.constant 1.000000e+00 : f32
      %43 = vector.broadcast %cst_22 : f32 to vector<128x1xf32>
      %44 = arith.divf %43, %40 : vector<128x1xf32>
      %cst_23 = arith.constant 0.000000e+00 : f32
      %45 = vector.broadcast %cst_23 : f32 to vector<128x1xf32>
      %46 = arith.select %42, %44, %45 : vector<128x1xi1>, vector<128x1xf32>
      %47 = arith.mulf %46, %46 : vector<128x1xf32>
      %cst_24 = arith.constant 3.906250e-03 : f32
      %48 = vector.broadcast %cst_24 : f32 to vector<128x1xf32>
      %49 = arith.mulf %34, %48 : vector<128x1xf32>
      %50 = arith.mulf %49, %47 : vector<128x1xf32>
      %51 = arith.mulf %50, %46 : vector<128x1xf32>
      %cst_25 = arith.constant 3.906250e-03 : f32
      %52 = vector.broadcast %cst_25 : f32 to vector<128x1xf32>
      %53 = arith.mulf %37, %52 : vector<128x1xf32>
      %54 = arith.mulf %53, %47 : vector<128x1xf32>
      %55 = arith.mulf %54, %47 : vector<128x1xf32>
      %cst_26 = arith.constant 3.000000e+00 : f32
      %56 = vector.broadcast %cst_26 : f32 to vector<128x1xf32>
      %57 = arith.subf %55, %56 : vector<128x1xf32>
      %cst_27 = arith.constant 3.906250e-03 : f32
      %58 = vector.broadcast %cst_27 : f32 to vector<128x1xf32>
      %59 = arith.mulf %31, %58 : vector<128x1xf32>
      %60 = arith.mulf %26, %26 : vector<128x1xf32>
      %61 = arith.addf %59, %60 : vector<128x1xf32>
      %62 = math.sqrt %61 : vector<128x1xf32>
      %cst_28 = arith.constant 4.000000e+00 : f32
      %63 = vector.broadcast %cst_28 : f32 to vector<128x1xf32>
      %64 = arith.mulf %63, %39 : vector<128x1xf32>
      %65 = vector.broadcast %64 : vector<128x1xf32> to vector<128x256xf32>
      %66 = arith.cmpf ogt, %29, %65 : vector<128x256xf32>
      %67 = arith.extui %66 : vector<128x256xi1> to vector<128x256xi32>
      %68 = arith.sitofp %67 : vector<128x256xi32> to vector<128x256xf32>
      %cst_29 = arith.constant dense<0.000000e+00> : vector<128xf32>
      %69 = vector.multi_reduction <add>, %68, %cst_29 [1] : vector<128x256xf32> to vector<128xf32>
      %70 = vector.shape_cast %69 : vector<128xf32> to vector<128x1xf32>
      %cst_30 = arith.constant 3.906250e-03 : f32
      %71 = vector.broadcast %cst_30 : f32 to vector<128x1xf32>
      %72 = arith.mulf %70, %71 : vector<128x1xf32>
      %c0_31 = arith.constant 0 : index
      %c0_32 = arith.constant 0 : index
      %73 = vector.load %arg3[%c0_31, %c0_32] : memref<128x128xf32, #tpu.memory_space<vmem>>, vector<128x128xf32>
      %74 = vector.extract_strided_slice %73 {offsets = [0, 0], sizes = [128, 1], strides = [1, 1]} : vector<128x128xf32> to vector<128x1xf32>
      %75 = vector.extract_strided_slice %73 {offsets = [0, 1], sizes = [128, 1], strides = [1, 1]} : vector<128x128xf32> to vector<128x1xf32>
      %cst_33 = arith.constant 2.500000e-01 : f32
      %76 = vector.broadcast %cst_33 : f32 to vector<128x1xf32>
      %77 = arith.mulf %76, %75 : vector<128x1xf32>
      %78 = vector.extract_strided_slice %73 {offsets = [0, 2], sizes = [128, 1], strides = [1, 1]} : vector<128x128xf32> to vector<128x1xf32>
      %cst_34 = arith.constant 7.500000e-01 : f32
      %79 = vector.broadcast %cst_34 : f32 to vector<128x1xf32>
      %80 = arith.mulf %79, %78 : vector<128x1xf32>
      %81 = arith.addf %77, %80 : vector<128x1xf32>
      %82 = vector.extract_strided_slice %73 {offsets = [0, 3], sizes = [128, 1], strides = [1, 1]} : vector<128x128xf32> to vector<128x1xf32>
      %cst_35 = arith.constant 7.500000e-01 : f32
      %83 = vector.broadcast %cst_35 : f32 to vector<128x1xf32>
      %84 = arith.mulf %83, %82 : vector<128x1xf32>
      %85 = vector.extract_strided_slice %73 {offsets = [0, 4], sizes = [128, 1], strides = [1, 1]} : vector<128x128xf32> to vector<128x1xf32>
      %cst_36 = arith.constant 2.500000e-01 : f32
      %86 = vector.broadcast %cst_36 : f32 to vector<128x1xf32>
      %87 = arith.mulf %86, %85 : vector<128x1xf32>
      %88 = arith.addf %84, %87 : vector<128x1xf32>
      %c0_37 = arith.constant 0 : index
      %c0_38 = arith.constant 0 : index
      %89 = vector.load %arg7[%c0_37, %c0_38] : memref<128x128xf32, #tpu.memory_space<vmem>>, vector<128x128xf32>
      %90 = vector.extract_strided_slice %89 {offsets = [0, 15], sizes = [128, 1], strides = [1, 1]} : vector<128x128xf32> to vector<128x1xf32>
      %cst_39 = arith.constant 0.000000e+00 : f32
      %91 = vector.broadcast %cst_39 : f32 to vector<128x1xf32>
      %92 = arith.cmpf ogt, %90, %91 : vector<128x1xf32>
      %cst_40 = arith.constant 1.000000e+00 : f32
      %93 = vector.broadcast %cst_40 : f32 to vector<128x1xf32>
      %94 = arith.divf %93, %90 : vector<128x1xf32>
      %cst_41 = arith.constant 0.000000e+00 : f32
      %95 = vector.broadcast %cst_41 : f32 to vector<128x1xf32>
      %96 = arith.select %92, %94, %95 : vector<128x1xi1>, vector<128x1xf32>
      %97 = vector.broadcast %96 : vector<128x1xf32> to vector<128x128xf32>
      %98 = arith.mulf %89, %97 : vector<128x128xf32>
      %99 = tpu.iota {dimensions = array<i32: 1>} : vector<128x128xi32>
      %c0_i32_42 = arith.constant 0 : i32
      %100 = vector.broadcast %c0_i32_42 : i32 to vector<128x128xi32>
      %101 = arith.cmpi eq, %99, %100 : vector<128x128xi32>
      %102 = vector.shape_cast %26 : vector<128x1xf32> to vector<128x1xf32>
      %103 = vector.broadcast %102 : vector<128x1xf32> to vector<128x128xf32>
      %104 = arith.select %101, %103, %98 : vector<128x128xi1>, vector<128x128xf32>
      %c1_i32 = arith.constant 1 : i32
      %105 = vector.broadcast %c1_i32 : i32 to vector<128x128xi32>
      %106 = arith.cmpi eq, %99, %105 : vector<128x128xi32>
      %107 = vector.shape_cast %40 : vector<128x1xf32> to vector<128x1xf32>
      %108 = vector.broadcast %107 : vector<128x1xf32> to vector<128x128xf32>
      %109 = arith.select %106, %108, %104 : vector<128x128xi1>, vector<128x128xf32>
      %c2_i32 = arith.constant 2 : i32
      %110 = vector.broadcast %c2_i32 : i32 to vector<128x128xi32>
      %111 = arith.cmpi eq, %99, %110 : vector<128x128xi32>
      %112 = vector.shape_cast %51 : vector<128x1xf32> to vector<128x1xf32>
      %113 = vector.broadcast %112 : vector<128x1xf32> to vector<128x128xf32>
      %114 = arith.select %111, %113, %109 : vector<128x128xi1>, vector<128x128xf32>
      %c3_i32 = arith.constant 3 : i32
      %115 = vector.broadcast %c3_i32 : i32 to vector<128x128xi32>
      %116 = arith.cmpi eq, %99, %115 : vector<128x128xi32>
      %117 = vector.shape_cast %57 : vector<128x1xf32> to vector<128x1xf32>
      %118 = vector.broadcast %117 : vector<128x1xf32> to vector<128x128xf32>
      %119 = arith.select %116, %118, %114 : vector<128x128xi1>, vector<128x128xf32>
      %c4_i32 = arith.constant 4 : i32
      %120 = vector.broadcast %c4_i32 : i32 to vector<128x128xi32>
      %121 = arith.cmpi eq, %99, %120 : vector<128x128xi32>
      %122 = vector.shape_cast %74 : vector<128x1xf32> to vector<128x1xf32>
      %123 = vector.broadcast %122 : vector<128x1xf32> to vector<128x128xf32>
      %124 = arith.select %121, %123, %119 : vector<128x128xi1>, vector<128x128xf32>
      %c5_i32 = arith.constant 5 : i32
      %125 = vector.broadcast %c5_i32 : i32 to vector<128x128xi32>
      %126 = arith.cmpi eq, %99, %125 : vector<128x128xi32>
      %127 = vector.shape_cast %81 : vector<128x1xf32> to vector<128x1xf32>
      %128 = vector.broadcast %127 : vector<128x1xf32> to vector<128x128xf32>
      %129 = arith.select %126, %128, %124 : vector<128x128xi1>, vector<128x128xf32>
      %c6_i32 = arith.constant 6 : i32
      %130 = vector.broadcast %c6_i32 : i32 to vector<128x128xi32>
      %131 = arith.cmpi eq, %99, %130 : vector<128x128xi32>
      %132 = vector.shape_cast %88 : vector<128x1xf32> to vector<128x1xf32>
      %133 = vector.broadcast %132 : vector<128x1xf32> to vector<128x128xf32>
      %134 = arith.select %131, %133, %129 : vector<128x128xi1>, vector<128x128xf32>
      %c7_i32 = arith.constant 7 : i32
      %135 = vector.broadcast %c7_i32 : i32 to vector<128x128xi32>
      %136 = arith.cmpi eq, %99, %135 : vector<128x128xi32>
      %137 = vector.shape_cast %62 : vector<128x1xf32> to vector<128x1xf32>
      %138 = vector.broadcast %137 : vector<128x1xf32> to vector<128x128xf32>
      %139 = arith.select %136, %138, %134 : vector<128x128xi1>, vector<128x128xf32>
      %c14_i32 = arith.constant 14 : i32
      %140 = vector.broadcast %c14_i32 : i32 to vector<128x128xi32>
      %141 = arith.cmpi eq, %99, %140 : vector<128x128xi32>
      %142 = vector.shape_cast %72 : vector<128x1xf32> to vector<128x1xf32>
      %143 = vector.broadcast %142 : vector<128x1xf32> to vector<128x128xf32>
      %144 = arith.select %141, %143, %139 : vector<128x128xi1>, vector<128x128xf32>
      %c0_43 = arith.constant 0 : index
      %c0_44 = arith.constant 0 : index
      %145 = vector.load %arg6[%c0_43, %c0_44] : memref<128x128xf32, #tpu.memory_space<vmem>>, vector<128x128xf32>
      tpu.vector_store %arg6[%c0_43, %c0_44], %144 {strides = array<i32>} : memref<128x128xf32, #tpu.memory_space<vmem>>, vector<128x128xf32>,
    } else {
    }
    return
  }
  func.func @transform_0(%arg0: i32, %arg1: i32) -> (i32, i32) {
    %c0_i32 = arith.constant 0 : i32
    %c0_i32_0 = arith.constant 0 : i32
    return %arg0, %c0_i32 : i32, i32
  }
  func.func @transform_1(%arg0: i32, %arg1: i32) -> (i32, i32) {
    %c0_i32 = arith.constant 0 : i32
    %c0_i32_0 = arith.constant 0 : i32
    return %arg0, %c0_i32 : i32, i32
  }
  func.func @transform_2(%arg0: i32, %arg1: i32) -> (i32, i32) {
    %c0_i32 = arith.constant 0 : i32
    %c0_i32_0 = arith.constant 0 : i32
    %c0_i32_1 = arith.constant 0 : i32
    return %c0_i32, %c0_i32_0 : i32, i32
  }
  func.func @transform_3(%arg0: i32, %arg1: i32) -> (i32, i32) {
    %c0_i32 = arith.constant 0 : i32
    %c0_i32_0 = arith.constant 0 : i32
    %c0_i32_1 = arith.constant 0 : i32
    return %c0_i32, %c0_i32_0 : i32, i32
  }
  func.func @transform_4(%arg0: i32, %arg1: i32) -> (i32, i32) {
    %c0_i32 = arith.constant 0 : i32
    %c0_i32_0 = arith.constant 0 : i32
    return %arg0, %c0_i32 : i32, i32
  }
}

</mosaic_0001>

<llo_original>
// kernel: tpu_custom_call.1
$region0: #{tpu_custom_call.1}
  #allocation0 [shape = 'u32[]', space=smem, size = 0x4, offset = 0x4, fixed_abs, tag = 'smem constant byte address 0x4 - core index']
  #allocation1 [shape = 'u32[144,128]{1,0:T(1,128)}', space=vmem, size = 0x12000, scoped, tag = 'internal scratch']
  #allocation2 [shape = 'f32[128,128]{1,0:T(8,128)}', space=vmem, size = 0x10000, scoped, tag = 'scratch operand']
  %s0 = inlined_call_operand.hbm [shape: f32[256,256], index: 0, kind: input, shape index: {}]
  %s1 = inlined_call_operand.hbm [shape: f32[256,128], index: 1, kind: input, shape index: {}]
  %s2 = inlined_call_operand.hbm [shape: bf16[256,512], index: 2, kind: input, shape index: {}]
  %s3 = inlined_call_operand.hbm [shape: bf16[256,128], index: 3, kind: input, shape index: {}]
  %s4 = inlined_call_operand.hbm [shape: f32[256,128], index: 4, kind: output, shape index: {}]
  %s5 = sld [smem:[#allocation0]]
  $region73: #{tpu_custom_call.1} parent=0
    _
  %s7 = ssub.s32 1, %s5
  %s8 = scalar_select 0, %s7, %s5
  $region1: #{tpu_custom_call.1} parent=0
    #allocation3 [shape = 'u8[262144]{0}', space=vmem, size = 0x40000, scoped, tag = 'input window, operand 0']
    #allocation4 [shape = 's32[2]{0}', space=sflag, size = 0x8, scoped, tag = 'scoped memory for tpu_custom_call.1']
    #allocation5 [shape = 's32[2]{0}', space=sflag, size = 0x8, scoped, tag = 'scoped memory for tpu_custom_call.1']
    #allocation6 [shape = 'u8[131072]{0}', space=vmem, size = 0x20000, scoped, tag = 'input window, operand 1']
    #allocation7 [shape = 's32[2]{0}', space=sflag, size = 0x8, scoped, tag = 'scoped memory for tpu_custom_call.1']
    #allocation8 [shape = 'u8[262144]{0}', space=vmem, size = 0x40000, scoped, tag = 'input window, operand 2, single buffered']
    #allocation9 [shape = 'u8[65536]{0}', space=vmem, size = 0x10000, scoped, tag = 'input window, operand 3, single buffered']
    #allocation10 [shape = 's32[1]{0}', space=sflag, size = 0x4, scoped, tag = 'scoped memory for tpu_custom_call.1']
    #allocation11 [shape = 'u8[131072]{0}', space=vmem, size = 0x20000, scoped, tag = 'output window, operand 0']
    %9 = vsyncpa [#allocation4], 0
    %s10 = scalar_lea.sflag [#allocation4], 1
    %11 = vsyncpa %s10, 0
    %12 = vsyncpa [#allocation7], 0
    %s13 = scalar_lea.sflag [#allocation7], 1
    %14 = vsyncpa %s13, 0
    %15 = vsyncpa [#allocation10], 0
    %16 = vsyncpa [#allocation5], 0
    %s17 = scalar_lea.sflag [#allocation5], 1
    %18 = vsyncpa %s17, 0
    loop: start=0, step=1, limit=4
    $region2: #{tpu_custom_call.1} parent=1 // loop_pre_header
      _
    $region3: #{tpu_custom_call.1} parent=1 // loop_header
      %s20 = sphi 0, %s24
      %p21 = scmp.ge.s32.totalorder %s20, 4
      %s27 = sphi 0, %s39
      %s28 = sphi 0, %s35
      %s29 = sphi 0, %s27
      %s30 = sphi 0, %s28
      %s31 = sphi 0, %s29
      %s32 = sphi 0, %s30
      %s42 = sphi 0, %s44
      %s45 = sphi 0, %s42
      %s46 = sphi 0, %s45
      %s62 = sphi 0, %s46
      %s68 = sphi 0, %s70
      %s71 = sphi 0, %s68
      %s72 = sphi 0, %s71
      %s88 = sphi 0, %s72
      %s92 = sphi 0, %s92
      %s94 = sphi 0, %s92
      %s95 = sphi 0, %s94
      %s109 = sphi 0, %s95
      %s113 = sphi 0, %s113
      %s115 = sphi 0, %s113
      %s116 = sphi 0, %s115
      %s130 = sphi 0, %s116
      %s136 = sphi 0, %s138
      %s139 = sphi 0, %s136
      %s140 = sphi 0, %s139
      %s156 = sphi 0, %s140
    $region4: #{tpu_custom_call.1} parent=1 // loop_header_branch
      %23 = sbr.rel (%p21) target = $region8
    $region5: #{tpu_custom_call.1} parent=1 // loop_body
      %s25 = ssub.s32 %s20, 1
      %s26 = ssub.s32 %s20, 2
      %s33 = sadd.s32 1, %s28
      %p34 = scmp.ge.s32.totalorder %s33, 1
      %s35 = scalar_select %p34, 0, %s33
      %s36 = sadd.s32 1, %s27
      %s37 = scalar_select %p34, %s36, %s27
      %p38 = scmp.ge.s32.totalorder %s37, 2
      %s39 = scalar_select %p38, 0, %s37
      %s40 = ssub.s32 %s27, %s39
      %p41 = scmp.eq.s32.totalorder %s40, 0
      %s43 = sadd.s32 %s42, 1
      %s44 = scalar_select %p41, %s42, %s43
      %p47 = pneg %p41
      %p48 = scmp.eq.s32.totalorder %s20, 1
      %p49 = por %p47, %p48
      %p50 = scmp.ne.s32.totalorder %s42, %s45
      %p51 = scmp.eq.s32.totalorder %s20, 0
      %p52 = por %p50, %p51
      %p53 = scmp.ne.s32.totalorder %s42, %s45
      %p54 = scmp.eq.s32.totalorder %s25, 1
      %p55 = por %p53, %p54
      %p56 = scmp.ne.s32.totalorder %s45, %s46
      %p57 = scmp.eq.s32.totalorder %s25, 0
      %p58 = por %p56, %p57
      %p59 = scmp.ne.s32.totalorder %s45, %s46
      %p60 = scmp.eq.s32.totalorder %s26, 1
      %p61 = por %p59, %p60
      %p63 = scmp.ne.s32.totalorder %s46, %s62
      %p64 = scmp.eq.s32.totalorder %s26, 0
      %p65 = por %p63, %p64
      %s66 = ssub.s32 %s27, %s39
      %p67 = scmp.eq.s32.totalorder %s66, 0
      %s69 = sadd.s32 %s68, 1
      %s70 = scalar_select %p67, %s68, %s69
      %p73 = pneg %p67
      %p74 = scmp.eq.s32.totalorder %s20, 1
      %p75 = por %p73, %p74
      %p76 = scmp.ne.s32.totalorder %s68, %s71
      %p77 = scmp.eq.s32.totalorder %s20, 0
      %p78 = por %p76, %p77
      %p79 = scmp.ne.s32.totalorder %s68, %s71
      %p80 = scmp.eq.s32.totalorder %s25, 1
      %p81 = por %p79, %p80
      %p82 = scmp.ne.s32.totalorder %s71, %s72
      %p83 = scmp.eq.s32.totalorder %s25, 0
      %p84 = por %p82, %p83
      %p85 = scmp.ne.s32.totalorder %s71, %s72
      %p86 = scmp.eq.s32.totalorder %s26, 1
      %p87 = por %p85, %p86
      %p89 = scmp.ne.s32.totalorder %s72, %s88
      %p90 = scmp.eq.s32.totalorder %s26, 0
      %p91 = por %p89, %p90
      %s93 = sadd.s32 %s92, 1
      %p96 = scmp.eq.s32.totalorder %s20, 1
      %p97 = scmp.ne.s32.totalorder %s92, %s94
      %p98 = scmp.eq.s32.totalorder %s20, 0
      %p99 = por %p97, %p98
      %p100 = scmp.ne.s32.totalorder %s92, %s94
      %p101 = scmp.eq.s32.totalorder %s25, 1
      %p102 = por %p100, %p101
      %p103 = scmp.ne.s32.totalorder %s94, %s95
      %p104 = scmp.eq.s32.totalorder %s25, 0
      %p105 = por %p103, %p104
      %p106 = scmp.ne.s32.totalorder %s94, %s95
      %p107 = scmp.eq.s32.totalorder %s26, 1
      %p108 = por %p106, %p107
      %p110 = scmp.ne.s32.totalorder %s95, %s109
      %p111 = scmp.eq.s32.totalorder %s26, 0
      %p112 = por %p110, %p111
      %s114 = sadd.s32 %s113, 1
      %p117 = scmp.eq.s32.totalorder %s20, 1
      %p118 = scmp.ne.s32.totalorder %s113, %s115
      %p119 = scmp.eq.s32.totalorder %s20, 0
      %p120 = por %p118, %p119
      %p121 = scmp.ne.s32.totalorder %s113, %s115
      %p122 = scmp.eq.s32.totalorder %s25, 1
      %p123 = por %p121, %p122
      %p124 = scmp.ne.s32.totalorder %s115, %s116
      %p125 = scmp.eq.s32.totalorder %s25, 0
      %p126 = por %p124, %p125
      %p127 = scmp.ne.s32.totalorder %s115, %s116
      %p128 = scmp.eq.s32.totalorder %s26, 1
      %p129 = por %p127, %p128
      %p131 = scmp.ne.s32.totalorder %s116, %s130
      %p132 = scmp.eq.s32.totalorder %s26, 0
      %p133 = por %p131, %p132
      %s134 = ssub.s32 %s27, %s39
      %p135 = scmp.eq.s32.totalorder %s134, 0
      %s137 = sadd.s32 %s136, 1
      %s138 = scalar_select %p135, %s136, %s137
      %p141 = pneg %p135
      %p142 = scmp.eq.s32.totalorder %s20, 1
      %p143 = por %p141, %p142
      %p144 = scmp.ne.s32.totalorder %s136, %s139
      %p145 = scmp.eq.s32.totalorder %s20, 0
      %p146 = por %p144, %p145
      %p147 = scmp.ne.s32.totalorder %s136, %s139
      %p148 = scmp.eq.s32.totalorder %s25, 1
      %p149 = por %p147, %p148
      %p150 = scmp.ne.s32.totalorder %s139, %s140
      %p151 = scmp.eq.s32.totalorder %s25, 0
      %p152 = por %p150, %p151
      %p153 = scmp.ne.s32.totalorder %s139, %s140
      %p154 = scmp.eq.s32.totalorder %s26, 1
      %p155 = por %p153, %p154
      %p157 = scmp.ne.s32.totalorder %s140, %s156
      %p158 = scmp.eq.s32.totalorder %s26, 0
      %p159 = por %p157, %p158
      %p160 = scmp.le.s32.totalorder 1, %s20
      %p161 = scmp.lt.s32.totalorder %s20, 3
      %p162 = pnand %p160, %p161
      %p163 = pneg %p162
      // Predicated region
      $region9: #{tpu_custom_call.1} parent=5 // pred_check
        _
      $region10: #{tpu_custom_call.1} parent=5 // pred_check_branch
        %165 = sbr.rel (%p162) target = $region12
      $region11: #{tpu_custom_call.1} parent=5 // pred_region
        %s166 = ssub.s32 %s20, 1
        // Predicated region
        $region13: #{tpu_custom_call.1} parent=11 // pred_check
          %p167 = pneg %p105
        $region14: #{tpu_custom_call.1} parent=11 // pred_check_branch
          %169 = sbr.rel (%p167) target = $region16
        $region15: #{tpu_custom_call.1} parent=11 // pred_region
          %s171 = ssub.s32 8192, 8192
          %172 = vsyncadd [#allocation7], %s171
          %s173 = sshll.u32 [#allocation8], 4
          %s174 = int_to_ptr.vmem [resolvable:$true] %s173
          %179 = dma.hbm_to_vmem [thread:$0]  %s2, 8192, %s174, [#allocation7], 256, 256, 16
        $region16: #{tpu_custom_call.1} parent=11 // pred_fallthru
          _
        // Predicated region
        $region17: #{tpu_custom_call.1} parent=11 // pred_check
          %p180 = pneg %p126
        $region18: #{tpu_custom_call.1} parent=11 // pred_check_branch
          %182 = sbr.rel (%p180) target = $region20
        $region19: #{tpu_custom_call.1} parent=11 // pred_region
          %s184 = ssub.s32 2048, 2048
          %185 = vsyncadd [#allocation10], %s184
          %s186 = sshll.u32 [#allocation9], 4
          %s187 = int_to_ptr.vmem [resolvable:$true] %s186
          %192 = dma.hbm_to_vmem [thread:$0]  %s3, 2048, %s187, [#allocation10], 64, 64, 4
        $region20: #{tpu_custom_call.1} parent=11 // pred_fallthru
          _
      $region12: #{tpu_custom_call.1} parent=5 // pred_fallthru
        _
      %p193 = scmp.lt.s32.totalorder %s20, 2
      // Predicated region
      $region21: #{tpu_custom_call.1} parent=5 // pred_check
        %p194 = pneg %p193
      $region22: #{tpu_custom_call.1} parent=5 // pred_check_branch
        %196 = sbr.rel (%p194) target = $region24
      $region23: #{tpu_custom_call.1} parent=5 // pred_region
        // Predicated region
        $region25: #{tpu_custom_call.1} parent=23 // pred_check
          %p197 = pneg %p52
        $region26: #{tpu_custom_call.1} parent=23 // pred_check_branch
          %199 = sbr.rel (%p197) target = $region28
        $region27: #{tpu_custom_call.1} parent=23 // pred_region
          %s200 = sand.u32 %s42, 1
          %s201 = scalar_lea.sflag [#allocation4], %s200
          %s202 = sand.u32 %s42, 1
          %s203 = smul.addr %s202, 256
          %s204 = scalar_lea.vmem [#allocation3], %s203
          %s205 = smul.u32 16, %s27
          %s207 = ssub.s32 4096, 4096
          %208 = vsyncadd %s201, %s207
          %s209 = smul.addr %s205, 2
          %s210 = smul.addr %s209, 128
          %s211 = scalar_lea.hbm %s0, %s210
          %s212 = sshll.u32 %s204, 4
          %s213 = int_to_ptr.vmem [resolvable:$true] %s212
          %218 = dma.hbm_to_vmem [thread:$0]  %s211, 4096, %s213, %s201, 256, 256, 16
        $region28: #{tpu_custom_call.1} parent=23 // pred_fallthru
          _
        // Predicated region
        $region29: #{tpu_custom_call.1} parent=23 // pred_check
          %p219 = pneg %p78
        $region30: #{tpu_custom_call.1} parent=23 // pred_check_branch
          %221 = sbr.rel (%p219) target = $region32
        $region31: #{tpu_custom_call.1} parent=23 // pred_region
          %s222 = sand.u32 %s20, 1
          %s223 = scalar_lea.sflag [#allocation7], %s222
          %s224 = sand.u32 %s68, 1
          %s225 = smul.addr %s224, 128
          %s226 = scalar_lea.vmem [#allocation6], %s225
          %s227 = smul.u32 16, %s27
          %s229 = ssub.s32 2048, 2048
          %230 = vsyncadd %s223, %s229
          %s231 = smul.addr %s227, 128
          %s232 = scalar_lea.hbm %s1, %s231
          %s233 = sshll.u32 %s226, 4
          %s234 = int_to_ptr.vmem [resolvable:$true] %s233
          %239 = dma.hbm_to_vmem [thread:$0]  %s232, 2048, %s234, %s223, 128, 128, 8
        $region32: #{tpu_custom_call.1} parent=23 // pred_fallthru
          _
      $region24: #{tpu_custom_call.1} parent=5 // pred_fallthru
        _
      %p240 = scmp.le.s32.totalorder 1, %s20
      %p241 = scmp.lt.s32.totalorder %s20, 3
      %p242 = pnand %p240, %p241
      %p243 = pneg %p242
      // Predicated region
      $region33: #{tpu_custom_call.1} parent=5 // pred_check
        _
      $region34: #{tpu_custom_call.1} parent=5 // pred_check_branch
        %245 = sbr.rel (%p242) target = $region36
      $region35: #{tpu_custom_call.1} parent=5 // pred_region
        %s246 = ssub.s32 %s20, 1
        %s247 = sand.u32 %s45, 1
        %s248 = scalar_lea.sflag [#allocation4], %s247
        %s249 = sand.u32 %s45, 1
        %s250 = smul.addr %s249, 256
        %s251 = scalar_lea.vmem [#allocation3], %s250
        // Predicated region
        $region37: #{tpu_custom_call.1} parent=35 // pred_check
          %p252 = pneg %p58
        $region38: #{tpu_custom_call.1} parent=35 // pred_check_branch
          %254 = sbr.rel (%p252) target = $region40
        $region39: #{tpu_custom_call.1} parent=35 // pred_region
          %255 = dma.done %s248, 4096
        $region40: #{tpu_custom_call.1} parent=35 // pred_fallthru
          _
        %s256 = sand.u32 %s25, 1
        %s257 = scalar_lea.sflag [#allocation7], %s256
        %s258 = sand.u32 %s71, 1
        %s259 = smul.addr %s258, 128
        %s260 = scalar_lea.vmem [#allocation6], %s259
        // Predicated region
        $region41: #{tpu_custom_call.1} parent=35 // pred_check
          %p261 = pneg %p84
        $region42: #{tpu_custom_call.1} parent=35 // pred_check_branch
          %263 = sbr.rel (%p261) target = $region44
        $region43: #{tpu_custom_call.1} parent=35 // pred_region
          %264 = dma.done %s257, 2048
        $region44: #{tpu_custom_call.1} parent=35 // pred_fallthru
          _
        // Predicated region
        $region45: #{tpu_custom_call.1} parent=35 // pred_check
          %p265 = pneg %p105
        $region46: #{tpu_custom_call.1} parent=35 // pred_check_branch
          %267 = sbr.rel (%p265) target = $region48
        $region47: #{tpu_custom_call.1} parent=35 // pred_region
          %268 = dma.done [#allocation7], 8192
        $region48: #{tpu_custom_call.1} parent=35 // pred_fallthru
          _
        // Predicated region
        $region49: #{tpu_custom_call.1} parent=35 // pred_check
          %p269 = pneg %p126
        $region50: #{tpu_custom_call.1} parent=35 // pred_check_branch
          %271 = sbr.rel (%p269) target = $region52
        $region51: #{tpu_custom_call.1} parent=35 // pred_region
          %272 = dma.done [#allocation10], 2048
        $region52: #{tpu_custom_call.1} parent=35 // pred_fallthru
          _
        %s273 = sand.u32 %s45, 1
        %s274 = scalar_lea.sflag [#allocation4], %s273
        %s275 = sand.u32 %s45, 1
        %s276 = smul.addr %s275, 256
        %s277 = scalar_lea.vmem [#allocation3], %s276
        %p278 = pneg %p58
        %p279 = pneg %p55
        %s280 = sand.u32 %s25, 1
        %s281 = scalar_lea.sflag [#allocation7], %s280
        %s282 = sand.u32 %s71, 1
        %s283 = smul.addr %s282, 128
        %s284 = scalar_lea.vmem [#allocation6], %s283
        %p285 = pneg %p84
        %p286 = pneg %p81
        %p287 = pneg %p105
        %p288 = pneg %p102
        %p289 = pneg %p126
        %p290 = pneg %p123
        %p291 = pneg %p152
        %p292 = pneg %p149
        %s293 = sand.u32 %s139, 1
        %s294 = scalar_lea.sflag [#allocation5], %s293
        %s295 = sand.u32 %s139, 1
        %s296 = smul.addr %s295, 128
        %s297 = scalar_lea.vmem [#allocation11], %s296
        %s298 = smul.u32 16, %s29
        %s299 = smul.u32 16, %s29
        %s300 = smul.u32 16, %s29
        %p302 = scmp.eq.s32.totalorder %s30, 0
        // Predicated region
        $region53: #{tpu_custom_call.1} parent=35 // pred_check
          %p303 = pneg %p302
        $region54: #{tpu_custom_call.1} parent=35 // pred_check_branch
          %305 = sbr.rel (%p303) target = $region56
        $region55: #{tpu_custom_call.1} parent=35 // pred_region
          %306 = vst [vmem:[#allocation2] sm:$0xff] 0.0
          %307 = vst [vmem:[#allocation2 + $0x8] sm:$0xff] 0.0
          %308 = vst [vmem:[#allocation2 + $0x10] sm:$0xff] 0.0
          %309 = vst [vmem:[#allocation2 + $0x18] sm:$0xff] 0.0
          %310 = vst [vmem:[#allocation2 + $0x20] sm:$0xff] 0.0
          %311 = vst [vmem:[#allocation2 + $0x28] sm:$0xff] 0.0
          %312 = vst [vmem:[#allocation2 + $0x30] sm:$0xff] 0.0
          %313 = vst [vmem:[#allocation2 + $0x38] sm:$0xff] 0.0
          %314 = vst [vmem:[#allocation2 + $0x40] sm:$0xff] 0.0
          %315 = vst [vmem:[#allocation2 + $0x48] sm:$0xff] 0.0
          %316 = vst [vmem:[#allocation2 + $0x50] sm:$0xff] 0.0
          %317 = vst [vmem:[#allocation2 + $0x58] sm:$0xff] 0.0
          %318 = vst [vmem:[#allocation2 + $0x60] sm:$0xff] 0.0
          %319 = vst [vmem:[#allocation2 + $0x68] sm:$0xff] 0.0
          %320 = vst [vmem:[#allocation2 + $0x70] sm:$0xff] 0.0
          %321 = vst [vmem:[#allocation2 + $0x78] sm:$0xff] 0.0
        $region56: #{tpu_custom_call.1} parent=35 // pred_fallthru
          _
        %v322 = vld [vmem:[%s251] sm:$0xff]
        %v323 = vld [vmem:[%s251 + $0x8] sm:$0xff]
        %v324 = vld [vmem:[%s251 + $0x10] sm:$0xff]
        %v325 = vld [vmem:[%s251 + $0x18] sm:$0xff]
        %v326 = vld [vmem:[%s251 + $0x20] sm:$0xff]
        %v327 = vld [vmem:[%s251 + $0x28] sm:$0xff]
        %v328 = vld [vmem:[%s251 + $0x30] sm:$0xff]
        %v329 = vld [vmem:[%s251 + $0x38] sm:$0xff]
        %v330 = vld [vmem:[%s251 + $0x40] sm:$0xff]
        %v331 = vld [vmem:[%s251 + $0x48] sm:$0xff]
        %v332 = vld [vmem:[%s251 + $0x50] sm:$0xff]
        %v333 = vld [vmem:[%s251 + $0x58] sm:$0xff]
        %v334 = vld [vmem:[%s251 + $0x60] sm:$0xff]
        %v335 = vld [vmem:[%s251 + $0x68] sm:$0xff]
        %v336 = vld [vmem:[%s251 + $0x70] sm:$0xff]
        %v337 = vld [vmem:[%s251 + $0x78] sm:$0xff]
        %v338 = vld [vmem:[%s251 + $0x80] sm:$0xff]
        %v339 = vld [vmem:[%s251 + $0x88] sm:$0xff]
        %v340 = vld [vmem:[%s251 + $0x90] sm:$0xff]
        %v341 = vld [vmem:[%s251 + $0x98] sm:$0xff]
        %v342 = vld [vmem:[%s251 + $0xa0] sm:$0xff]
        %v343 = vld [vmem:[%s251 + $0xa8] sm:$0xff]
        %v344 = vld [vmem:[%s251 + $0xb0] sm:$0xff]
        %v345 = vld [vmem:[%s251 + $0xb8] sm:$0xff]
        %v346 = vld [vmem:[%s251 + $0xc0] sm:$0xff]
        %v347 = vld [vmem:[%s251 + $0xc8] sm:$0xff]
        %v348 = vld [vmem:[%s251 + $0xd0] sm:$0xff]
        %v349 = vld [vmem:[%s251 + $0xd8] sm:$0xff]
        %v350 = vld [vmem:[%s251 + $0xe0] sm:$0xff]
        %v351 = vld [vmem:[%s251 + $0xe8] sm:$0xff]
        %v352 = vld [vmem:[%s251 + $0xf0] sm:$0xff]
        %v353 = vld [vmem:[%s251 + $0xf8] sm:$0xff]
        %v354 = vpack.c.bf16 %v324, %v322
        %v355 = vpack.c.bf16 %v325, %v323
        %v356 = vpack.c.bf16 %v328, %v326
        %v357 = vpack.c.bf16 %v329, %v327
        %v358 = vpack.c.bf16 %v332, %v330
        %v359 = vpack.c.bf16 %v333, %v331
        %v360 = vpack.c.bf16 %v336, %v334
        %v361 = vpack.c.bf16 %v337, %v335
        %v362 = vpack.c.bf16 %v340, %v338
        %v363 = vpack.c.bf16 %v341, %v339
        %v364 = vpack.c.bf16 %v344, %v342
        %v365 = vpack.c.bf16 %v345, %v343
        %v366 = vpack.c.bf16 %v348, %v346
        %v367 = vpack.c.bf16 %v349, %v347
        %v368 = vpack.c.bf16 %v352, %v350
        %v369 = vpack.c.bf16 %v353, %v351
        %v370 = vld [vmem:[#allocation8] sm:$0xff]
        %v371 = vld [vmem:[#allocation8 + $0x8] sm:$0xff]
        %v372 = vld [vmem:[#allocation8 + $0x10] sm:$0xff]
        %v373 = vld [vmem:[#allocation8 + $0x18] sm:$0xff]
        %v374 = vld [vmem:[#allocation8 + $0x20] sm:$0xff]
        %v375 = vld [vmem:[#allocation8 + $0x28] sm:$0xff]
        %v376 = vld [vmem:[#allocation8 + $0x30] sm:$0xff]
        %v377 = vld [vmem:[#allocation8 + $0x38] sm:$0xff]
        %v378 = vld [vmem:[#allocation8 + $0x40] sm:$0xff]
        %v379 = vld [vmem:[#allocation8 + $0x48] sm:$0xff]
        %v380 = vld [vmem:[#allocation8 + $0x50] sm:$0xff]
        %v381 = vld [vmem:[#allocation8 + $0x58] sm:$0xff]
        %v382 = vld [vmem:[#allocation8 + $0x60] sm:$0xff]
        %v383 = vld [vmem:[#allocation8 + $0x68] sm:$0xff]
        %v384 = vld [vmem:[#allocation8 + $0x70] sm:$0xff]
        %v385 = vld [vmem:[#allocation8 + $0x78] sm:$0xff]
        %v386 = vld [vmem:[#allocation8 + $0x80] sm:$0xff]
        %v387 = vld [vmem:[#allocation8 + $0x88] sm:$0xff]
        %v388 = vld [vmem:[#allocation8 + $0x90] sm:$0xff]
        %v389 = vld [vmem:[#allocation8 + $0x98] sm:$0xff]
        %v390 = vld [vmem:[#allocation8 + $0xa0] sm:$0xff]
        %v391 = vld [vmem:[#allocation8 + $0xa8] sm:$0xff]
        %v392 = vld [vmem:[#allocation8 + $0xb0] sm:$0xff]
        %v393 = vld [vmem:[#allocation8 + $0xb8] sm:$0xff]
        %v394 = vld [vmem:[#allocation8 + $0xc0] sm:$0xff]
        %v395 = vld [vmem:[#allocation8 + $0xc8] sm:$0xff]
        %v396 = vld [vmem:[#allocation8 + $0xd0] sm:$0xff]
        %v397 = vld [vmem:[#allocation8 + $0xd8] sm:$0xff]
        %v398 = vld [vmem:[#allocation8 + $0xe0] sm:$0xff]
        %v399 = vld [vmem:[#allocation8 + $0xe8] sm:$0xff]
        %v400 = vld [vmem:[#allocation8 + $0xf0] sm:$0xff]
        %v401 = vld [vmem:[#allocation8 + $0xf8] sm:$0xff]
        %v402 = vld [vmem:[#allocation8 + $0x100] sm:$0xff]
        %v403 = vld [vmem:[#allocation8 + $0x108] sm:$0xff]
        %v404 = vld [vmem:[#allocation8 + $0x110] sm:$0xff]
        %v405 = vld [vmem:[#allocation8 + $0x118] sm:$0xff]
        %v406 = vld [vmem:[#allocation8 + $0x120] sm:$0xff]
        %v407 = vld [vmem:[#allocation8 + $0x128] sm:$0xff]
        %v408 = vld [vmem:[#allocation8 + $0x130] sm:$0xff]
        %v409 = vld [vmem:[#allocation8 + $0x138] sm:$0xff]
        %v410 = vld [vmem:[#allocation8 + $0x140] sm:$0xff]
        %v411 = vld [vmem:[#allocation8 + $0x148] sm:$0xff]
        %v412 = vld [vmem:[#allocation8 + $0x150] sm:$0xff]
        %v413 = vld [vmem:[#allocation8 + $0x158] sm:$0xff]
        %v414 = vld [vmem:[#allocation8 + $0x160] sm:$0xff]
        %v415 = vld [vmem:[#allocation8 + $0x168] sm:$0xff]
        %v416 = vld [vmem:[#allocation8 + $0x170] sm:$0xff]
        %v417 = vld [vmem:[#allocation8 + $0x178] sm:$0xff]
        %v418 = vld [vmem:[#allocation8 + $0x180] sm:$0xff]
        %v419 = vld [vmem:[#allocation8 + $0x188] sm:$0xff]
        %v420 = vld [vmem:[#allocation8 + $0x190] sm:$0xff]
        %v421 = vld [vmem:[#allocation8 + $0x198] sm:$0xff]
        %v422 = vld [vmem:[#allocation8 + $0x1a0] sm:$0xff]
        %v423 = vld [vmem:[#allocation8 + $0x1a8] sm:$0xff]
        %v424 = vld [vmem:[#allocation8 + $0x1b0] sm:$0xff]
        %v425 = vld [vmem:[#allocation8 + $0x1b8] sm:$0xff]
        %v426 = vld [vmem:[#allocation8 + $0x1c0] sm:$0xff]
        %v427 = vld [vmem:[#allocation8 + $0x1c8] sm:$0xff]
        %v428 = vld [vmem:[#allocation8 + $0x1d0] sm:$0xff]
        %v429 = vld [vmem:[#allocation8 + $0x1d8] sm:$0xff]
        %v430 = vld [vmem:[#allocation8 + $0x1e0] sm:$0xff]
        %v431 = vld [vmem:[#allocation8 + $0x1e8] sm:$0xff]
        %v432 = vld [vmem:[#allocation8 + $0x1f0] sm:$0xff]
        %v433 = vld [vmem:[#allocation8 + $0x1f8] sm:$0xff]
        %v498 = vunpack.c.l.b16 %v370
        %v499 = vunpack.c.h.b16 %v370
        %v500 = vunpack.c.l.b16 %v371
        %v501 = vunpack.c.h.b16 %v371
        %v502 = vunpack.c.l.b16 %v372
        %v503 = vunpack.c.h.b16 %v372
        %v504 = vunpack.c.l.b16 %v373
        %v505 = vunpack.c.h.b16 %v373
        %v506 = vunpack.c.l.b16 %v374
        %v507 = vunpack.c.h.b16 %v374
        %v508 = vunpack.c.l.b16 %v375
        %v509 = vunpack.c.h.b16 %v375
        %v510 = vunpack.c.l.b16 %v376
        %v511 = vunpack.c.h.b16 %v376
        %v512 = vunpack.c.l.b16 %v377
        %v513 = vunpack.c.h.b16 %v377
        %v514 = vunpack.c.l.b16 %v378
        %v515 = vunpack.c.h.b16 %v378
        %v516 = vunpack.c.l.b16 %v379
        %v517 = vunpack.c.h.b16 %v379
        %v518 = vunpack.c.l.b16 %v380
        %v519 = vunpack.c.h.b16 %v380
        %v520 = vunpack.c.l.b16 %v381
        %v521 = vunpack.c.h.b16 %v381
        %v522 = vunpack.c.l.b16 %v382
        %v523 = vunpack.c.h.b16 %v382
        %v524 = vunpack.c.l.b16 %v383
        %v525 = vunpack.c.h.b16 %v383
        %v526 = vunpack.c.l.b16 %v384
        %v527 = vunpack.c.h.b16 %v384
        %v528 = vunpack.c.l.b16 %v385
        %v529 = vunpack.c.h.b16 %v385
        %v530 = vunpack.c.l.b16 %v386
        %v531 = vunpack.c.h.b16 %v386
        %v532 = vunpack.c.l.b16 %v387
        %v533 = vunpack.c.h.b16 %v387
        %v534 = vunpack.c.l.b16 %v388
        %v535 = vunpack.c.h.b16 %v388
        %v536 = vunpack.c.l.b16 %v389
        %v537 = vunpack.c.h.b16 %v389
        %v538 = vunpack.c.l.b16 %v390
        %v539 = vunpack.c.h.b16 %v390
        %v540 = vunpack.c.l.b16 %v391
        %v541 = vunpack.c.h.b16 %v391
        %v542 = vunpack.c.l.b16 %v392
        %v543 = vunpack.c.h.b16 %v392
        %v544 = vunpack.c.l.b16 %v393
        %v545 = vunpack.c.h.b16 %v393
        %v546 = vunpack.c.l.b16 %v394
        %v547 = vunpack.c.h.b16 %v394
        %v548 = vunpack.c.l.b16 %v395
        %v549 = vunpack.c.h.b16 %v395
        %v550 = vunpack.c.l.b16 %v396
        %v551 = vunpack.c.h.b16 %v396
        %v552 = vunpack.c.l.b16 %v397
        %v553 = vunpack.c.h.b16 %v397
        %v554 = vunpack.c.l.b16 %v398
        %v555 = vunpack.c.h.b16 %v398
        %v556 = vunpack.c.l.b16 %v399
        %v557 = vunpack.c.h.b16 %v399
        %v558 = vunpack.c.l.b16 %v400
        %v559 = vunpack.c.h.b16 %v400
        %v560 = vunpack.c.l.b16 %v401
        %v561 = vunpack.c.h.b16 %v401
        %v562 = vunpack.c.l.b16 %v402
        %v563 = vunpack.c.h.b16 %v402
        %v564 = vunpack.c.l.b16 %v403
        %v565 = vunpack.c.h.b16 %v403
        %v566 = vunpack.c.l.b16 %v404
        %v567 = vunpack.c.h.b16 %v404
        %v568 = vunpack.c.l.b16 %v405
        %v569 = vunpack.c.h.b16 %v405
        %v570 = vunpack.c.l.b16 %v406
        %v571 = vunpack.c.h.b16 %v406
        %v572 = vunpack.c.l.b16 %v407
        %v573 = vunpack.c.h.b16 %v407
        %v574 = vunpack.c.l.b16 %v408
        %v575 = vunpack.c.h.b16 %v408
        %v576 = vunpack.c.l.b16 %v409
        %v577 = vunpack.c.h.b16 %v409
        %v578 = vunpack.c.l.b16 %v410
        %v579 = vunpack.c.h.b16 %v410
        %v580 = vunpack.c.l.b16 %v411
        %v581 = vunpack.c.h.b16 %v411
        %v582 = vunpack.c.l.b16 %v412
        %v583 = vunpack.c.h.b16 %v412
        %v584 = vunpack.c.l.b16 %v413
        %v585 = vunpack.c.h.b16 %v413
        %v586 = vunpack.c.l.b16 %v414
        %v587 = vunpack.c.h.b16 %v414
        %v588 = vunpack.c.l.b16 %v415
        %v589 = vunpack.c.h.b16 %v415
        %v590 = vunpack.c.l.b16 %v416
        %v591 = vunpack.c.h.b16 %v416
        %v592 = vunpack.c.l.b16 %v417
        %v593 = vunpack.c.h.b16 %v417
        %v594 = vunpack.c.l.b16 %v418
        %v595 = vunpack.c.h.b16 %v418
        %v596 = vunpack.c.l.b16 %v419
        %v597 = vunpack.c.h.b16 %v419
        %v598 = vunpack.c.l.b16 %v420
        %v599 = vunpack.c.h.b16 %v420
        %v600 = vunpack.c.l.b16 %v421
        %v601 = vunpack.c.h.b16 %v421
        %v602 = vunpack.c.l.b16 %v422
        %v603 = vunpack.c.h.b16 %v422
        %v604 = vunpack.c.l.b16 %v423
        %v605 = vunpack.c.h.b16 %v423
        %v606 = vunpack.c.l.b16 %v424
        %v607 = vunpack.c.h.b16 %v424
        %v608 = vunpack.c.l.b16 %v425
        %v609 = vunpack.c.h.b16 %v425
        %v610 = vunpack.c.l.b16 %v426
        %v611 = vunpack.c.h.b16 %v426
        %v612 = vunpack.c.l.b16 %v427
        %v613 = vunpack.c.h.b16 %v427
        %v614 = vunpack.c.l.b16 %v428
        %v615 = vunpack.c.h.b16 %v428
        %v616 = vunpack.c.l.b16 %v429
        %v617 = vunpack.c.h.b16 %v429
        %v618 = vunpack.c.l.b16 %v430
        %v619 = vunpack.c.h.b16 %v430
        %v620 = vunpack.c.l.b16 %v431
        %v621 = vunpack.c.h.b16 %v431
        %v622 = vunpack.c.l.b16 %v432
        %v623 = vunpack.c.h.b16 %v432
        %v624 = vunpack.c.l.b16 %v433
        %v625 = vunpack.c.h.b16 %v433
        %v626 = vpack.c.b16 %v502, %v498
        %v627 = vpack.c.b16 %v503, %v499
        %v628 = vpack.c.b16 %v504, %v500
        %v629 = vpack.c.b16 %v505, %v501
        %v630 = vpack.c.b16 %v510, %v506
        %v631 = vpack.c.b16 %v511, %v507
        %v632 = vpack.c.b16 %v512, %v508
        %v633 = vpack.c.b16 %v513, %v509
        %v634 = vpack.c.b16 %v518, %v514
        %v635 = vpack.c.b16 %v519, %v515
        %v636 = vpack.c.b16 %v520, %v516
        %v637 = vpack.c.b16 %v521, %v517
        %v638 = vpack.c.b16 %v526, %v522
        %v639 = vpack.c.b16 %v527, %v523
        %v640 = vpack.c.b16 %v528, %v524
        %v641 = vpack.c.b16 %v529, %v525
        %v642 = vpack.c.b16 %v534, %v530
        %v643 = vpack.c.b16 %v535, %v531
        %v644 = vpack.c.b16 %v536, %v532
        %v645 = vpack.c.b16 %v537, %v533
        %v646 = vpack.c.b16 %v542, %v538
        %v647 = vpack.c.b16 %v543, %v539
        %v648 = vpack.c.b16 %v544, %v540
        %v649 = vpack.c.b16 %v545, %v541
        %v650 = vpack.c.b16 %v550, %v546
        %v651 = vpack.c.b16 %v551, %v547
        %v652 = vpack.c.b16 %v552, %v548
        %v653 = vpack.c.b16 %v553, %v549
        %v654 = vpack.c.b16 %v558, %v554
        %v655 = vpack.c.b16 %v559, %v555
        %v656 = vpack.c.b16 %v560, %v556
        %v657 = vpack.c.b16 %v561, %v557
        %v658 = vpack.c.b16 %v566, %v562
        %v659 = vpack.c.b16 %v567, %v563
        %v660 = vpack.c.b16 %v568, %v564
        %v661 = vpack.c.b16 %v569, %v565
        %v662 = vpack.c.b16 %v574, %v570
        %v663 = vpack.c.b16 %v575, %v571
        %v664 = vpack.c.b16 %v576, %v572
        %v665 = vpack.c.b16 %v577, %v573
        %v666 = vpack.c.b16 %v582, %v578
        %v667 = vpack.c.b16 %v583, %v579
        %v668 = vpack.c.b16 %v584, %v580
        %v669 = vpack.c.b16 %v585, %v581
        %v670 = vpack.c.b16 %v590, %v586
        %v671 = vpack.c.b16 %v591, %v587
        %v672 = vpack.c.b16 %v592, %v588
        %v673 = vpack.c.b16 %v593, %v589
        %v674 = vpack.c.b16 %v598, %v594
        %v675 = vpack.c.b16 %v599, %v595
        %v676 = vpack.c.b16 %v600, %v596
        %v677 = vpack.c.b16 %v601, %v597
        %v678 = vpack.c.b16 %v606, %v602
        %v679 = vpack.c.b16 %v607, %v603
        %v680 = vpack.c.b16 %v608, %v604
        %v681 = vpack.c.b16 %v609, %v605
        %v682 = vpack.c.b16 %v614, %v610
        %v683 = vpack.c.b16 %v615, %v611
        %v684 = vpack.c.b16 %v616, %v612
        %v685 = vpack.c.b16 %v617, %v613
        %v686 = vpack.c.b16 %v622, %v618
        %v687 = vpack.c.b16 %v623, %v619
        %v688 = vpack.c.b16 %v624, %v620
        %v689 = vpack.c.b16 %v625, %v621
        %754 = vmatprep.subr.bf16.mxu0 %v627
        %755 = vmatpush1.bf16.msra.mxu0 %v626
        %756 = vmatprep.subr.bf16.mxu0 %v631
        %757 = vmatpush1.bf16.msra.mxu0 %v630
        %758 = vmatprep.subr.bf16.mxu0 %v635
        %759 = vmatpush1.bf16.msra.mxu0 %v634
        %760 = vmatprep.subr.bf16.mxu0 %v639
        %761 = vmatpush1.bf16.msra.mxu0 %v638
        %762 = vmatprep.subr.bf16.mxu0 %v643
        %763 = vmatpush1.bf16.msra.mxu0 %v642
        %764 = vmatprep.subr.bf16.mxu0 %v647
        %765 = vmatpush1.bf16.msra.mxu0 %v646
        %766 = vmatprep.subr.bf16.mxu0 %v651
        %767 = vmatpush1.bf16.msra.mxu0 %v650
        %768 = vmatprep.subr.bf16.mxu0 %v655
        %769 = vmatpush1.bf16.msra.mxu0 %v654
        %770 = vmatprep.subr.bf16.mxu0 %v659
        %771 = vmatpush1.bf16.msra.mxu0 %v658
        %772 = vmatprep.subr.bf16.mxu0 %v663
        %773 = vmatpush1.bf16.msra.mxu0 %v662
        %774 = vmatprep.subr.bf16.mxu0 %v667
        %775 = vmatpush1.bf16.msra.mxu0 %v666
        %776 = vmatprep.subr.bf16.mxu0 %v671
        %777 = vmatpush1.bf16.msra.mxu0 %v670
        %778 = vmatprep.subr.bf16.mxu0 %v675
        %779 = vmatpush1.bf16.msra.mxu0 %v674
        %780 = vmatprep.subr.bf16.mxu0 %v679
        %781 = vmatpush1.bf16.msra.mxu0 %v678
        %782 = vmatprep.subr.bf16.mxu0 %v683
        %783 = vmatpush1.bf16.msra.mxu0 %v682
        %784 = vmatprep.subr.bf16.mxu0 %v687
        %785 = vmatpush1.bf16.msra.mxu0 %v686
        %786 = vmatprep.mubr.bf16.mxu0 %v355
        %787 = vmatmul.mubr.bf16.gmra.mrb[0].mxu0 %v354
        %v788 = vpop.f32.mrb[0].mxu0
        %v789 = vadd.f32 0.0, %v788
        %v790 = vpop.f32.mrb[0].mxu0
        %v791 = vadd.f32 0.0, %v790
        %v792 = vpop.f32.mrb[0].mxu0
        %v793 = vadd.f32 0.0, %v792
        %v794 = vpop.f32.mrb[0].mxu0
        %v795 = vadd.f32 0.0, %v794
        %796 = vmatprep.mubr.bf16.mxu0 %v357
        %797 = vmatmul.mubr.bf16.gmra.mrb[0].mxu0 %v356
        %v798 = vpop.f32.mrb[0].mxu0
        %v799 = vadd.f32 0.0, %v798
        %v800 = vpop.f32.mrb[0].mxu0
        %v801 = vadd.f32 0.0, %v800
        %v802 = vpop.f32.mrb[0].mxu0
        %v803 = vadd.f32 0.0, %v802
        %v804 = vpop.f32.mrb[0].mxu0
        %v805 = vadd.f32 0.0, %v804
        %806 = vmatprep.mubr.bf16.mxu0 %v359
        %807 = vmatmul.mubr.bf16.gmra.mrb[0].mxu0 %v358
        %v808 = vpop.f32.mrb[0].mxu0
        %v809 = vadd.f32 0.0, %v808
        %v810 = vpop.f32.mrb[0].mxu0
        %v811 = vadd.f32 0.0, %v810
        %v812 = vpop.f32.mrb[0].mxu0
        %v813 = vadd.f32 0.0, %v812
        %v814 = vpop.f32.mrb[0].mxu0
        %v815 = vadd.f32 0.0, %v814
        %816 = vmatprep.mubr.bf16.mxu0 %v361
        %817 = vmatmul.mubr.bf16.gmra.mrb[0].mxu0 %v360
        %v818 = vpop.f32.mrb[0].mxu0
        %v819 = vadd.f32 0.0, %v818
        %v820 = vpop.f32.mrb[0].mxu0
        %v821 = vadd.f32 0.0, %v820
        %v822 = vpop.f32.mrb[0].mxu0
        %v823 = vadd.f32 0.0, %v822
        %v824 = vpop.f32.mrb[0].mxu0
        %v825 = vadd.f32 0.0, %v824
        %826 = vmatprep.mubr.bf16.mxu0 %v363
        %827 = vmatmul.mubr.bf16.gmra.mrb[0].mxu0 %v362
        %v828 = vpop.f32.mrb[0].mxu0
        %v829 = vadd.f32 0.0, %v828
        %v830 = vpop.f32.mrb[0].mxu0
        %v831 = vadd.f32 0.0, %v830
        %v832 = vpop.f32.mrb[0].mxu0
        %v833 = vadd.f32 0.0, %v832
        %v834 = vpop.f32.mrb[0].mxu0
        %v835 = vadd.f32 0.0, %v834
        %836 = vmatprep.mubr.bf16.mxu0 %v365
        %837 = vmatmul.mubr.bf16.gmra.mrb[0].mxu0 %v364
        %v838 = vpop.f32.mrb[0].mxu0
        %v839 = vadd.f32 0.0, %v838
        %v840 = vpop.f32.mrb[0].mxu0
        %v841 = vadd.f32 0.0, %v840
        %v842 = vpop.f32.mrb[0].mxu0
        %v843 = vadd.f32 0.0, %v842
        %v844 = vpop.f32.mrb[0].mxu0
        %v845 = vadd.f32 0.0, %v844
        %846 = vmatprep.mubr.bf16.mxu0 %v367
        %847 = vmatmul.mubr.bf16.gmra.mrb[0].mxu0 %v366
        %v848 = vpop.f32.mrb[0].mxu0
        %v849 = vadd.f32 0.0, %v848
        %v850 = vpop.f32.mrb[0].mxu0
        %v851 = vadd.f32 0.0, %v850
        %v852 = vpop.f32.mrb[0].mxu0
        %v853 = vadd.f32 0.0, %v852
        %v854 = vpop.f32.mrb[0].mxu0
        %v855 = vadd.f32 0.0, %v854
        %856 = vmatprep.mubr.bf16.mxu0 %v369
        %857 = vmatmul.mubr.bf16.gmra.mrb[0].mxu0 %v368
        %v858 = vpop.f32.mrb[0].mxu0
        %v859 = vadd.f32 0.0, %v858
        %v860 = vpop.f32.mrb[0].mxu0
        %v861 = vadd.f32 0.0, %v860
        %v862 = vpop.f32.mrb[0].mxu0
        %v863 = vadd.f32 0.0, %v862
        %v864 = vpop.f32.mrb[0].mxu0
        %v865 = vadd.f32 0.0, %v864
        %866 = vdwg.mxu0
        %867 = vmatprep.subr.bf16.mxu0 %v629
        %868 = vmatpush1.bf16.msra.mxu0 %v628
        %869 = vmatprep.subr.bf16.mxu0 %v633
        %870 = vmatpush1.bf16.msra.mxu0 %v632
        %871 = vmatprep.subr.bf16.mxu0 %v637
        %872 = vmatpush1.bf16.msra.mxu0 %v636
        %873 = vmatprep.subr.bf16.mxu0 %v641
        %874 = vmatpush1.bf16.msra.mxu0 %v640
        %875 = vmatprep.subr.bf16.mxu0 %v645
        %876 = vmatpush1.bf16.msra.mxu0 %v644
        %877 = vmatprep.subr.bf16.mxu0 %v649
        %878 = vmatpush1.bf16.msra.mxu0 %v648
        %879 = vmatprep.subr.bf16.mxu0 %v653
        %880 = vmatpush1.bf16.msra.mxu0 %v652
        %881 = vmatprep.subr.bf16.mxu0 %v657
        %882 = vmatpush1.bf16.msra.mxu0 %v656
        %883 = vmatprep.subr.bf16.mxu0 %v661
        %884 = vmatpush1.bf16.msra.mxu0 %v660
        %885 = vmatprep.subr.bf16.mxu0 %v665
        %886 = vmatpush1.bf16.msra.mxu0 %v664
        %887 = vmatprep.subr.bf16.mxu0 %v669
        %888 = vmatpush1.bf16.msra.mxu0 %v668
        %889 = vmatprep.subr.bf16.mxu0 %v673
        %890 = vmatpush1.bf16.msra.mxu0 %v672
        %891 = vmatprep.subr.bf16.mxu0 %v677
        %892 = vmatpush1.bf16.msra.mxu0 %v676
        %893 = vmatprep.subr.bf16.mxu0 %v681
        %894 = vmatpush1.bf16.msra.mxu0 %v680
        %895 = vmatprep.subr.bf16.mxu0 %v685
        %896 = vmatpush1.bf16.msra.mxu0 %v684
        %897 = vmatprep.subr.bf16.mxu0 %v689
        %898 = vmatpush1.bf16.msra.mxu0 %v688
        %899 = vmatprep.mubr.bf16.mxu0 %v355
        %900 = vmatmul.mubr.bf16.gmra.mrb[0].mxu0 %v354
        %v901 = vpop.f32.mrb[0].mxu0
        %v902 = vadd.f32 0.0, %v901
        %v903 = vpop.f32.mrb[0].mxu0
        %v904 = vadd.f32 0.0, %v903
        %v905 = vpop.f32.mrb[0].mxu0
        %v906 = vadd.f32 0.0, %v905
        %v907 = vpop.f32.mrb[0].mxu0
        %v908 = vadd.f32 0.0, %v907
        %909 = vmatprep.mubr.bf16.mxu0 %v357
        %910 = vmatmul.mubr.bf16.gmra.mrb[0].mxu0 %v356
        %v911 = vpop.f32.mrb[0].mxu0
        %v912 = vadd.f32 0.0, %v911
        %v913 = vpop.f32.mrb[0].mxu0
        %v914 = vadd.f32 0.0, %v913
        %v915 = vpop.f32.mrb[0].mxu0
        %v916 = vadd.f32 0.0, %v915
        %v917 = vpop.f32.mrb[0].mxu0
        %v918 = vadd.f32 0.0, %v917
        %919 = vmatprep.mubr.bf16.mxu0 %v359
        %920 = vmatmul.mubr.bf16.gmra.mrb[0].mxu0 %v358
        %v921 = vpop.f32.mrb[0].mxu0
        %v922 = vadd.f32 0.0, %v921
        %v923 = vpop.f32.mrb[0].mxu0
        %v924 = vadd.f32 0.0, %v923
        %v925 = vpop.f32.mrb[0].mxu0
        %v926 = vadd.f32 0.0, %v925
        %v927 = vpop.f32.mrb[0].mxu0
        %v928 = vadd.f32 0.0, %v927
        %929 = vmatprep.mubr.bf16.mxu0 %v361
        %930 = vmatmul.mubr.bf16.gmra.mrb[0].mxu0 %v360
        %v931 = vpop.f32.mrb[0].mxu0
        %v932 = vadd.f32 0.0, %v931
        %v933 = vpop.f32.mrb[0].mxu0
        %v934 = vadd.f32 0.0, %v933
        %v935 = vpop.f32.mrb[0].mxu0
        %v936 = vadd.f32 0.0, %v935
        %v937 = vpop.f32.mrb[0].mxu0
        %v938 = vadd.f32 0.0, %v937
        %939 = vmatprep.mubr.bf16.mxu0 %v363
        %940 = vmatmul.mubr.bf16.gmra.mrb[0].mxu0 %v362
        %v941 = vpop.f32.mrb[0].mxu0
        %v942 = vadd.f32 0.0, %v941
        %v943 = vpop.f32.mrb[0].mxu0
        %v944 = vadd.f32 0.0, %v943
        %v945 = vpop.f32.mrb[0].mxu0
        %v946 = vadd.f32 0.0, %v945
        %v947 = vpop.f32.mrb[0].mxu0
        %v948 = vadd.f32 0.0, %v947
        %949 = vmatprep.mubr.bf16.mxu0 %v365
        %950 = vmatmul.mubr.bf16.gmra.mrb[0].mxu0 %v364
        %v951 = vpop.f32.mrb[0].mxu0
        %v952 = vadd.f32 0.0, %v951
        %v953 = vpop.f32.mrb[0].mxu0
        %v954 = vadd.f32 0.0, %v953
        %v955 = vpop.f32.mrb[0].mxu0
        %v956 = vadd.f32 0.0, %v955
        %v957 = vpop.f32.mrb[0].mxu0
        %v958 = vadd.f32 0.0, %v957
        %959 = vmatprep.mubr.bf16.mxu0 %v367
        %960 = vmatmul.mubr.bf16.gmra.mrb[0].mxu0 %v366
        %v961 = vpop.f32.mrb[0].mxu0
        %v962 = vadd.f32 0.0, %v961
        %v963 = vpop.f32.mrb[0].mxu0
        %v964 = vadd.f32 0.0, %v963
        %v965 = vpop.f32.mrb[0].mxu0
        %v966 = vadd.f32 0.0, %v965
        %v967 = vpop.f32.mrb[0].mxu0
        %v968 = vadd.f32 0.0, %v967
        %969 = vmatprep.mubr.bf16.mxu0 %v369
        %970 = vmatmul.mubr.bf16.gmra.mrb[0].mxu0 %v368
        %v971 = vpop.f32.mrb[0].mxu0
        %v972 = vadd.f32 0.0, %v971
        %v973 = vpop.f32.mrb[0].mxu0
        %v974 = vadd.f32 0.0, %v973
        %v975 = vpop.f32.mrb[0].mxu0
        %v976 = vadd.f32 0.0, %v975
        %v977 = vpop.f32.mrb[0].mxu0
        %v978 = vadd.f32 0.0, %v977
        %979 = vdwg.mxu0
        %v980 = vmul.f32 %v789, %v789
        %v981 = vmul.f32 %v791, %v791
        %v982 = vmul.f32 %v793, %v793
        %v983 = vmul.f32 %v795, %v795
        %v984 = vmul.f32 %v799, %v799
        %v985 = vmul.f32 %v801, %v801
        %v986 = vmul.f32 %v803, %v803
        %v987 = vmul.f32 %v805, %v805
        %v988 = vmul.f32 %v809, %v809
        %v989 = vmul.f32 %v811, %v811
        %v990 = vmul.f32 %v813, %v813
        %v991 = vmul.f32 %v815, %v815
        %v992 = vmul.f32 %v819, %v819
        %v993 = vmul.f32 %v821, %v821
        %v994 = vmul.f32 %v823, %v823
        %v995 = vmul.f32 %v825, %v825
        %v996 = vmul.f32 %v829, %v829
        %v997 = vmul.f32 %v831, %v831
        %v998 = vmul.f32 %v833, %v833
        %v999 = vmul.f32 %v835, %v835
        %v1000 = vmul.f32 %v839, %v839
        %v1001 = vmul.f32 %v841, %v841
        %v1002 = vmul.f32 %v843, %v843
        %v1003 = vmul.f32 %v845, %v845
        %v1004 = vmul.f32 %v849, %v849
        %v1005 = vmul.f32 %v851, %v851
        %v1006 = vmul.f32 %v853, %v853
        %v1007 = vmul.f32 %v855, %v855
        %v1008 = vmul.f32 %v859, %v859
        %v1009 = vmul.f32 %v861, %v861
        %v1010 = vmul.f32 %v863, %v863
        %v1011 = vmul.f32 %v865, %v865
        %v1012 = vmul.f32 %v902, %v902
        %v1013 = vmul.f32 %v904, %v904
        %v1014 = vmul.f32 %v906, %v906
        %v1015 = vmul.f32 %v908, %v908
        %v1016 = vmul.f32 %v912, %v912
        %v1017 = vmul.f32 %v914, %v914
        %v1018 = vmul.f32 %v916, %v916
        %v1019 = vmul.f32 %v918, %v918
        %v1020 = vmul.f32 %v922, %v922
        %v1021 = vmul.f32 %v924, %v924
        %v1022 = vmul.f32 %v926, %v926
        %v1023 = vmul.f32 %v928, %v928
        %v1024 = vmul.f32 %v932, %v932
        %v1025 = vmul.f32 %v934, %v934
        %v1026 = vmul.f32 %v936, %v936
        %v1027 = vmul.f32 %v938, %v938
        %v1028 = vmul.f32 %v942, %v942
        %v1029 = vmul.f32 %v944, %v944
        %v1030 = vmul.f32 %v946, %v946
        %v1031 = vmul.f32 %v948, %v948
        %v1032 = vmul.f32 %v952, %v952
        %v1033 = vmul.f32 %v954, %v954
        %v1034 = vmul.f32 %v956, %v956
        %v1035 = vmul.f32 %v958, %v958
        %v1036 = vmul.f32 %v962, %v962
        %v1037 = vmul.f32 %v964, %v964
        %v1038 = vmul.f32 %v966, %v966
        %v1039 = vmul.f32 %v968, %v968
        %v1040 = vmul.f32 %v972, %v972
        %v1041 = vmul.f32 %v974, %v974
        %v1042 = vmul.f32 %v976, %v976
        %v1043 = vmul.f32 %v978, %v978
        %v1044 = vadd.f32 %v980, %v1012
        %v1045 = vadd.f32 %v981, %v1013
        %v1046 = vadd.f32 %v982, %v1014
        %v1047 = vadd.f32 %v983, %v1015
        %v1048 = vadd.f32 %v984, %v1016
        %v1049 = vadd.f32 %v985, %v1017
        %v1050 = vadd.f32 %v986, %v1018
        %v1051 = vadd.f32 %v987, %v1019
        %v1052 = vadd.f32 %v988, %v1020
        %v1053 = vadd.f32 %v989, %v1021
        %v1054 = vadd.f32 %v990, %v1022
        %v1055 = vadd.f32 %v991, %v1023
        %v1056 = vadd.f32 %v992, %v1024
        %v1057 = vadd.f32 %v993, %v1025
        %v1058 = vadd.f32 %v994, %v1026
        %v1059 = vadd.f32 %v995, %v1027
        %v1060 = vadd.f32 %v996, %v1028
        %v1061 = vadd.f32 %v997, %v1029
        %v1062 = vadd.f32 %v998, %v1030
        %v1063 = vadd.f32 %v999, %v1031
        %v1064 = vadd.f32 %v1000, %v1032
        %v1065 = vadd.f32 %v1001, %v1033
        %v1066 = vadd.f32 %v1002, %v1034
        %v1067 = vadd.f32 %v1003, %v1035
        %v1068 = vadd.f32 %v1004, %v1036
        %v1069 = vadd.f32 %v1005, %v1037
        %v1070 = vadd.f32 %v1006, %v1038
        %v1071 = vadd.f32 %v1007, %v1039
        %v1072 = vadd.f32 %v1008, %v1040
        %v1073 = vadd.f32 %v1009, %v1041
        %v1074 = vadd.f32 %v1010, %v1042
        %v1075 = vadd.f32 %v1011, %v1043
        %v1076 = vrsqrt.pop %v1044
        %v1077 = vmul.f32 %v1044, %v1076
        %vm1078 = vcmp.eq.f32.partialorder %v1044, inf
        %v1079 = vsel %vm1078, %v1044, %v1077
        %vm1080 = vcmp.eq.f32.partialorder %v1044, 0.0
        %v1081 = vand.u32 %v1044, 2147483648
        %v1082 = vsel %vm1080, %v1081, %v1079
        %v1083 = vrsqrt.pop %v1045
        %v1084 = vmul.f32 %v1045, %v1083
        %vm1085 = vcmp.eq.f32.partialorder %v1045, inf
        %v1086 = vsel %vm1085, %v1045, %v1084
        %vm1087 = vcmp.eq.f32.partialorder %v1045, 0.0
        %v1088 = vand.u32 %v1045, 2147483648
        %v1089 = vsel %vm1087, %v1088, %v1086
        %v1090 = vrsqrt.pop %v1046
        %v1091 = vmul.f32 %v1046, %v1090
        %vm1092 = vcmp.eq.f32.partialorder %v1046, inf
        %v1093 = vsel %vm1092, %v1046, %v1091
        %vm1094 = vcmp.eq.f32.partialorder %v1046, 0.0
        %v1095 = vand.u32 %v1046, 2147483648
        %v1096 = vsel %vm1094, %v1095, %v1093
        %v1097 = vrsqrt.pop %v1047
        %v1098 = vmul.f32 %v1047, %v1097
        %vm1099 = vcmp.eq.f32.partialorder %v1047, inf
        %v1100 = vsel %vm1099, %v1047, %v1098
        %vm1101 = vcmp.eq.f32.partialorder %v1047, 0.0
        %v1102 = vand.u32 %v1047, 2147483648
        %v1103 = vsel %vm1101, %v1102, %v1100
        %v1104 = vrsqrt.pop %v1048
        %v1105 = vmul.f32 %v1048, %v1104
        %vm1106 = vcmp.eq.f32.partialorder %v1048, inf
        %v1107 = vsel %vm1106, %v1048, %v1105
        %vm1108 = vcmp.eq.f32.partialorder %v1048, 0.0
        %v1109 = vand.u32 %v1048, 2147483648
        %v1110 = vsel %vm1108, %v1109, %v1107
        %v1111 = vrsqrt.pop %v1049
        %v1112 = vmul.f32 %v1049, %v1111
        %vm1113 = vcmp.eq.f32.partialorder %v1049, inf
        %v1114 = vsel %vm1113, %v1049, %v1112
        %vm1115 = vcmp.eq.f32.partialorder %v1049, 0.0
        %v1116 = vand.u32 %v1049, 2147483648
        %v1117 = vsel %vm1115, %v1116, %v1114
        %v1118 = vrsqrt.pop %v1050
        %v1119 = vmul.f32 %v1050, %v1118
        %vm1120 = vcmp.eq.f32.partialorder %v1050, inf
        %v1121 = vsel %vm1120, %v1050, %v1119
        %vm1122 = vcmp.eq.f32.partialorder %v1050, 0.0
        %v1123 = vand.u32 %v1050, 2147483648
        %v1124 = vsel %vm1122, %v1123, %v1121
        %v1125 = vrsqrt.pop %v1051
        %v1126 = vmul.f32 %v1051, %v1125
        %vm1127 = vcmp.eq.f32.partialorder %v1051, inf
        %v1128 = vsel %vm1127, %v1051, %v1126
        %vm1129 = vcmp.eq.f32.partialorder %v1051, 0.0
        %v1130 = vand.u32 %v1051, 2147483648
        %v1131 = vsel %vm1129, %v1130, %v1128
        %v1132 = vrsqrt.pop %v1052
        %v1133 = vmul.f32 %v1052, %v1132
        %vm1134 = vcmp.eq.f32.partialorder %v1052, inf
        %v1135 = vsel %vm1134, %v1052, %v1133
        %vm1136 = vcmp.eq.f32.partialorder %v1052, 0.0
        %v1137 = vand.u32 %v1052, 2147483648
        %v1138 = vsel %vm1136, %v1137, %v1135
        %v1139 = vrsqrt.pop %v1053
        %v1140 = vmul.f32 %v1053, %v1139
        %vm1141 = vcmp.eq.f32.partialorder %v1053, inf
        %v1142 = vsel %vm1141, %v1053, %v1140
        %vm1143 = vcmp.eq.f32.partialorder %v1053, 0.0
        %v1144 = vand.u32 %v1053, 2147483648
        %v1145 = vsel %vm1143, %v1144, %v1142
        %v1146 = vrsqrt.pop %v1054
        %v1147 = vmul.f32 %v1054, %v1146
        %vm1148 = vcmp.eq.f32.partialorder %v1054, inf
        %v1149 = vsel %vm1148, %v1054, %v1147
        %vm1150 = vcmp.eq.f32.partialorder %v1054, 0.0
        %v1151 = vand.u32 %v1054, 2147483648
        %v1152 = vsel %vm1150, %v1151, %v1149
        %v1153 = vrsqrt.pop %v1055
        %v1154 = vmul.f32 %v1055, %v1153
        %vm1155 = vcmp.eq.f32.partialorder %v1055, inf
        %v1156 = vsel %vm1155, %v1055, %v1154
        %vm1157 = vcmp.eq.f32.partialorder %v1055, 0.0
        %v1158 = vand.u32 %v1055, 2147483648
        %v1159 = vsel %vm1157, %v1158, %v1156
        %v1160 = vrsqrt.pop %v1056
        %v1161 = vmul.f32 %v1056, %v1160
        %vm1162 = vcmp.eq.f32.partialorder %v1056, inf
        %v1163 = vsel %vm1162, %v1056, %v1161
        %vm1164 = vcmp.eq.f32.partialorder %v1056, 0.0
        %v1165 = vand.u32 %v1056, 2147483648
        %v1166 = vsel %vm1164, %v1165, %v1163
        %v1167 = vrsqrt.pop %v1057
        %v1168 = vmul.f32 %v1057, %v1167
        %vm1169 = vcmp.eq.f32.partialorder %v1057, inf
        %v1170 = vsel %vm1169, %v1057, %v1168
        %vm1171 = vcmp.eq.f32.partialorder %v1057, 0.0
        %v1172 = vand.u32 %v1057, 2147483648
        %v1173 = vsel %vm1171, %v1172, %v1170
        %v1174 = vrsqrt.pop %v1058
        %v1175 = vmul.f32 %v1058, %v1174
        %vm1176 = vcmp.eq.f32.partialorder %v1058, inf
        %v1177 = vsel %vm1176, %v1058, %v1175
        %vm1178 = vcmp.eq.f32.partialorder %v1058, 0.0
        %v1179 = vand.u32 %v1058, 2147483648
        %v1180 = vsel %vm1178, %v1179, %v1177
        %v1181 = vrsqrt.pop %v1059
        %v1182 = vmul.f32 %v1059, %v1181
        %vm1183 = vcmp.eq.f32.partialorder %v1059, inf
        %v1184 = vsel %vm1183, %v1059, %v1182
        %vm1185 = vcmp.eq.f32.partialorder %v1059, 0.0
        %v1186 = vand.u32 %v1059, 2147483648
        %v1187 = vsel %vm1185, %v1186, %v1184
        %v1188 = vrsqrt.pop %v1060
        %v1189 = vmul.f32 %v1060, %v1188
        %vm1190 = vcmp.eq.f32.partialorder %v1060, inf
        %v1191 = vsel %vm1190, %v1060, %v1189
        %vm1192 = vcmp.eq.f32.partialorder %v1060, 0.0
        %v1193 = vand.u32 %v1060, 2147483648
        %v1194 = vsel %vm1192, %v1193, %v1191
        %v1195 = vrsqrt.pop %v1061
        %v1196 = vmul.f32 %v1061, %v1195
        %vm1197 = vcmp.eq.f32.partialorder %v1061, inf
        %v1198 = vsel %vm1197, %v1061, %v1196
        %vm1199 = vcmp.eq.f32.partialorder %v1061, 0.0
        %v1200 = vand.u32 %v1061, 2147483648
        %v1201 = vsel %vm1199, %v1200, %v1198
        %v1202 = vrsqrt.pop %v1062
        %v1203 = vmul.f32 %v1062, %v1202
        %vm1204 = vcmp.eq.f32.partialorder %v1062, inf
        %v1205 = vsel %vm1204, %v1062, %v1203
        %vm1206 = vcmp.eq.f32.partialorder %v1062, 0.0
        %v1207 = vand.u32 %v1062, 2147483648
        %v1208 = vsel %vm1206, %v1207, %v1205
        %v1209 = vrsqrt.pop %v1063
        %v1210 = vmul.f32 %v1063, %v1209
        %vm1211 = vcmp.eq.f32.partialorder %v1063, inf
        %v1212 = vsel %vm1211, %v1063, %v1210
        %vm1213 = vcmp.eq.f32.partialorder %v1063, 0.0
        %v1214 = vand.u32 %v1063, 2147483648
        %v1215 = vsel %vm1213, %v1214, %v1212
        %v1216 = vrsqrt.pop %v1064
        %v1217 = vmul.f32 %v1064, %v1216
        %vm1218 = vcmp.eq.f32.partialorder %v1064, inf
        %v1219 = vsel %vm1218, %v1064, %v1217
        %vm1220 = vcmp.eq.f32.partialorder %v1064, 0.0
        %v1221 = vand.u32 %v1064, 2147483648
        %v1222 = vsel %vm1220, %v1221, %v1219
        %v1223 = vrsqrt.pop %v1065
        %v1224 = vmul.f32 %v1065, %v1223
        %vm1225 = vcmp.eq.f32.partialorder %v1065, inf
        %v1226 = vsel %vm1225, %v1065, %v1224
        %vm1227 = vcmp.eq.f32.partialorder %v1065, 0.0
        %v1228 = vand.u32 %v1065, 2147483648
        %v1229 = vsel %vm1227, %v1228, %v1226
        %v1230 = vrsqrt.pop %v1066
        %v1231 = vmul.f32 %v1066, %v1230
        %vm1232 = vcmp.eq.f32.partialorder %v1066, inf
        %v1233 = vsel %vm1232, %v1066, %v1231
        %vm1234 = vcmp.eq.f32.partialorder %v1066, 0.0
        %v1235 = vand.u32 %v1066, 2147483648
        %v1236 = vsel %vm1234, %v1235, %v1233
        %v1237 = vrsqrt.pop %v1067
        %v1238 = vmul.f32 %v1067, %v1237
        %vm1239 = vcmp.eq.f32.partialorder %v1067, inf
        %v1240 = vsel %vm1239, %v1067, %v1238
        %vm1241 = vcmp.eq.f32.partialorder %v1067, 0.0
        %v1242 = vand.u32 %v1067, 2147483648
        %v1243 = vsel %vm1241, %v1242, %v1240
        %v1244 = vrsqrt.pop %v1068
        %v1245 = vmul.f32 %v1068, %v1244
        %vm1246 = vcmp.eq.f32.partialorder %v1068, inf
        %v1247 = vsel %vm1246, %v1068, %v1245
        %vm1248 = vcmp.eq.f32.partialorder %v1068, 0.0
        %v1249 = vand.u32 %v1068, 2147483648
        %v1250 = vsel %vm1248, %v1249, %v1247
        %v1251 = vrsqrt.pop %v1069
        %v1252 = vmul.f32 %v1069, %v1251
        %vm1253 = vcmp.eq.f32.partialorder %v1069, inf
        %v1254 = vsel %vm1253, %v1069, %v1252
        %vm1255 = vcmp.eq.f32.partialorder %v1069, 0.0
        %v1256 = vand.u32 %v1069, 2147483648
        %v1257 = vsel %vm1255, %v1256, %v1254
        %v1258 = vrsqrt.pop %v1070
        %v1259 = vmul.f32 %v1070, %v1258
        %vm1260 = vcmp.eq.f32.partialorder %v1070, inf
        %v1261 = vsel %vm1260, %v1070, %v1259
        %vm1262 = vcmp.eq.f32.partialorder %v1070, 0.0
        %v1263 = vand.u32 %v1070, 2147483648
        %v1264 = vsel %vm1262, %v1263, %v1261
        %v1265 = vrsqrt.pop %v1071
        %v1266 = vmul.f32 %v1071, %v1265
        %vm1267 = vcmp.eq.f32.partialorder %v1071, inf
        %v1268 = vsel %vm1267, %v1071, %v1266
        %vm1269 = vcmp.eq.f32.partialorder %v1071, 0.0
        %v1270 = vand.u32 %v1071, 2147483648
        %v1271 = vsel %vm1269, %v1270, %v1268
        %v1272 = vrsqrt.pop %v1072
        %v1273 = vmul.f32 %v1072, %v1272
        %vm1274 = vcmp.eq.f32.partialorder %v1072, inf
        %v1275 = vsel %vm1274, %v1072, %v1273
        %vm1276 = vcmp.eq.f32.partialorder %v1072, 0.0
        %v1277 = vand.u32 %v1072, 2147483648
        %v1278 = vsel %vm1276, %v1277, %v1275
        %v1279 = vrsqrt.pop %v1073
        %v1280 = vmul.f32 %v1073, %v1279
        %vm1281 = vcmp.eq.f32.partialorder %v1073, inf
        %v1282 = vsel %vm1281, %v1073, %v1280
        %vm1283 = vcmp.eq.f32.partialorder %v1073, 0.0
        %v1284 = vand.u32 %v1073, 2147483648
        %v1285 = vsel %vm1283, %v1284, %v1282
        %v1286 = vrsqrt.pop %v1074
        %v1287 = vmul.f32 %v1074, %v1286
        %vm1288 = vcmp.eq.f32.partialorder %v1074, inf
        %v1289 = vsel %vm1288, %v1074, %v1287
        %vm1290 = vcmp.eq.f32.partialorder %v1074, 0.0
        %v1291 = vand.u32 %v1074, 2147483648
        %v1292 = vsel %vm1290, %v1291, %v1289
        %v1293 = vrsqrt.pop %v1075
        %v1294 = vmul.f32 %v1075, %v1293
        %vm1295 = vcmp.eq.f32.partialorder %v1075, inf
        %v1296 = vsel %vm1295, %v1075, %v1294
        %vm1297 = vcmp.eq.f32.partialorder %v1075, 0.0
        %v1298 = vand.u32 %v1075, 2147483648
        %v1299 = vsel %vm1297, %v1298, %v1296
        %v1300 = vld [vmem:[#allocation2] sm:$0xff]
        %v1301 = vld [vmem:[#allocation2 + $0x8] sm:$0xff]
        %v1302 = vld [vmem:[#allocation2 + $0x10] sm:$0xff]
        %v1303 = vld [vmem:[#allocation2 + $0x18] sm:$0xff]
        %v1304 = vld [vmem:[#allocation2 + $0x20] sm:$0xff]
        %v1305 = vld [vmem:[#allocation2 + $0x28] sm:$0xff]
        %v1306 = vld [vmem:[#allocation2 + $0x30] sm:$0xff]
        %v1307 = vld [vmem:[#allocation2 + $0x38] sm:$0xff]
        %v1308 = vld [vmem:[#allocation2 + $0x40] sm:$0xff]
        %v1309 = vld [vmem:[#allocation2 + $0x48] sm:$0xff]
        %v1310 = vld [vmem:[#allocation2 + $0x50] sm:$0xff]
        %v1311 = vld [vmem:[#allocation2 + $0x58] sm:$0xff]
        %v1312 = vld [vmem:[#allocation2 + $0x60] sm:$0xff]
        %v1313 = vld [vmem:[#allocation2 + $0x68] sm:$0xff]
        %v1314 = vld [vmem:[#allocation2 + $0x70] sm:$0xff]
        %v1315 = vld [vmem:[#allocation2 + $0x78] sm:$0xff]
        %v1316 = vpack.c.bf16 %v1096, %v1082
        %v1317 = vpack.c.bf16 %v1103, %v1089
        %v1318 = vpack.c.bf16 %v1124, %v1110
        %v1319 = vpack.c.bf16 %v1131, %v1117
        %v1320 = vpack.c.bf16 %v1152, %v1138
        %v1321 = vpack.c.bf16 %v1159, %v1145
        %v1322 = vpack.c.bf16 %v1180, %v1166
        %v1323 = vpack.c.bf16 %v1187, %v1173
        %v1324 = vpack.c.bf16 %v1208, %v1194
        %v1325 = vpack.c.bf16 %v1215, %v1201
        %v1326 = vpack.c.bf16 %v1236, %v1222
        %v1327 = vpack.c.bf16 %v1243, %v1229
        %v1328 = vpack.c.bf16 %v1264, %v1250
        %v1329 = vpack.c.bf16 %v1271, %v1257
        %v1330 = vpack.c.bf16 %v1292, %v1278
        %v1331 = vpack.c.bf16 %v1299, %v1285
        %v1332 = vld [vmem:[#allocation9] sm:$0xf]
        %v1333 = vld [vmem:[#allocation9 + $0x4] sm:$0xf]
        %v1334 = vld [vmem:[#allocation9 + $0x8] sm:$0xf]
        %v1335 = vld [vmem:[#allocation9 + $0xc] sm:$0xf]
        %v1336 = vld [vmem:[#allocation9 + $0x10] sm:$0xf]
        %v1337 = vld [vmem:[#allocation9 + $0x14] sm:$0xf]
        %v1338 = vld [vmem:[#allocation9 + $0x18] sm:$0xf]
        %v1339 = vld [vmem:[#allocation9 + $0x1c] sm:$0xf]
        %v1340 = vld [vmem:[#allocation9 + $0x20] sm:$0xf]
        %v1341 = vld [vmem:[#allocation9 + $0x24] sm:$0xf]
        %v1342 = vld [vmem:[#allocation9 + $0x28] sm:$0xf]
        %v1343 = vld [vmem:[#allocation9 + $0x2c] sm:$0xf]
        %v1344 = vld [vmem:[#allocation9 + $0x30] sm:$0xf]
        %v1345 = vld [vmem:[#allocation9 + $0x34] sm:$0xf]
        %v1346 = vld [vmem:[#allocation9 + $0x38] sm:$0xf]
        %v1347 = vld [vmem:[#allocation9 + $0x3c] sm:$0xf]
        %v1348 = vld [vmem:[#allocation9 + $0x40] sm:$0xf]
        %v1349 = vld [vmem:[#allocation9 + $0x44] sm:$0xf]
        %v1350 = vld [vmem:[#allocation9 + $0x48] sm:$0xf]
        %v1351 = vld [vmem:[#allocation9 + $0x4c] sm:$0xf]
        %v1352 = vld [vmem:[#allocation9 + $0x50] sm:$0xf]
        %v1353 = vld [vmem:[#allocation9 + $0x54] sm:$0xf]
        %v1354 = vld [vmem:[#allocation9 + $0x58] sm:$0xf]
        %v1355 = vld [vmem:[#allocation9 + $0x5c] sm:$0xf]
        %v1356 = vld [vmem:[#allocation9 + $0x60] sm:$0xf]
        %v1357 = vld [vmem:[#allocation9 + $0x64] sm:$0xf]
        %v1358 = vld [vmem:[#allocation9 + $0x68] sm:$0xf]
        %v1359 = vld [vmem:[#allocation9 + $0x6c] sm:$0xf]
        %v1360 = vld [vmem:[#allocation9 + $0x70] sm:$0xf]
        %v1361 = vld [vmem:[#allocation9 + $0x74] sm:$0xf]
        %v1362 = vld [vmem:[#allocation9 + $0x78] sm:$0xf]
        %v1363 = vld [vmem:[#allocation9 + $0x7c] sm:$0xf]
        %v1396 = vunpack.c.l.b16 %v1332
        %v1397 = vunpack.c.l.b16 %v1333
        %v1398 = vunpack.c.l.b16 %v1334
        %v1399 = vunpack.c.l.b16 %v1335
        %v1400 = vunpack.c.l.b16 %v1336
        %v1401 = vunpack.c.l.b16 %v1337
        %v1402 = vunpack.c.l.b16 %v1338
        %v1403 = vunpack.c.l.b16 %v1339
        %v1404 = vunpack.c.l.b16 %v1340
        %v1405 = vunpack.c.l.b16 %v1341
        %v1406 = vunpack.c.l.b16 %v1342
        %v1407 = vunpack.c.l.b16 %v1343
        %v1408 = vunpack.c.l.b16 %v1344
        %v1409 = vunpack.c.l.b16 %v1345
        %v1410 = vunpack.c.l.b16 %v1346
        %v1411 = vunpack.c.l.b16 %v1347
        %v1412 = vunpack.c.l.b16 %v1348
        %v1413 = vunpack.c.l.b16 %v1349
        %v1414 = vunpack.c.l.b16 %v1350
        %v1415 = vunpack.c.l.b16 %v1351
        %v1416 = vunpack.c.l.b16 %v1352
        %v1417 = vunpack.c.l.b16 %v1353
        %v1418 = vunpack.c.l.b16 %v1354
        %v1419 = vunpack.c.l.b16 %v1355
        %v1420 = vunpack.c.l.b16 %v1356
        %v1421 = vunpack.c.l.b16 %v1357
        %v1422 = vunpack.c.l.b16 %v1358
        %v1423 = vunpack.c.l.b16 %v1359
        %v1424 = vunpack.c.l.b16 %v1360
        %v1425 = vunpack.c.l.b16 %v1361
        %v1426 = vunpack.c.l.b16 %v1362
        %v1427 = vunpack.c.l.b16 %v1363
        %v1428 = vpack.c.b16 %v1397, %v1396
        %v1429 = vpack.c.b16 %v1399, %v1398
        %v1430 = vpack.c.b16 %v1401, %v1400
        %v1431 = vpack.c.b16 %v1403, %v1402
        %v1432 = vpack.c.b16 %v1405, %v1404
        %v1433 = vpack.c.b16 %v1407, %v1406
        %v1434 = vpack.c.b16 %v1409, %v1408
        %v1435 = vpack.c.b16 %v1411, %v1410
        %v1436 = vpack.c.b16 %v1413, %v1412
        %v1437 = vpack.c.b16 %v1415, %v1414
        %v1438 = vpack.c.b16 %v1417, %v1416
        %v1439 = vpack.c.b16 %v1419, %v1418
        %v1440 = vpack.c.b16 %v1421, %v1420
        %v1441 = vpack.c.b16 %v1423, %v1422
        %v1442 = vpack.c.b16 %v1425, %v1424
        %v1443 = vpack.c.b16 %v1427, %v1426
        %1460 = vmatprep.subr.bf16.mxu0 0
        %1461 = vmatpush1.bf16.msra.mxu0 %v1428
        %1462 = vmatprep.subr.bf16.mxu0 0
        %1463 = vmatpush1.bf16.msra.mxu0 %v1429
        %1464 = vmatprep.subr.bf16.mxu0 0
        %1465 = vmatpush1.bf16.msra.mxu0 %v1430
        %1466 = vmatprep.subr.bf16.mxu0 0
        %1467 = vmatpush1.bf16.msra.mxu0 %v1431
        %1468 = vmatprep.subr.bf16.mxu0 0
        %1469 = vmatpush1.bf16.msra.mxu0 %v1432
        %1470 = vmatprep.subr.bf16.mxu0 0
        %1471 = vmatpush1.bf16.msra.mxu0 %v1433
        %1472 = vmatprep.subr.bf16.mxu0 0
        %1473 = vmatpush1.bf16.msra.mxu0 %v1434
        %1474 = vmatprep.subr.bf16.mxu0 0
        %1475 = vmatpush1.bf16.msra.mxu0 %v1435
        %1476 = vmatprep.subr.bf16.mxu0 0
        %1477 = vmatpush1.bf16.msra.mxu0 %v1436
        %1478 = vmatprep.subr.bf16.mxu0 0
        %1479 = vmatpush1.bf16.msra.mxu0 %v1437
        %1480 = vmatprep.subr.bf16.mxu0 0
        %1481 = vmatpush1.bf16.msra.mxu0 %v1438
        %1482 = vmatprep.subr.bf16.mxu0 0
        %1483 = vmatpush1.bf16.msra.mxu0 %v1439
        %1484 = vmatprep.subr.bf16.mxu0 0
        %1485 = vmatpush1.bf16.msra.mxu0 %v1440
        %1486 = vmatprep.subr.bf16.mxu0 0
        %1487 = vmatpush1.bf16.msra.mxu0 %v1441
        %1488 = vmatprep.subr.bf16.mxu0 0
        %1489 = vmatpush1.bf16.msra.mxu0 %v1442
        %1490 = vmatprep.subr.bf16.mxu0 0
        %1491 = vmatpush1.bf16.msra.mxu0 %v1443
        %1492 = vmatprep.mubr.bf16.mxu0 %v1317
        %1493 = vmatmul.mubr.bf16.gmra.mrb[0].mxu0 %v1316
        %v1494 = vpop.f32.mrb[0].mxu0
        %v1495 = vadd.f32 0.0, %v1494
        %v1496 = vpop.f32.mrb[0].mxu0
        %v1497 = vpop.f32.mrb[0].mxu0
        %v1498 = vadd.f32 0.0, %v1497
        %v1499 = vpop.f32.mrb[0].mxu0
        %1500 = vmatprep.mubr.bf16.mxu0 %v1319
        %1501 = vmatmul.mubr.bf16.gmra.mrb[0].mxu0 %v1318
        %v1502 = vpop.f32.mrb[0].mxu0
        %v1503 = vadd.f32 0.0, %v1502
        %v1504 = vpop.f32.mrb[0].mxu0
        %v1505 = vpop.f32.mrb[0].mxu0
        %v1506 = vadd.f32 0.0, %v1505
        %v1507 = vpop.f32.mrb[0].mxu0
        %1508 = vmatprep.mubr.bf16.mxu0 %v1321
        %1509 = vmatmul.mubr.bf16.gmra.mrb[0].mxu0 %v1320
        %v1510 = vpop.f32.mrb[0].mxu0
        %v1511 = vadd.f32 0.0, %v1510
        %v1512 = vpop.f32.mrb[0].mxu0
        %v1513 = vpop.f32.mrb[0].mxu0
        %v1514 = vadd.f32 0.0, %v1513
        %v1515 = vpop.f32.mrb[0].mxu0
        %1516 = vmatprep.mubr.bf16.mxu0 %v1323
        %1517 = vmatmul.mubr.bf16.gmra.mrb[0].mxu0 %v1322
        %v1518 = vpop.f32.mrb[0].mxu0
        %v1519 = vadd.f32 0.0, %v1518
        %v1520 = vpop.f32.mrb[0].mxu0
        %v1521 = vpop.f32.mrb[0].mxu0
        %v1522 = vadd.f32 0.0, %v1521
        %v1523 = vpop.f32.mrb[0].mxu0
        %1524 = vmatprep.mubr.bf16.mxu0 %v1325
        %1525 = vmatmul.mubr.bf16.gmra.mrb[0].mxu0 %v1324
        %v1526 = vpop.f32.mrb[0].mxu0
        %v1527 = vadd.f32 0.0, %v1526
        %v1528 = vpop.f32.mrb[0].mxu0
        %v1529 = vpop.f32.mrb[0].mxu0
        %v1530 = vadd.f32 0.0, %v1529
        %v1531 = vpop.f32.mrb[0].mxu0
        %1532 = vmatprep.mubr.bf16.mxu0 %v1327
        %1533 = vmatmul.mubr.bf16.gmra.mrb[0].mxu0 %v1326
        %v1534 = vpop.f32.mrb[0].mxu0
        %v1535 = vadd.f32 0.0, %v1534
        %v1536 = vpop.f32.mrb[0].mxu0
        %v1537 = vpop.f32.mrb[0].mxu0
        %v1538 = vadd.f32 0.0, %v1537
        %v1539 = vpop.f32.mrb[0].mxu0
        %1540 = vmatprep.mubr.bf16.mxu0 %v1329
        %1541 = vmatmul.mubr.bf16.gmra.mrb[0].mxu0 %v1328
        %v1542 = vpop.f32.mrb[0].mxu0
        %v1543 = vadd.f32 0.0, %v1542
        %v1544 = vpop.f32.mrb[0].mxu0
        %v1545 = vpop.f32.mrb[0].mxu0
        %v1546 = vadd.f32 0.0, %v1545
        %v1547 = vpop.f32.mrb[0].mxu0
        %1548 = vmatprep.mubr.bf16.mxu0 %v1331
        %1549 = vmatmul.mubr.bf16.gmra.mrb[0].mxu0 %v1330
        %v1550 = vpop.f32.mrb[0].mxu0
        %v1551 = vadd.f32 0.0, %v1550
        %v1552 = vpop.f32.mrb[0].mxu0
        %v1553 = vpop.f32.mrb[0].mxu0
        %v1554 = vadd.f32 0.0, %v1553
        %v1555 = vpop.f32.mrb[0].mxu0
        %1556 = vdwg.mxu0
        %v1557 = vadd.f32 %v1300, %v1495
        %v1558 = vadd.f32 %v1301, %v1498
        %v1559 = vadd.f32 %v1302, %v1503
        %v1560 = vadd.f32 %v1303, %v1506
        %v1561 = vadd.f32 %v1304, %v1511
        %v1562 = vadd.f32 %v1305, %v1514
        %v1563 = vadd.f32 %v1306, %v1519
        %v1564 = vadd.f32 %v1307, %v1522
        %v1565 = vadd.f32 %v1308, %v1527
        %v1566 = vadd.f32 %v1309, %v1530
        %v1567 = vadd.f32 %v1310, %v1535
        %v1568 = vadd.f32 %v1311, %v1538
        %v1569 = vadd.f32 %v1312, %v1543
        %v1570 = vadd.f32 %v1313, %v1546
        %v1571 = vadd.f32 %v1314, %v1551
        %v1572 = vadd.f32 %v1315, %v1554
        %1573 = vst [vmem:[#allocation2] sm:$0xff] %v1557
        %1574 = vst [vmem:[#allocation2 + $0x8] sm:$0xff] %v1558
        %1575 = vst [vmem:[#allocation2 + $0x10] sm:$0xff] %v1559
        %1576 = vst [vmem:[#allocation2 + $0x18] sm:$0xff] %v1560
        %1577 = vst [vmem:[#allocation2 + $0x20] sm:$0xff] %v1561
        %1578 = vst [vmem:[#allocation2 + $0x28] sm:$0xff] %v1562
        %1579 = vst [vmem:[#allocation2 + $0x30] sm:$0xff] %v1563
        %1580 = vst [vmem:[#allocation2 + $0x38] sm:$0xff] %v1564
        %1581 = vst [vmem:[#allocation2 + $0x40] sm:$0xff] %v1565
        %1582 = vst [vmem:[#allocation2 + $0x48] sm:$0xff] %v1566
        %1583 = vst [vmem:[#allocation2 + $0x50] sm:$0xff] %v1567
        %1584 = vst [vmem:[#allocation2 + $0x58] sm:$0xff] %v1568
        %1585 = vst [vmem:[#allocation2 + $0x60] sm:$0xff] %v1569
        %1586 = vst [vmem:[#allocation2 + $0x68] sm:$0xff] %v1570
        %1587 = vst [vmem:[#allocation2 + $0x70] sm:$0xff] %v1571
        %1588 = vst [vmem:[#allocation2 + $0x78] sm:$0xff] %v1572
        // Predicated region
        $region57: #{tpu_custom_call.1} parent=35 // pred_check
          %p1589 = pneg %p302
        $region58: #{tpu_custom_call.1} parent=35 // pred_check_branch
          %1591 = sbr.rel (%p1589) target = $region60
        $region59: #{tpu_custom_call.1} parent=35 // pred_region
          %v1592 = vld [vmem:[%s251] sm:$0xff]
          %v1593 = vld [vmem:[%s251 + $0x8] sm:$0xff]
          %v1594 = vld [vmem:[%s251 + $0x10] sm:$0xff]
          %v1595 = vld [vmem:[%s251 + $0x18] sm:$0xff]
          %v1596 = vld [vmem:[%s251 + $0x20] sm:$0xff]
          %v1597 = vld [vmem:[%s251 + $0x28] sm:$0xff]
          %v1598 = vld [vmem:[%s251 + $0x30] sm:$0xff]
          %v1599 = vld [vmem:[%s251 + $0x38] sm:$0xff]
          %v1600 = vld [vmem:[%s251 + $0x40] sm:$0xff]
          %v1601 = vld [vmem:[%s251 + $0x48] sm:$0xff]
          %v1602 = vld [vmem:[%s251 + $0x50] sm:$0xff]
          %v1603 = vld [vmem:[%s251 + $0x58] sm:$0xff]
          %v1604 = vld [vmem:[%s251 + $0x60] sm:$0xff]
          %v1605 = vld [vmem:[%s251 + $0x68] sm:$0xff]
          %v1606 = vld [vmem:[%s251 + $0x70] sm:$0xff]
          %v1607 = vld [vmem:[%s251 + $0x78] sm:$0xff]
          %v1608 = vld [vmem:[%s251 + $0x80] sm:$0xff]
          %v1609 = vld [vmem:[%s251 + $0x88] sm:$0xff]
          %v1610 = vld [vmem:[%s251 + $0x90] sm:$0xff]
          %v1611 = vld [vmem:[%s251 + $0x98] sm:$0xff]
          %v1612 = vld [vmem:[%s251 + $0xa0] sm:$0xff]
          %v1613 = vld [vmem:[%s251 + $0xa8] sm:$0xff]
          %v1614 = vld [vmem:[%s251 + $0xb0] sm:$0xff]
          %v1615 = vld [vmem:[%s251 + $0xb8] sm:$0xff]
          %v1616 = vld [vmem:[%s251 + $0xc0] sm:$0xff]
          %v1617 = vld [vmem:[%s251 + $0xc8] sm:$0xff]
          %v1618 = vld [vmem:[%s251 + $0xd0] sm:$0xff]
          %v1619 = vld [vmem:[%s251 + $0xd8] sm:$0xff]
          %v1620 = vld [vmem:[%s251 + $0xe0] sm:$0xff]
          %v1621 = vld [vmem:[%s251 + $0xe8] sm:$0xff]
          %v1622 = vld [vmem:[%s251 + $0xf0] sm:$0xff]
          %v1623 = vld [vmem:[%s251 + $0xf8] sm:$0xff]
          %v1624 = vadd.f32 %v1592, %v1593
          %1625 = vadd.xlane.f32.xlu0 %v1624
          %v1626 = vpop.xlane.xlu0 %1625
          %v1627 = vadd.f32 %v1594, %v1595
          %1628 = vadd.xlane.f32.xlu0 %v1627
          %v1629 = vpop.xlane.xlu0 %1628
          %v1630 = vadd.f32 %v1596, %v1597
          %1631 = vadd.xlane.f32.xlu0 %v1630
          %v1632 = vpop.xlane.xlu0 %1631
          %v1633 = vadd.f32 %v1598, %v1599
          %1634 = vadd.xlane.f32.xlu0 %v1633
          %v1635 = vpop.xlane.xlu0 %1634
          %v1636 = vadd.f32 %v1600, %v1601
          %1637 = vadd.xlane.f32.xlu0 %v1636
          %v1638 = vpop.xlane.xlu0 %1637
          %v1639 = vadd.f32 %v1602, %v1603
          %1640 = vadd.xlane.f32.xlu0 %v1639
          %v1641 = vpop.xlane.xlu0 %1640
          %v1642 = vadd.f32 %v1604, %v1605
          %1643 = vadd.xlane.f32.xlu0 %v1642
          %v1644 = vpop.xlane.xlu0 %1643
          %v1645 = vadd.f32 %v1606, %v1607
          %1646 = vadd.xlane.f32.xlu0 %v1645
          %v1647 = vpop.xlane.xlu0 %1646
          %v1648 = vadd.f32 %v1608, %v1609
          %1649 = vadd.xlane.f32.xlu0 %v1648
          %v1650 = vpop.xlane.xlu0 %1649
          %v1651 = vadd.f32 %v1610, %v1611
          %1652 = vadd.xlane.f32.xlu0 %v1651
          %v1653 = vpop.xlane.xlu0 %1652
          %v1654 = vadd.f32 %v1612, %v1613
          %1655 = vadd.xlane.f32.xlu0 %v1654
          %v1656 = vpop.xlane.xlu0 %1655
          %v1657 = vadd.f32 %v1614, %v1615
          %1658 = vadd.xlane.f32.xlu0 %v1657
          %v1659 = vpop.xlane.xlu0 %1658
          %v1660 = vadd.f32 %v1616, %v1617
          %1661 = vadd.xlane.f32.xlu0 %v1660
          %v1662 = vpop.xlane.xlu0 %1661
          %v1663 = vadd.f32 %v1618, %v1619
          %1664 = vadd.xlane.f32.xlu0 %v1663
          %v1665 = vpop.xlane.xlu0 %1664
          %v1666 = vadd.f32 %v1620, %v1621
          %1667 = vadd.xlane.f32.xlu0 %v1666
          %v1668 = vpop.xlane.xlu0 %1667
          %v1669 = vadd.f32 %v1622, %v1623
          %1670 = vadd.xlane.f32.xlu0 %v1669
          %v1671 = vpop.xlane.xlu0 %1670
          %v1672 = vmul.f32 %v1626, 0.00390625
          %v1673 = vmul.f32 %v1629, 0.00390625
          %v1674 = vmul.f32 %v1632, 0.00390625
          %v1675 = vmul.f32 %v1635, 0.00390625
          %v1676 = vmul.f32 %v1638, 0.00390625
          %v1677 = vmul.f32 %v1641, 0.00390625
          %v1678 = vmul.f32 %v1644, 0.00390625
          %v1679 = vmul.f32 %v1647, 0.00390625
          %v1680 = vmul.f32 %v1650, 0.00390625
          %v1681 = vmul.f32 %v1653, 0.00390625
          %v1682 = vmul.f32 %v1656, 0.00390625
          %v1683 = vmul.f32 %v1659, 0.00390625
          %v1684 = vmul.f32 %v1662, 0.00390625
          %v1685 = vmul.f32 %v1665, 0.00390625
          %v1686 = vmul.f32 %v1668, 0.00390625
          %v1687 = vmul.f32 %v1671, 0.00390625
          %v1688 = vsub.f32 %v1592, %v1672
          %v1689 = vsub.f32 %v1593, %v1672
          %v1690 = vsub.f32 %v1594, %v1673
          %v1691 = vsub.f32 %v1595, %v1673
          %v1692 = vsub.f32 %v1596, %v1674
          %v1693 = vsub.f32 %v1597, %v1674
          %v1694 = vsub.f32 %v1598, %v1675
          %v1695 = vsub.f32 %v1599, %v1675
          %v1696 = vsub.f32 %v1600, %v1676
          %v1697 = vsub.f32 %v1601, %v1676
          %v1698 = vsub.f32 %v1602, %v1677
          %v1699 = vsub.f32 %v1603, %v1677
          %v1700 = vsub.f32 %v1604, %v1678
          %v1701 = vsub.f32 %v1605, %v1678
          %v1702 = vsub.f32 %v1606, %v1679
          %v1703 = vsub.f32 %v1607, %v1679
          %v1704 = vsub.f32 %v1608, %v1680
          %v1705 = vsub.f32 %v1609, %v1680
          %v1706 = vsub.f32 %v1610, %v1681
          %v1707 = vsub.f32 %v1611, %v1681
          %v1708 = vsub.f32 %v1612, %v1682
          %v1709 = vsub.f32 %v1613, %v1682
          %v1710 = vsub.f32 %v1614, %v1683
          %v1711 = vsub.f32 %v1615, %v1683
          %v1712 = vsub.f32 %v1616, %v1684
          %v1713 = vsub.f32 %v1617, %v1684
          %v1714 = vsub.f32 %v1618, %v1685
          %v1715 = vsub.f32 %v1619, %v1685
          %v1716 = vsub.f32 %v1620, %v1686
          %v1717 = vsub.f32 %v1621, %v1686
          %v1718 = vsub.f32 %v1622, %v1687
          %v1719 = vsub.f32 %v1623, %v1687
          %v1720 = vmul.f32 %v1688, %v1688
          %v1721 = vmul.f32 %v1689, %v1689
          %v1722 = vmul.f32 %v1690, %v1690
          %v1723 = vmul.f32 %v1691, %v1691
          %v1724 = vmul.f32 %v1692, %v1692
          %v1725 = vmul.f32 %v1693, %v1693
          %v1726 = vmul.f32 %v1694, %v1694
          %v1727 = vmul.f32 %v1695, %v1695
          %v1728 = vmul.f32 %v1696, %v1696
          %v1729 = vmul.f32 %v1697, %v1697
          %v1730 = vmul.f32 %v1698, %v1698
          %v1731 = vmul.f32 %v1699, %v1699
          %v1732 = vmul.f32 %v1700, %v1700
          %v1733 = vmul.f32 %v1701, %v1701
          %v1734 = vmul.f32 %v1702, %v1702
          %v1735 = vmul.f32 %v1703, %v1703
          %v1736 = vmul.f32 %v1704, %v1704
          %v1737 = vmul.f32 %v1705, %v1705
          %v1738 = vmul.f32 %v1706, %v1706
          %v1739 = vmul.f32 %v1707, %v1707
          %v1740 = vmul.f32 %v1708, %v1708
          %v1741 = vmul.f32 %v1709, %v1709
          %v1742 = vmul.f32 %v1710, %v1710
          %v1743 = vmul.f32 %v1711, %v1711
          %v1744 = vmul.f32 %v1712, %v1712
          %v1745 = vmul.f32 %v1713, %v1713
          %v1746 = vmul.f32 %v1714, %v1714
          %v1747 = vmul.f32 %v1715, %v1715
          %v1748 = vmul.f32 %v1716, %v1716
          %v1749 = vmul.f32 %v1717, %v1717
          %v1750 = vmul.f32 %v1718, %v1718
          %v1751 = vmul.f32 %v1719, %v1719
          %v1752 = vadd.f32 %v1720, %v1721
          %1753 = vadd.xlane.f32.xlu0 %v1752
          %v1754 = vpop.xlane.xlu0 %1753
          %v1755 = vadd.f32 %v1722, %v1723
          %1756 = vadd.xlane.f32.xlu0 %v1755
          %v1757 = vpop.xlane.xlu0 %1756
          %v1758 = vadd.f32 %v1724, %v1725
          %1759 = vadd.xlane.f32.xlu0 %v1758
          %v1760 = vpop.xlane.xlu0 %1759
          %v1761 = vadd.f32 %v1726, %v1727
          %1762 = vadd.xlane.f32.xlu0 %v1761
          %v1763 = vpop.xlane.xlu0 %1762
          %v1764 = vadd.f32 %v1728, %v1729
          %1765 = vadd.xlane.f32.xlu0 %v1764
          %v1766 = vpop.xlane.xlu0 %1765
          %v1767 = vadd.f32 %v1730, %v1731
          %1768 = vadd.xlane.f32.xlu0 %v1767
          %v1769 = vpop.xlane.xlu0 %1768
          %v1770 = vadd.f32 %v1732, %v1733
          %1771 = vadd.xlane.f32.xlu0 %v1770
          %v1772 = vpop.xlane.xlu0 %1771
          %v1773 = vadd.f32 %v1734, %v1735
          %1774 = vadd.xlane.f32.xlu0 %v1773
          %v1775 = vpop.xlane.xlu0 %1774
          %v1776 = vadd.f32 %v1736, %v1737
          %1777 = vadd.xlane.f32.xlu0 %v1776
          %v1778 = vpop.xlane.xlu0 %1777
          %v1779 = vadd.f32 %v1738, %v1739
          %1780 = vadd.xlane.f32.xlu0 %v1779
          %v1781 = vpop.xlane.xlu0 %1780
          %v1782 = vadd.f32 %v1740, %v1741
          %1783 = vadd.xlane.f32.xlu0 %v1782
          %v1784 = vpop.xlane.xlu0 %1783
          %v1785 = vadd.f32 %v1742, %v1743
          %1786 = vadd.xlane.f32.xlu0 %v1785
          %v1787 = vpop.xlane.xlu0 %1786
          %v1788 = vadd.f32 %v1744, %v1745
          %1789 = vadd.xlane.f32.xlu0 %v1788
          %v1790 = vpop.xlane.xlu0 %1789
          %v1791 = vadd.f32 %v1746, %v1747
          %1792 = vadd.xlane.f32.xlu0 %v1791
          %v1793 = vpop.xlane.xlu0 %1792
          %v1794 = vadd.f32 %v1748, %v1749
          %1795 = vadd.xlane.f32.xlu0 %v1794
          %v1796 = vpop.xlane.xlu0 %1795
          %v1797 = vadd.f32 %v1750, %v1751
          %1798 = vadd.xlane.f32.xlu0 %v1797
          %v1799 = vpop.xlane.xlu0 %1798
          %v1800 = vmul.f32 %v1720, %v1688
          %v1801 = vmul.f32 %v1721, %v1689
          %v1802 = vmul.f32 %v1722, %v1690
          %v1803 = vmul.f32 %v1723, %v1691
          %v1804 = vmul.f32 %v1724, %v1692
          %v1805 = vmul.f32 %v1725, %v1693
          %v1806 = vmul.f32 %v1726, %v1694
          %v1807 = vmul.f32 %v1727, %v1695
          %v1808 = vmul.f32 %v1728, %v1696
          %v1809 = vmul.f32 %v1729, %v1697
          %v1810 = vmul.f32 %v1730, %v1698
          %v1811 = vmul.f32 %v1731, %v1699
          %v1812 = vmul.f32 %v1732, %v1700
          %v1813 = vmul.f32 %v1733, %v1701
          %v1814 = vmul.f32 %v1734, %v1702
          %v1815 = vmul.f32 %v1735, %v1703
          %v1816 = vmul.f32 %v1736, %v1704
          %v1817 = vmul.f32 %v1737, %v1705
          %v1818 = vmul.f32 %v1738, %v1706
          %v1819 = vmul.f32 %v1739, %v1707
          %v1820 = vmul.f32 %v1740, %v1708
          %v1821 = vmul.f32 %v1741, %v1709
          %v1822 = vmul.f32 %v1742, %v1710
          %v1823 = vmul.f32 %v1743, %v1711
          %v1824 = vmul.f32 %v1744, %v1712
          %v1825 = vmul.f32 %v1745, %v1713
          %v1826 = vmul.f32 %v1746, %v1714
          %v1827 = vmul.f32 %v1747, %v1715
          %v1828 = vmul.f32 %v1748, %v1716
          %v1829 = vmul.f32 %v1749, %v1717
          %v1830 = vmul.f32 %v1750, %v1718
          %v1831 = vmul.f32 %v1751, %v1719
          %v1832 = vadd.f32 %v1800, %v1801
          %1833 = vadd.xlane.f32.xlu0 %v1832
          %v1834 = vpop.xlane.xlu0 %1833
          %v1835 = vadd.f32 %v1802, %v1803
          %1836 = vadd.xlane.f32.xlu0 %v1835
          %v1837 = vpop.xlane.xlu0 %1836
          %v1838 = vadd.f32 %v1804, %v1805
          %1839 = vadd.xlane.f32.xlu0 %v1838
          %v1840 = vpop.xlane.xlu0 %1839
          %v1841 = vadd.f32 %v1806, %v1807
          %1842 = vadd.xlane.f32.xlu0 %v1841
          %v1843 = vpop.xlane.xlu0 %1842
          %v1844 = vadd.f32 %v1808, %v1809
          %1845 = vadd.xlane.f32.xlu0 %v1844
          %v1846 = vpop.xlane.xlu0 %1845
          %v1847 = vadd.f32 %v1810, %v1811
          %1848 = vadd.xlane.f32.xlu0 %v1847
          %v1849 = vpop.xlane.xlu0 %1848
          %v1850 = vadd.f32 %v1812, %v1813
          %1851 = vadd.xlane.f32.xlu0 %v1850
          %v1852 = vpop.xlane.xlu0 %1851
          %v1853 = vadd.f32 %v1814, %v1815
          %1854 = vadd.xlane.f32.xlu0 %v1853
          %v1855 = vpop.xlane.xlu0 %1854
          %v1856 = vadd.f32 %v1816, %v1817
          %1857 = vadd.xlane.f32.xlu0 %v1856
          %v1858 = vpop.xlane.xlu0 %1857
          %v1859 = vadd.f32 %v1818, %v1819
          %1860 = vadd.xlane.f32.xlu0 %v1859
          %v1861 = vpop.xlane.xlu0 %1860
          %v1862 = vadd.f32 %v1820, %v1821
          %1863 = vadd.xlane.f32.xlu0 %v1862
          %v1864 = vpop.xlane.xlu0 %1863
          %v1865 = vadd.f32 %v1822, %v1823
          %1866 = vadd.xlane.f32.xlu0 %v1865
          %v1867 = vpop.xlane.xlu0 %1866
          %v1868 = vadd.f32 %v1824, %v1825
          %1869 = vadd.xlane.f32.xlu0 %v1868
          %v1870 = vpop.xlane.xlu0 %1869
          %v1871 = vadd.f32 %v1826, %v1827
          %1872 = vadd.xlane.f32.xlu0 %v1871
          %v1873 = vpop.xlane.xlu0 %1872
          %v1874 = vadd.f32 %v1828, %v1829
          %1875 = vadd.xlane.f32.xlu0 %v1874
          %v1876 = vpop.xlane.xlu0 %1875
          %v1877 = vadd.f32 %v1830, %v1831
          %1878 = vadd.xlane.f32.xlu0 %v1877
          %v1879 = vpop.xlane.xlu0 %1878
          %v1880 = vmul.f32 %v1720, %v1720
          %v1881 = vmul.f32 %v1721, %v1721
          %v1882 = vmul.f32 %v1722, %v1722
          %v1883 = vmul.f32 %v1723, %v1723
          %v1884 = vmul.f32 %v1724, %v1724
          %v1885 = vmul.f32 %v1725, %v1725
          %v1886 = vmul.f32 %v1726, %v1726
          %v1887 = vmul.f32 %v1727, %v1727
          %v1888 = vmul.f32 %v1728, %v1728
          %v1889 = vmul.f32 %v1729, %v1729
          %v1890 = vmul.f32 %v1730, %v1730
          %v1891 = vmul.f32 %v1731, %v1731
          %v1892 = vmul.f32 %v1732, %v1732
          %v1893 = vmul.f32 %v1733, %v1733
          %v1894 = vmul.f32 %v1734, %v1734
          %v1895 = vmul.f32 %v1735, %v1735
          %v1896 = vmul.f32 %v1736, %v1736
          %v1897 = vmul.f32 %v1737, %v1737
          %v1898 = vmul.f32 %v1738, %v1738
          %v1899 = vmul.f32 %v1739, %v1739
          %v1900 = vmul.f32 %v1740, %v1740
          %v1901 = vmul.f32 %v1741, %v1741
          %v1902 = vmul.f32 %v1742, %v1742
          %v1903 = vmul.f32 %v1743, %v1743
          %v1904 = vmul.f32 %v1744, %v1744
          %v1905 = vmul.f32 %v1745, %v1745
          %v1906 = vmul.f32 %v1746, %v1746
          %v1907 = vmul.f32 %v1747, %v1747
          %v1908 = vmul.f32 %v1748, %v1748
          %v1909 = vmul.f32 %v1749, %v1749
          %v1910 = vmul.f32 %v1750, %v1750
          %v1911 = vmul.f32 %v1751, %v1751
          %v1912 = vadd.f32 %v1880, %v1881
          %1913 = vadd.xlane.f32.xlu0 %v1912
          %v1914 = vpop.xlane.xlu0 %1913
          %v1915 = vadd.f32 %v1882, %v1883
          %1916 = vadd.xlane.f32.xlu0 %v1915
          %v1917 = vpop.xlane.xlu0 %1916
          %v1918 = vadd.f32 %v1884, %v1885
          %1919 = vadd.xlane.f32.xlu0 %v1918
          %v1920 = vpop.xlane.xlu0 %1919
          %v1921 = vadd.f32 %v1886, %v1887
          %1922 = vadd.xlane.f32.xlu0 %v1921
          %v1923 = vpop.xlane.xlu0 %1922
          %v1924 = vadd.f32 %v1888, %v1889
          %1925 = vadd.xlane.f32.xlu0 %v1924
          %v1926 = vpop.xlane.xlu0 %1925
          %v1927 = vadd.f32 %v1890, %v1891
          %1928 = vadd.xlane.f32.xlu0 %v1927
          %v1929 = vpop.xlane.xlu0 %1928
          %v1930 = vadd.f32 %v1892, %v1893
          %1931 = vadd.xlane.f32.xlu0 %v1930
          %v1932 = vpop.xlane.xlu0 %1931
          %v1933 = vadd.f32 %v1894, %v1895
          %1934 = vadd.xlane.f32.xlu0 %v1933
          %v1935 = vpop.xlane.xlu0 %1934
          %v1936 = vadd.f32 %v1896, %v1897
          %1937 = vadd.xlane.f32.xlu0 %v1936
          %v1938 = vpop.xlane.xlu0 %1937
          %v1939 = vadd.f32 %v1898, %v1899
          %1940 = vadd.xlane.f32.xlu0 %v1939
          %v1941 = vpop.xlane.xlu0 %1940
          %v1942 = vadd.f32 %v1900, %v1901
          %1943 = vadd.xlane.f32.xlu0 %v1942
          %v1944 = vpop.xlane.xlu0 %1943
          %v1945 = vadd.f32 %v1902, %v1903
          %1946 = vadd.xlane.f32.xlu0 %v1945
          %v1947 = vpop.xlane.xlu0 %1946
          %v1948 = vadd.f32 %v1904, %v1905
          %1949 = vadd.xlane.f32.xlu0 %v1948
          %v1950 = vpop.xlane.xlu0 %1949
          %v1951 = vadd.f32 %v1906, %v1907
          %1952 = vadd.xlane.f32.xlu0 %v1951
          %v1953 = vpop.xlane.xlu0 %1952
          %v1954 = vadd.f32 %v1908, %v1909
          %1955 = vadd.xlane.f32.xlu0 %v1954
          %v1956 = vpop.xlane.xlu0 %1955
          %v1957 = vadd.f32 %v1910, %v1911
          %1958 = vadd.xlane.f32.xlu0 %v1957
          %v1959 = vpop.xlane.xlu0 %1958
          %v1960 = vmul.f32 %v1754, 0.003921569
          %v1961 = vmul.f32 %v1757, 0.003921569
          %v1962 = vmul.f32 %v1760, 0.003921569
          %v1963 = vmul.f32 %v1763, 0.003921569
          %v1964 = vmul.f32 %v1766, 0.003921569
          %v1965 = vmul.f32 %v1769, 0.003921569
          %v1966 = vmul.f32 %v1772, 0.003921569
          %v1967 = vmul.f32 %v1775, 0.003921569
          %v1968 = vmul.f32 %v1778, 0.003921569
          %v1969 = vmul.f32 %v1781, 0.003921569
          %v1970 = vmul.f32 %v1784, 0.003921569
          %v1971 = vmul.f32 %v1787, 0.003921569
          %v1972 = vmul.f32 %v1790, 0.003921569
          %v1973 = vmul.f32 %v1793, 0.003921569
          %v1974 = vmul.f32 %v1796, 0.003921569
          %v1975 = vmul.f32 %v1799, 0.003921569
          %v1976 = vrsqrt.pop %v1960
          %v1977 = vmul.f32 %v1960, %v1976
          %vm1978 = vcmp.eq.f32.partialorder %v1960, inf
          %v1979 = vsel %vm1978, %v1960, %v1977
          %vm1980 = vcmp.eq.f32.partialorder %v1960, 0.0
          %v1981 = vand.u32 %v1960, 2147483648
          %v1982 = vsel %vm1980, %v1981, %v1979
          %v1983 = vrsqrt.pop %v1961
          %v1984 = vmul.f32 %v1961, %v1983
          %vm1985 = vcmp.eq.f32.partialorder %v1961, inf
          %v1986 = vsel %vm1985, %v1961, %v1984
          %vm1987 = vcmp.eq.f32.partialorder %v1961, 0.0
          %v1988 = vand.u32 %v1961, 2147483648
          %v1989 = vsel %vm1987, %v1988, %v1986
          %v1990 = vrsqrt.pop %v1962
          %v1991 = vmul.f32 %v1962, %v1990
          %vm1992 = vcmp.eq.f32.partialorder %v1962, inf
          %v1993 = vsel %vm1992, %v1962, %v1991
          %vm1994 = vcmp.eq.f32.partialorder %v1962, 0.0
          %v1995 = vand.u32 %v1962, 2147483648
          %v1996 = vsel %vm1994, %v1995, %v1993
          %v1997 = vrsqrt.pop %v1963
          %v1998 = vmul.f32 %v1963, %v1997
          %vm1999 = vcmp.eq.f32.partialorder %v1963, inf
          %v2000 = vsel %vm1999, %v1963, %v1998
          %vm2001 = vcmp.eq.f32.partialorder %v1963, 0.0
          %v2002 = vand.u32 %v1963, 2147483648
          %v2003 = vsel %vm2001, %v2002, %v2000
          %v2004 = vrsqrt.pop %v1964
          %v2005 = vmul.f32 %v1964, %v2004
          %vm2006 = vcmp.eq.f32.partialorder %v1964, inf
          %v2007 = vsel %vm2006, %v1964, %v2005
          %vm2008 = vcmp.eq.f32.partialorder %v1964, 0.0
          %v2009 = vand.u32 %v1964, 2147483648
          %v2010 = vsel %vm2008, %v2009, %v2007
          %v2011 = vrsqrt.pop %v1965
          %v2012 = vmul.f32 %v1965, %v2011
          %vm2013 = vcmp.eq.f32.partialorder %v1965, inf
          %v2014 = vsel %vm2013, %v1965, %v2012
          %vm2015 = vcmp.eq.f32.partialorder %v1965, 0.0
          %v2016 = vand.u32 %v1965, 2147483648
          %v2017 = vsel %vm2015, %v2016, %v2014
          %v2018 = vrsqrt.pop %v1966
          %v2019 = vmul.f32 %v1966, %v2018
          %vm2020 = vcmp.eq.f32.partialorder %v1966, inf
          %v2021 = vsel %vm2020, %v1966, %v2019
          %vm2022 = vcmp.eq.f32.partialorder %v1966, 0.0
          %v2023 = vand.u32 %v1966, 2147483648
          %v2024 = vsel %vm2022, %v2023, %v2021
          %v2025 = vrsqrt.pop %v1967
          %v2026 = vmul.f32 %v1967, %v2025
          %vm2027 = vcmp.eq.f32.partialorder %v1967, inf
          %v2028 = vsel %vm2027, %v1967, %v2026
          %vm2029 = vcmp.eq.f32.partialorder %v1967, 0.0
          %v2030 = vand.u32 %v1967, 2147483648
          %v2031 = vsel %vm2029, %v2030, %v2028
          %v2032 = vrsqrt.pop %v1968
          %v2033 = vmul.f32 %v1968, %v2032
          %vm2034 = vcmp.eq.f32.partialorder %v1968, inf
          %v2035 = vsel %vm2034, %v1968, %v2033
          %vm2036 = vcmp.eq.f32.partialorder %v1968, 0.0
          %v2037 = vand.u32 %v1968, 2147483648
          %v2038 = vsel %vm2036, %v2037, %v2035
          %v2039 = vrsqrt.pop %v1969
          %v2040 = vmul.f32 %v1969, %v2039
          %vm2041 = vcmp.eq.f32.partialorder %v1969, inf
          %v2042 = vsel %vm2041, %v1969, %v2040
          %vm2043 = vcmp.eq.f32.partialorder %v1969, 0.0
          %v2044 = vand.u32 %v1969, 2147483648
          %v2045 = vsel %vm2043, %v2044, %v2042
          %v2046 = vrsqrt.pop %v1970
          %v2047 = vmul.f32 %v1970, %v2046
          %vm2048 = vcmp.eq.f32.partialorder %v1970, inf
          %v2049 = vsel %vm2048, %v1970, %v2047
          %vm2050 = vcmp.eq.f32.partialorder %v1970, 0.0
          %v2051 = vand.u32 %v1970, 2147483648
          %v2052 = vsel %vm2050, %v2051, %v2049
          %v2053 = vrsqrt.pop %v1971
          %v2054 = vmul.f32 %v1971, %v2053
          %vm2055 = vcmp.eq.f32.partialorder %v1971, inf
          %v2056 = vsel %vm2055, %v1971, %v2054
          %vm2057 = vcmp.eq.f32.partialorder %v1971, 0.0
          %v2058 = vand.u32 %v1971, 2147483648
          %v2059 = vsel %vm2057, %v2058, %v2056
          %v2060 = vrsqrt.pop %v1972
          %v2061 = vmul.f32 %v1972, %v2060
          %vm2062 = vcmp.eq.f32.partialorder %v1972, inf
          %v2063 = vsel %vm2062, %v1972, %v2061
          %vm2064 = vcmp.eq.f32.partialorder %v1972, 0.0
          %v2065 = vand.u32 %v1972, 2147483648
          %v2066 = vsel %vm2064, %v2065, %v2063
          %v2067 = vrsqrt.pop %v1973
          %v2068 = vmul.f32 %v1973, %v2067
          %vm2069 = vcmp.eq.f32.partialorder %v1973, inf
          %v2070 = vsel %vm2069, %v1973, %v2068
          %vm2071 = vcmp.eq.f32.partialorder %v1973, 0.0
          %v2072 = vand.u32 %v1973, 2147483648
          %v2073 = vsel %vm2071, %v2072, %v2070
          %v2074 = vrsqrt.pop %v1974
          %v2075 = vmul.f32 %v1974, %v2074
          %vm2076 = vcmp.eq.f32.partialorder %v1974, inf
          %v2077 = vsel %vm2076, %v1974, %v2075
          %vm2078 = vcmp.eq.f32.partialorder %v1974, 0.0
          %v2079 = vand.u32 %v1974, 2147483648
          %v2080 = vsel %vm2078, %v2079, %v2077
          %v2081 = vrsqrt.pop %v1975
          %v2082 = vmul.f32 %v1975, %v2081
          %vm2083 = vcmp.eq.f32.partialorder %v1975, inf
          %v2084 = vsel %vm2083, %v1975, %v2082
          %vm2085 = vcmp.eq.f32.partialorder %v1975, 0.0
          %v2086 = vand.u32 %v1975, 2147483648
          %v2087 = vsel %vm2085, %v2086, %v2084
          %vm2088 = vcmp.gt.f32.partialorder %v1982, 0.0
          %vm2089 = vcmp.gt.f32.partialorder %v1989, 0.0
          %vm2090 = vcmp.gt.f32.partialorder %v1996, 0.0
          %vm2091 = vcmp.gt.f32.partialorder %v2003, 0.0
          %vm2092 = vcmp.gt.f32.partialorder %v2010, 0.0
          %vm2093 = vcmp.gt.f32.partialorder %v2017, 0.0
          %vm2094 = vcmp.gt.f32.partialorder %v2024, 0.0
          %vm2095 = vcmp.gt.f32.partialorder %v2031, 0.0
          %vm2096 = vcmp.gt.f32.partialorder %v2038, 0.0
          %vm2097 = vcmp.gt.f32.partialorder %v2045, 0.0
          %vm2098 = vcmp.gt.f32.partialorder %v2052, 0.0
          %vm2099 = vcmp.gt.f32.partialorder %v2059, 0.0
          %vm2100 = vcmp.gt.f32.partialorder %v2066, 0.0
          %vm2101 = vcmp.gt.f32.partialorder %v2073, 0.0
          %vm2102 = vcmp.gt.f32.partialorder %v2080, 0.0
          %vm2103 = vcmp.gt.f32.partialorder %v2087, 0.0
          %v2104 = vrcp.pop %v1982
          %v2105 = vmul.f32 1.0, %v2104
          %v2106 = vrcp.pop %v1989
          %v2107 = vmul.f32 1.0, %v2106
          %v2108 = vrcp.pop %v1996
          %v2109 = vmul.f32 1.0, %v2108
          %v2110 = vrcp.pop %v2003
          %v2111 = vmul.f32 1.0, %v2110
          %v2112 = vrcp.pop %v2010
          %v2113 = vmul.f32 1.0, %v2112
          %v2114 = vrcp.pop %v2017
          %v2115 = vmul.f32 1.0, %v2114
          %v2116 = vrcp.pop %v2024
          %v2117 = vmul.f32 1.0, %v2116
          %v2118 = vrcp.pop %v2031
          %v2119 = vmul.f32 1.0, %v2118
          %v2120 = vrcp.pop %v2038
          %v2121 = vmul.f32 1.0, %v2120
          %v2122 = vrcp.pop %v2045
          %v2123 = vmul.f32 1.0, %v2122
          %v2124 = vrcp.pop %v2052
          %v2125 = vmul.f32 1.0, %v2124
          %v2126 = vrcp.pop %v2059
          %v2127 = vmul.f32 1.0, %v2126
          %v2128 = vrcp.pop %v2066
          %v2129 = vmul.f32 1.0, %v2128
          %v2130 = vrcp.pop %v2073
          %v2131 = vmul.f32 1.0, %v2130
          %v2132 = vrcp.pop %v2080
          %v2133 = vmul.f32 1.0, %v2132
          %v2134 = vrcp.pop %v2087
          %v2135 = vmul.f32 1.0, %v2134
          %v2136 = vsel %vm2088, %v2105, 0.0
          %v2137 = vsel %vm2089, %v2107, 0.0
          %v2138 = vsel %vm2090, %v2109, 0.0
          %v2139 = vsel %vm2091, %v2111, 0.0
          %v2140 = vsel %vm2092, %v2113, 0.0
          %v2141 = vsel %vm2093, %v2115, 0.0
          %v2142 = vsel %vm2094, %v2117, 0.0
          %v2143 = vsel %vm2095, %v2119, 0.0
          %v2144 = vsel %vm2096, %v2121, 0.0
          %v2145 = vsel %vm2097, %v2123, 0.0
          %v2146 = vsel %vm2098, %v2125, 0.0
          %v2147 = vsel %vm2099, %v2127, 0.0
          %v2148 = vsel %vm2100, %v2129, 0.0
          %v2149 = vsel %vm2101, %v2131, 0.0
          %v2150 = vsel %vm2102, %v2133, 0.0
          %v2151 = vsel %vm2103, %v2135, 0.0
          %v2152 = vmul.f32 %v2136, %v2136
          %v2153 = vmul.f32 %v2137, %v2137
          %v2154 = vmul.f32 %v2138, %v2138
          %v2155 = vmul.f32 %v2139, %v2139
          %v2156 = vmul.f32 %v2140, %v2140
          %v2157 = vmul.f32 %v2141, %v2141
          %v2158 = vmul.f32 %v2142, %v2142
          %v2159 = vmul.f32 %v2143, %v2143
          %v2160 = vmul.f32 %v2144, %v2144
          %v2161 = vmul.f32 %v2145, %v2145
          %v2162 = vmul.f32 %v2146, %v2146
          %v2163 = vmul.f32 %v2147, %v2147
          %v2164 = vmul.f32 %v2148, %v2148
          %v2165 = vmul.f32 %v2149, %v2149
          %v2166 = vmul.f32 %v2150, %v2150
          %v2167 = vmul.f32 %v2151, %v2151
          %v2168 = vmul.f32 %v1834, 0.00390625
          %v2169 = vmul.f32 %v1837, 0.00390625
          %v2170 = vmul.f32 %v1840, 0.00390625
          %v2171 = vmul.f32 %v1843, 0.00390625
          %v2172 = vmul.f32 %v1846, 0.00390625
          %v2173 = vmul.f32 %v1849, 0.00390625
          %v2174 = vmul.f32 %v1852, 0.00390625
          %v2175 = vmul.f32 %v1855, 0.00390625
          %v2176 = vmul.f32 %v1858, 0.00390625
          %v2177 = vmul.f32 %v1861, 0.00390625
          %v2178 = vmul.f32 %v1864, 0.00390625
          %v2179 = vmul.f32 %v1867, 0.00390625
          %v2180 = vmul.f32 %v1870, 0.00390625
          %v2181 = vmul.f32 %v1873, 0.00390625
          %v2182 = vmul.f32 %v1876, 0.00390625
          %v2183 = vmul.f32 %v1879, 0.00390625
          %v2184 = vmul.f32 %v2168, %v2152
          %v2185 = vmul.f32 %v2169, %v2153
          %v2186 = vmul.f32 %v2170, %v2154
          %v2187 = vmul.f32 %v2171, %v2155
          %v2188 = vmul.f32 %v2172, %v2156
          %v2189 = vmul.f32 %v2173, %v2157
          %v2190 = vmul.f32 %v2174, %v2158
          %v2191 = vmul.f32 %v2175, %v2159
          %v2192 = vmul.f32 %v2176, %v2160
          %v2193 = vmul.f32 %v2177, %v2161
          %v2194 = vmul.f32 %v2178, %v2162
          %v2195 = vmul.f32 %v2179, %v2163
          %v2196 = vmul.f32 %v2180, %v2164
          %v2197 = vmul.f32 %v2181, %v2165
          %v2198 = vmul.f32 %v2182, %v2166
          %v2199 = vmul.f32 %v2183, %v2167
          %v2200 = vmul.f32 %v2184, %v2136
          %v2201 = vmul.f32 %v2185, %v2137
          %v2202 = vmul.f32 %v2186, %v2138
          %v2203 = vmul.f32 %v2187, %v2139
          %v2204 = vmul.f32 %v2188, %v2140
          %v2205 = vmul.f32 %v2189, %v2141
          %v2206 = vmul.f32 %v2190, %v2142
          %v2207 = vmul.f32 %v2191, %v2143
          %v2208 = vmul.f32 %v2192, %v2144
          %v2209 = vmul.f32 %v2193, %v2145
          %v2210 = vmul.f32 %v2194, %v2146
          %v2211 = vmul.f32 %v2195, %v2147
          %v2212 = vmul.f32 %v2196, %v2148
          %v2213 = vmul.f32 %v2197, %v2149
          %v2214 = vmul.f32 %v2198, %v2150
          %v2215 = vmul.f32 %v2199, %v2151
          %v2216 = vmul.f32 %v1914, 0.00390625
          %v2217 = vmul.f32 %v1917, 0.00390625
          %v2218 = vmul.f32 %v1920, 0.00390625
          %v2219 = vmul.f32 %v1923, 0.00390625
          %v2220 = vmul.f32 %v1926, 0.00390625
          %v2221 = vmul.f32 %v1929, 0.00390625
          %v2222 = vmul.f32 %v1932, 0.00390625
          %v2223 = vmul.f32 %v1935, 0.00390625
          %v2224 = vmul.f32 %v1938, 0.00390625
          %v2225 = vmul.f32 %v1941, 0.00390625
          %v2226 = vmul.f32 %v1944, 0.00390625
          %v2227 = vmul.f32 %v1947, 0.00390625
          %v2228 = vmul.f32 %v1950, 0.00390625
          %v2229 = vmul.f32 %v1953, 0.00390625
          %v2230 = vmul.f32 %v1956, 0.00390625
          %v2231 = vmul.f32 %v1959, 0.00390625
          %v2232 = vmul.f32 %v2216, %v2152
          %v2233 = vmul.f32 %v2217, %v2153
          %v2234 = vmul.f32 %v2218, %v2154
          %v2235 = vmul.f32 %v2219, %v2155
          %v2236 = vmul.f32 %v2220, %v2156
          %v2237 = vmul.f32 %v2221, %v2157
          %v2238 = vmul.f32 %v2222, %v2158
          %v2239 = vmul.f32 %v2223, %v2159
          %v2240 = vmul.f32 %v2224, %v2160
          %v2241 = vmul.f32 %v2225, %v2161
          %v2242 = vmul.f32 %v2226, %v2162
          %v2243 = vmul.f32 %v2227, %v2163
          %v2244 = vmul.f32 %v2228, %v2164
          %v2245 = vmul.f32 %v2229, %v2165
          %v2246 = vmul.f32 %v2230, %v2166
          %v2247 = vmul.f32 %v2231, %v2167
          %v2248 = vmul.f32 %v2232, %v2152
          %v2249 = vmul.f32 %v2233, %v2153
          %v2250 = vmul.f32 %v2234, %v2154
          %v2251 = vmul.f32 %v2235, %v2155
          %v2252 = vmul.f32 %v2236, %v2156
          %v2253 = vmul.f32 %v2237, %v2157
          %v2254 = vmul.f32 %v2238, %v2158
          %v2255 = vmul.f32 %v2239, %v2159
          %v2256 = vmul.f32 %v2240, %v2160
          %v2257 = vmul.f32 %v2241, %v2161
          %v2258 = vmul.f32 %v2242, %v2162
          %v2259 = vmul.f32 %v2243, %v2163
          %v2260 = vmul.f32 %v2244, %v2164
          %v2261 = vmul.f32 %v2245, %v2165
          %v2262 = vmul.f32 %v2246, %v2166
          %v2263 = vmul.f32 %v2247, %v2167
          %v2264 = vsub.f32 %v2248, 3.0
          %v2265 = vsub.f32 %v2249, 3.0
          %v2266 = vsub.f32 %v2250, 3.0
          %v2267 = vsub.f32 %v2251, 3.0
          %v2268 = vsub.f32 %v2252, 3.0
          %v2269 = vsub.f32 %v2253, 3.0
          %v2270 = vsub.f32 %v2254, 3.0
          %v2271 = vsub.f32 %v2255, 3.0
          %v2272 = vsub.f32 %v2256, 3.0
          %v2273 = vsub.f32 %v2257, 3.0
          %v2274 = vsub.f32 %v2258, 3.0
          %v2275 = vsub.f32 %v2259, 3.0
          %v2276 = vsub.f32 %v2260, 3.0
          %v2277 = vsub.f32 %v2261, 3.0
          %v2278 = vsub.f32 %v2262, 3.0
          %v2279 = vsub.f32 %v2263, 3.0
          %v2280 = vmul.f32 %v1754, 0.00390625
          %v2281 = vmul.f32 %v1757, 0.00390625
          %v2282 = vmul.f32 %v1760, 0.00390625
          %v2283 = vmul.f32 %v1763, 0.00390625
          %v2284 = vmul.f32 %v1766, 0.00390625
          %v2285 = vmul.f32 %v1769, 0.00390625
          %v2286 = vmul.f32 %v1772, 0.00390625
          %v2287 = vmul.f32 %v1775, 0.00390625
          %v2288 = vmul.f32 %v1778, 0.00390625
          %v2289 = vmul.f32 %v1781, 0.00390625
          %v2290 = vmul.f32 %v1784, 0.00390625
          %v2291 = vmul.f32 %v1787, 0.00390625
          %v2292 = vmul.f32 %v1790, 0.00390625
          %v2293 = vmul.f32 %v1793, 0.00390625
          %v2294 = vmul.f32 %v1796, 0.00390625
          %v2295 = vmul.f32 %v1799, 0.00390625
          %v2296 = vmul.f32 %v1672, %v1672
          %v2297 = vmul.f32 %v1673, %v1673
          %v2298 = vmul.f32 %v1674, %v1674
          %v2299 = vmul.f32 %v1675, %v1675
          %v2300 = vmul.f32 %v1676, %v1676
          %v2301 = vmul.f32 %v1677, %v1677
          %v2302 = vmul.f32 %v1678, %v1678
          %v2303 = vmul.f32 %v1679, %v1679
          %v2304 = vmul.f32 %v1680, %v1680
          %v2305 = vmul.f32 %v1681, %v1681
          %v2306 = vmul.f32 %v1682, %v1682
          %v2307 = vmul.f32 %v1683, %v1683
          %v2308 = vmul.f32 %v1684, %v1684
          %v2309 = vmul.f32 %v1685, %v1685
          %v2310 = vmul.f32 %v1686, %v1686
          %v2311 = vmul.f32 %v1687, %v1687
          %v2312 = vadd.f32 %v2280, %v2296
          %v2313 = vadd.f32 %v2281, %v2297
          %v2314 = vadd.f32 %v2282, %v2298
          %v2315 = vadd.f32 %v2283, %v2299
          %v2316 = vadd.f32 %v2284, %v2300
          %v2317 = vadd.f32 %v2285, %v2301
          %v2318 = vadd.f32 %v2286, %v2302
          %v2319 = vadd.f32 %v2287, %v2303
          %v2320 = vadd.f32 %v2288, %v2304
          %v2321 = vadd.f32 %v2289, %v2305
          %v2322 = vadd.f32 %v2290, %v2306
          %v2323 = vadd.f32 %v2291, %v2307
          %v2324 = vadd.f32 %v2292, %v2308
          %v2325 = vadd.f32 %v2293, %v2309
          %v2326 = vadd.f32 %v2294, %v2310
          %v2327 = vadd.f32 %v2295, %v2311
          %v2328 = vrsqrt.pop %v2312
          %v2329 = vmul.f32 %v2312, %v2328
          %vm2330 = vcmp.eq.f32.partialorder %v2312, inf
          %v2331 = vsel %vm2330, %v2312, %v2329
          %vm2332 = vcmp.eq.f32.partialorder %v2312, 0.0
          %v2333 = vand.u32 %v2312, 2147483648
          %v2334 = vsel %vm2332, %v2333, %v2331
          %v2335 = vrsqrt.pop %v2313
          %v2336 = vmul.f32 %v2313, %v2335
          %vm2337 = vcmp.eq.f32.partialorder %v2313, inf
          %v2338 = vsel %vm2337, %v2313, %v2336
          %vm2339 = vcmp.eq.f32.partialorder %v2313, 0.0
          %v2340 = vand.u32 %v2313, 2147483648
          %v2341 = vsel %vm2339, %v2340, %v2338
          %v2342 = vrsqrt.pop %v2314
          %v2343 = vmul.f32 %v2314, %v2342
          %vm2344 = vcmp.eq.f32.partialorder %v2314, inf
          %v2345 = vsel %vm2344, %v2314, %v2343
          %vm2346 = vcmp.eq.f32.partialorder %v2314, 0.0
          %v2347 = vand.u32 %v2314, 2147483648
          %v2348 = vsel %vm2346, %v2347, %v2345
          %v2349 = vrsqrt.pop %v2315
          %v2350 = vmul.f32 %v2315, %v2349
          %vm2351 = vcmp.eq.f32.partialorder %v2315, inf
          %v2352 = vsel %vm2351, %v2315, %v2350
          %vm2353 = vcmp.eq.f32.partialorder %v2315, 0.0
          %v2354 = vand.u32 %v2315, 2147483648
          %v2355 = vsel %vm2353, %v2354, %v2352
          %v2356 = vrsqrt.pop %v2316
          %v2357 = vmul.f32 %v2316, %v2356
          %vm2358 = vcmp.eq.f32.partialorder %v2316, inf
          %v2359 = vsel %vm2358, %v2316, %v2357
          %vm2360 = vcmp.eq.f32.partialorder %v2316, 0.0
          %v2361 = vand.u32 %v2316, 2147483648
          %v2362 = vsel %vm2360, %v2361, %v2359
          %v2363 = vrsqrt.pop %v2317
          %v2364 = vmul.f32 %v2317, %v2363
          %vm2365 = vcmp.eq.f32.partialorder %v2317, inf
          %v2366 = vsel %vm2365, %v2317, %v2364
          %vm2367 = vcmp.eq.f32.partialorder %v2317, 0.0
          %v2368 = vand.u32 %v2317, 2147483648
          %v2369 = vsel %vm2367, %v2368, %v2366
          %v2370 = vrsqrt.pop %v2318
          %v2371 = vmul.f32 %v2318, %v2370
          %vm2372 = vcmp.eq.f32.partialorder %v2318, inf
          %v2373 = vsel %vm2372, %v2318, %v2371
          %vm2374 = vcmp.eq.f32.partialorder %v2318, 0.0
          %v2375 = vand.u32 %v2318, 2147483648
          %v2376 = vsel %vm2374, %v2375, %v2373
          %v2377 = vrsqrt.pop %v2319
          %v2378 = vmul.f32 %v2319, %v2377
          %vm2379 = vcmp.eq.f32.partialorder %v2319, inf
          %v2380 = vsel %vm2379, %v2319, %v2378
          %vm2381 = vcmp.eq.f32.partialorder %v2319, 0.0
          %v2382 = vand.u32 %v2319, 2147483648
          %v2383 = vsel %vm2381, %v2382, %v2380
          %v2384 = vrsqrt.pop %v2320
          %v2385 = vmul.f32 %v2320, %v2384
          %vm2386 = vcmp.eq.f32.partialorder %v2320, inf
          %v2387 = vsel %vm2386, %v2320, %v2385
          %vm2388 = vcmp.eq.f32.partialorder %v2320, 0.0
          %v2389 = vand.u32 %v2320, 2147483648
          %v2390 = vsel %vm2388, %v2389, %v2387
          %v2391 = vrsqrt.pop %v2321
          %v2392 = vmul.f32 %v2321, %v2391
          %vm2393 = vcmp.eq.f32.partialorder %v2321, inf
          %v2394 = vsel %vm2393, %v2321, %v2392
          %vm2395 = vcmp.eq.f32.partialorder %v2321, 0.0
          %v2396 = vand.u32 %v2321, 2147483648
          %v2397 = vsel %vm2395, %v2396, %v2394
          %v2398 = vrsqrt.pop %v2322
          %v2399 = vmul.f32 %v2322, %v2398
          %vm2400 = vcmp.eq.f32.partialorder %v2322, inf
          %v2401 = vsel %vm2400, %v2322, %v2399
          %vm2402 = vcmp.eq.f32.partialorder %v2322, 0.0
          %v2403 = vand.u32 %v2322, 2147483648
          %v2404 = vsel %vm2402, %v2403, %v2401
          %v2405 = vrsqrt.pop %v2323
          %v2406 = vmul.f32 %v2323, %v2405
          %vm2407 = vcmp.eq.f32.partialorder %v2323, inf
          %v2408 = vsel %vm2407, %v2323, %v2406
          %vm2409 = vcmp.eq.f32.partialorder %v2323, 0.0
          %v2410 = vand.u32 %v2323, 2147483648
          %v2411 = vsel %vm2409, %v2410, %v2408
          %v2412 = vrsqrt.pop %v2324
          %v2413 = vmul.f32 %v2324, %v2412
          %vm2414 = vcmp.eq.f32.partialorder %v2324, inf
          %v2415 = vsel %vm2414, %v2324, %v2413
          %vm2416 = vcmp.eq.f32.partialorder %v2324, 0.0
          %v2417 = vand.u32 %v2324, 2147483648
          %v2418 = vsel %vm2416, %v2417, %v2415
          %v2419 = vrsqrt.pop %v2325
          %v2420 = vmul.f32 %v2325, %v2419
          %vm2421 = vcmp.eq.f32.partialorder %v2325, inf
          %v2422 = vsel %vm2421, %v2325, %v2420
          %vm2423 = vcmp.eq.f32.partialorder %v2325, 0.0
          %v2424 = vand.u32 %v2325, 2147483648
          %v2425 = vsel %vm2423, %v2424, %v2422
          %v2426 = vrsqrt.pop %v2326
          %v2427 = vmul.f32 %v2326, %v2426
          %vm2428 = vcmp.eq.f32.partialorder %v2326, inf
          %v2429 = vsel %vm2428, %v2326, %v2427
          %vm2430 = vcmp.eq.f32.partialorder %v2326, 0.0
          %v2431 = vand.u32 %v2326, 2147483648
          %v2432 = vsel %vm2430, %v2431, %v2429
          %v2433 = vrsqrt.pop %v2327
          %v2434 = vmul.f32 %v2327, %v2433
          %vm2435 = vcmp.eq.f32.partialorder %v2327, inf
          %v2436 = vsel %vm2435, %v2327, %v2434
          %vm2437 = vcmp.eq.f32.partialorder %v2327, 0.0
          %v2438 = vand.u32 %v2327, 2147483648
          %v2439 = vsel %vm2437, %v2438, %v2436
          %v2440 = vmul.f32 %v1960, 4.0
          %v2441 = vmul.f32 %v1961, 4.0
          %v2442 = vmul.f32 %v1962, 4.0
          %v2443 = vmul.f32 %v1963, 4.0
          %v2444 = vmul.f32 %v1964, 4.0
          %v2445 = vmul.f32 %v1965, 4.0
          %v2446 = vmul.f32 %v1966, 4.0
          %v2447 = vmul.f32 %v1967, 4.0
          %v2448 = vmul.f32 %v1968, 4.0
          %v2449 = vmul.f32 %v1969, 4.0
          %v2450 = vmul.f32 %v1970, 4.0
          %v2451 = vmul.f32 %v1971, 4.0
          %v2452 = vmul.f32 %v1972, 4.0
          %v2453 = vmul.f32 %v1973, 4.0
          %v2454 = vmul.f32 %v1974, 4.0
          %v2455 = vmul.f32 %v1975, 4.0
          %vm2456 = vcmp.gt.f32.partialorder %v1720, %v2440
          %vm2457 = vcmp.gt.f32.partialorder %v1721, %v2440
          %vm2458 = vcmp.gt.f32.partialorder %v1722, %v2441
          %vm2459 = vcmp.gt.f32.partialorder %v1723, %v2441
          %vm2460 = vcmp.gt.f32.partialorder %v1724, %v2442
          %vm2461 = vcmp.gt.f32.partialorder %v1725, %v2442
          %vm2462 = vcmp.gt.f32.partialorder %v1726, %v2443
          %vm2463 = vcmp.gt.f32.partialorder %v1727, %v2443
          %vm2464 = vcmp.gt.f32.partialorder %v1728, %v2444
          %vm2465 = vcmp.gt.f32.partialorder %v1729, %v2444
          %vm2466 = vcmp.gt.f32.partialorder %v1730, %v2445
          %vm2467 = vcmp.gt.f32.partialorder %v1731, %v2445
          %vm2468 = vcmp.gt.f32.partialorder %v1732, %v2446
          %vm2469 = vcmp.gt.f32.partialorder %v1733, %v2446
          %vm2470 = vcmp.gt.f32.partialorder %v1734, %v2447
          %vm2471 = vcmp.gt.f32.partialorder %v1735, %v2447
          %vm2472 = vcmp.gt.f32.partialorder %v1736, %v2448
          %vm2473 = vcmp.gt.f32.partialorder %v1737, %v2448
          %vm2474 = vcmp.gt.f32.partialorder %v1738, %v2449
          %vm2475 = vcmp.gt.f32.partialorder %v1739, %v2449
          %vm2476 = vcmp.gt.f32.partialorder %v1740, %v2450
          %vm2477 = vcmp.gt.f32.partialorder %v1741, %v2450
          %vm2478 = vcmp.gt.f32.partialorder %v1742, %v2451
          %vm2479 = vcmp.gt.f32.partialorder %v1743, %v2451
          %vm2480 = vcmp.gt.f32.partialorder %v1744, %v2452
          %vm2481 = vcmp.gt.f32.partialorder %v1745, %v2452
          %vm2482 = vcmp.gt.f32.partialorder %v1746, %v2453
          %vm2483 = vcmp.gt.f32.partialorder %v1747, %v2453
          %vm2484 = vcmp.gt.f32.partialorder %v1748, %v2454
          %vm2485 = vcmp.gt.f32.partialorder %v1749, %v2454
          %vm2486 = vcmp.gt.f32.partialorder %v1750, %v2455
          %vm2487 = vcmp.gt.f32.partialorder %v1751, %v2455
          %v2488 = vsel %vm2456, 1, 0
          %v2489 = vsel %vm2457, 1, 0
          %v2490 = vsel %vm2458, 1, 0
          %v2491 = vsel %vm2459, 1, 0
          %v2492 = vsel %vm2460, 1, 0
          %v2493 = vsel %vm2461, 1, 0
          %v2494 = vsel %vm2462, 1, 0
          %v2495 = vsel %vm2463, 1, 0
          %v2496 = vsel %vm2464, 1, 0
          %v2497 = vsel %vm2465, 1, 0
          %v2498 = vsel %vm2466, 1, 0
          %v2499 = vsel %vm2467, 1, 0
          %v2500 = vsel %vm2468, 1, 0
          %v2501 = vsel %vm2469, 1, 0
          %v2502 = vsel %vm2470, 1, 0
          %v2503 = vsel %vm2471, 1, 0
          %v2504 = vsel %vm2472, 1, 0
          %v2505 = vsel %vm2473, 1, 0
          %v2506 = vsel %vm2474, 1, 0
          %v2507 = vsel %vm2475, 1, 0
          %v2508 = vsel %vm2476, 1, 0
          %v2509 = vsel %vm2477, 1, 0
          %v2510 = vsel %vm2478, 1, 0
          %v2511 = vsel %vm2479, 1, 0
          %v2512 = vsel %vm2480, 1, 0
          %v2513 = vsel %vm2481, 1, 0
          %v2514 = vsel %vm2482, 1, 0
          %v2515 = vsel %vm2483, 1, 0
          %v2516 = vsel %vm2484, 1, 0
          %v2517 = vsel %vm2485, 1, 0
          %v2518 = vsel %vm2486, 1, 0
          %v2519 = vsel %vm2487, 1, 0
          %v2520 = vcvt.s32.f32 %v2488
          %v2521 = vcvt.s32.f32 %v2489
          %v2522 = vcvt.s32.f32 %v2490
          %v2523 = vcvt.s32.f32 %v2491
          %v2524 = vcvt.s32.f32 %v2492
          %v2525 = vcvt.s32.f32 %v2493
          %v2526 = vcvt.s32.f32 %v2494
          %v2527 = vcvt.s32.f32 %v2495
          %v2528 = vcvt.s32.f32 %v2496
          %v2529 = vcvt.s32.f32 %v2497
          %v2530 = vcvt.s32.f32 %v2498
          %v2531 = vcvt.s32.f32 %v2499
          %v2532 = vcvt.s32.f32 %v2500
          %v2533 = vcvt.s32.f32 %v2501
          %v2534 = vcvt.s32.f32 %v2502
          %v2535 = vcvt.s32.f32 %v2503
          %v2536 = vcvt.s32.f32 %v2504
          %v2537 = vcvt.s32.f32 %v2505
          %v2538 = vcvt.s32.f32 %v2506
          %v2539 = vcvt.s32.f32 %v2507
          %v2540 = vcvt.s32.f32 %v2508
          %v2541 = vcvt.s32.f32 %v2509
          %v2542 = vcvt.s32.f32 %v2510
          %v2543 = vcvt.s32.f32 %v2511
          %v2544 = vcvt.s32.f32 %v2512
          %v2545 = vcvt.s32.f32 %v2513
          %v2546 = vcvt.s32.f32 %v2514
          %v2547 = vcvt.s32.f32 %v2515
          %v2548 = vcvt.s32.f32 %v2516
          %v2549 = vcvt.s32.f32 %v2517
          %v2550 = vcvt.s32.f32 %v2518
          %v2551 = vcvt.s32.f32 %v2519
          %v2552 = vadd.f32 %v2520, %v2521
          %2553 = vadd.xlane.f32.xlu0 %v2552
          %v2554 = vpop.xlane.xlu0 %2553
          %v2555 = vadd.f32 %v2522, %v2523
          %2556 = vadd.xlane.f32.xlu0 %v2555
          %v2557 = vpop.xlane.xlu0 %2556
          %v2558 = vadd.f32 %v2524, %v2525
          %2559 = vadd.xlane.f32.xlu0 %v2558
          %v2560 = vpop.xlane.xlu0 %2559
          %v2561 = vadd.f32 %v2526, %v2527
          %2562 = vadd.xlane.f32.xlu0 %v2561
          %v2563 = vpop.xlane.xlu0 %2562
          %v2564 = vadd.f32 %v2528, %v2529
          %2565 = vadd.xlane.f32.xlu0 %v2564
          %v2566 = vpop.xlane.xlu0 %2565
          %v2567 = vadd.f32 %v2530, %v2531
          %2568 = vadd.xlane.f32.xlu0 %v2567
          %v2569 = vpop.xlane.xlu0 %2568
          %v2570 = vadd.f32 %v2532, %v2533
          %2571 = vadd.xlane.f32.xlu0 %v2570
          %v2572 = vpop.xlane.xlu0 %2571
          %v2573 = vadd.f32 %v2534, %v2535
          %2574 = vadd.xlane.f32.xlu0 %v2573
          %v2575 = vpop.xlane.xlu0 %2574
          %v2576 = vadd.f32 %v2536, %v2537
          %2577 = vadd.xlane.f32.xlu0 %v2576
          %v2578 = vpop.xlane.xlu0 %2577
          %v2579 = vadd.f32 %v2538, %v2539
          %2580 = vadd.xlane.f32.xlu0 %v2579
          %v2581 = vpop.xlane.xlu0 %2580
          %v2582 = vadd.f32 %v2540, %v2541
          %2583 = vadd.xlane.f32.xlu0 %v2582
          %v2584 = vpop.xlane.xlu0 %2583
          %v2585 = vadd.f32 %v2542, %v2543
          %2586 = vadd.xlane.f32.xlu0 %v2585
          %v2587 = vpop.xlane.xlu0 %2586
          %v2588 = vadd.f32 %v2544, %v2545
          %2589 = vadd.xlane.f32.xlu0 %v2588
          %v2590 = vpop.xlane.xlu0 %2589
          %v2591 = vadd.f32 %v2546, %v2547
          %2592 = vadd.xlane.f32.xlu0 %v2591
          %v2593 = vpop.xlane.xlu0 %2592
          %v2594 = vadd.f32 %v2548, %v2549
          %2595 = vadd.xlane.f32.xlu0 %v2594
          %v2596 = vpop.xlane.xlu0 %2595
          %v2597 = vadd.f32 %v2550, %v2551
          %2598 = vadd.xlane.f32.xlu0 %v2597
          %v2599 = vpop.xlane.xlu0 %2598
          %v2600 = vmul.f32 %v2554, 0.00390625
          %v2601 = vmul.f32 %v2557, 0.00390625
          %v2602 = vmul.f32 %v2560, 0.00390625
          %v2603 = vmul.f32 %v2563, 0.00390625
          %v2604 = vmul.f32 %v2566, 0.00390625
          %v2605 = vmul.f32 %v2569, 0.00390625
          %v2606 = vmul.f32 %v2572, 0.00390625
          %v2607 = vmul.f32 %v2575, 0.00390625
          %v2608 = vmul.f32 %v2578, 0.00390625
          %v2609 = vmul.f32 %v2581, 0.00390625
          %v2610 = vmul.f32 %v2584, 0.00390625
          %v2611 = vmul.f32 %v2587, 0.00390625
          %v2612 = vmul.f32 %v2590, 0.00390625
          %v2613 = vmul.f32 %v2593, 0.00390625
          %v2614 = vmul.f32 %v2596, 0.00390625
          %v2615 = vmul.f32 %v2599, 0.00390625
          %v2616 = vld [vmem:[%s260] sm:$0xff]
          %v2617 = vld [vmem:[%s260 + $0x8] sm:$0xff]
          %v2618 = vld [vmem:[%s260 + $0x10] sm:$0xff]
          %v2619 = vld [vmem:[%s260 + $0x18] sm:$0xff]
          %v2620 = vld [vmem:[%s260 + $0x20] sm:$0xff]
          %v2621 = vld [vmem:[%s260 + $0x28] sm:$0xff]
          %v2622 = vld [vmem:[%s260 + $0x30] sm:$0xff]
          %v2623 = vld [vmem:[%s260 + $0x38] sm:$0xff]
          %v2624 = vld [vmem:[%s260 + $0x40] sm:$0xff]
          %v2625 = vld [vmem:[%s260 + $0x48] sm:$0xff]
          %v2626 = vld [vmem:[%s260 + $0x50] sm:$0xff]
          %v2627 = vld [vmem:[%s260 + $0x58] sm:$0xff]
          %v2628 = vld [vmem:[%s260 + $0x60] sm:$0xff]
          %v2629 = vld [vmem:[%s260 + $0x68] sm:$0xff]
          %v2630 = vld [vmem:[%s260 + $0x70] sm:$0xff]
          %v2631 = vld [vmem:[%s260 + $0x78] sm:$0xff]
          %v2632 = vmul.f32 %v2616, 0.25
          %v2633 = vmul.f32 %v2617, 0.25
          %v2634 = vmul.f32 %v2618, 0.25
          %v2635 = vmul.f32 %v2619, 0.25
          %v2636 = vmul.f32 %v2620, 0.25
          %v2637 = vmul.f32 %v2621, 0.25
          %v2638 = vmul.f32 %v2622, 0.25
          %v2639 = vmul.f32 %v2623, 0.25
          %v2640 = vmul.f32 %v2624, 0.25
          %v2641 = vmul.f32 %v2625, 0.25
          %v2642 = vmul.f32 %v2626, 0.25
          %v2643 = vmul.f32 %v2627, 0.25
          %v2644 = vmul.f32 %v2628, 0.25
          %v2645 = vmul.f32 %v2629, 0.25
          %v2646 = vmul.f32 %v2630, 0.25
          %v2647 = vmul.f32 %v2631, 0.25
          %v2648 = vmul.f32 %v2616, 0.75
          %v2649 = vmul.f32 %v2617, 0.75
          %v2650 = vmul.f32 %v2618, 0.75
          %v2651 = vmul.f32 %v2619, 0.75
          %v2652 = vmul.f32 %v2620, 0.75
          %v2653 = vmul.f32 %v2621, 0.75
          %v2654 = vmul.f32 %v2622, 0.75
          %v2655 = vmul.f32 %v2623, 0.75
          %v2656 = vmul.f32 %v2624, 0.75
          %v2657 = vmul.f32 %v2625, 0.75
          %v2658 = vmul.f32 %v2626, 0.75
          %v2659 = vmul.f32 %v2627, 0.75
          %v2660 = vmul.f32 %v2628, 0.75
          %v2661 = vmul.f32 %v2629, 0.75
          %v2662 = vmul.f32 %v2630, 0.75
          %v2663 = vmul.f32 %v2631, 0.75
          %2680 = vrot.lane.b32.xlu0 %v2648, 127
          %v2681 = vpop.permute.xlu0 %2680
          %2682 = vrot.lane.b32.xlu0 %v2649, 127
          %v2683 = vpop.permute.xlu0 %2682
          %2684 = vrot.lane.b32.xlu0 %v2650, 127
          %v2685 = vpop.permute.xlu0 %2684
          %2686 = vrot.lane.b32.xlu0 %v2651, 127
          %v2687 = vpop.permute.xlu0 %2686
          %2688 = vrot.lane.b32.xlu0 %v2652, 127
          %v2689 = vpop.permute.xlu0 %2688
          %2690 = vrot.lane.b32.xlu0 %v2653, 127
          %v2691 = vpop.permute.xlu0 %2690
          %2692 = vrot.lane.b32.xlu0 %v2654, 127
          %v2693 = vpop.permute.xlu0 %2692
          %2694 = vrot.lane.b32.xlu0 %v2655, 127
          %v2695 = vpop.permute.xlu0 %2694
          %2696 = vrot.lane.b32.xlu0 %v2656, 127
          %v2697 = vpop.permute.xlu0 %2696
          %2698 = vrot.lane.b32.xlu0 %v2657, 127
          %v2699 = vpop.permute.xlu0 %2698
          %2700 = vrot.lane.b32.xlu0 %v2658, 127
          %v2701 = vpop.permute.xlu0 %2700
          %2702 = vrot.lane.b32.xlu0 %v2659, 127
          %v2703 = vpop.permute.xlu0 %2702
          %2704 = vrot.lane.b32.xlu0 %v2660, 127
          %v2705 = vpop.permute.xlu0 %2704
          %2706 = vrot.lane.b32.xlu0 %v2661, 127
          %v2707 = vpop.permute.xlu0 %2706
          %2708 = vrot.lane.b32.xlu0 %v2662, 127
          %v2709 = vpop.permute.xlu0 %2708
          %2710 = vrot.lane.b32.xlu0 %v2663, 127
          %v2711 = vpop.permute.xlu0 %2710
          %v2728 = vadd.f32 %v2632, %v2681
          %v2729 = vadd.f32 %v2633, %v2683
          %v2730 = vadd.f32 %v2634, %v2685
          %v2731 = vadd.f32 %v2635, %v2687
          %v2732 = vadd.f32 %v2636, %v2689
          %v2733 = vadd.f32 %v2637, %v2691
          %v2734 = vadd.f32 %v2638, %v2693
          %v2735 = vadd.f32 %v2639, %v2695
          %v2736 = vadd.f32 %v2640, %v2697
          %v2737 = vadd.f32 %v2641, %v2699
          %v2738 = vadd.f32 %v2642, %v2701
          %v2739 = vadd.f32 %v2643, %v2703
          %v2740 = vadd.f32 %v2644, %v2705
          %v2741 = vadd.f32 %v2645, %v2707
          %v2742 = vadd.f32 %v2646, %v2709
          %v2743 = vadd.f32 %v2647, %v2711
          %2760 = vrot.lane.b32.xlu0 %v2632, 127
          %v2761 = vpop.permute.xlu0 %2760
          %2762 = vrot.lane.b32.xlu0 %v2633, 127
          %v2763 = vpop.permute.xlu0 %2762
          %2764 = vrot.lane.b32.xlu0 %v2634, 127
          %v2765 = vpop.permute.xlu0 %2764
          %2766 = vrot.lane.b32.xlu0 %v2635, 127
          %v2767 = vpop.permute.xlu0 %2766
          %2768 = vrot.lane.b32.xlu0 %v2636, 127
          %v2769 = vpop.permute.xlu0 %2768
          %2770 = vrot.lane.b32.xlu0 %v2637, 127
          %v2771 = vpop.permute.xlu0 %2770
          %2772 = vrot.lane.b32.xlu0 %v2638, 127
          %v2773 = vpop.permute.xlu0 %2772
          %2774 = vrot.lane.b32.xlu0 %v2639, 127
          %v2775 = vpop.permute.xlu0 %2774
          %2776 = vrot.lane.b32.xlu0 %v2640, 127
          %v2777 = vpop.permute.xlu0 %2776
          %2778 = vrot.lane.b32.xlu0 %v2641, 127
          %v2779 = vpop.permute.xlu0 %2778
          %2780 = vrot.lane.b32.xlu0 %v2642, 127
          %v2781 = vpop.permute.xlu0 %2780
          %2782 = vrot.lane.b32.xlu0 %v2643, 127
          %v2783 = vpop.permute.xlu0 %2782
          %2784 = vrot.lane.b32.xlu0 %v2644, 127
          %v2785 = vpop.permute.xlu0 %2784
          %2786 = vrot.lane.b32.xlu0 %v2645, 127
          %v2787 = vpop.permute.xlu0 %2786
          %2788 = vrot.lane.b32.xlu0 %v2646, 127
          %v2789 = vpop.permute.xlu0 %2788
          %2790 = vrot.lane.b32.xlu0 %v2647, 127
          %v2791 = vpop.permute.xlu0 %2790
          %v2808 = vadd.f32 %v2648, %v2761
          %v2809 = vadd.f32 %v2649, %v2763
          %v2810 = vadd.f32 %v2650, %v2765
          %v2811 = vadd.f32 %v2651, %v2767
          %v2812 = vadd.f32 %v2652, %v2769
          %v2813 = vadd.f32 %v2653, %v2771
          %v2814 = vadd.f32 %v2654, %v2773
          %v2815 = vadd.f32 %v2655, %v2775
          %v2816 = vadd.f32 %v2656, %v2777
          %v2817 = vadd.f32 %v2657, %v2779
          %v2818 = vadd.f32 %v2658, %v2781
          %v2819 = vadd.f32 %v2659, %v2783
          %v2820 = vadd.f32 %v2660, %v2785
          %v2821 = vadd.f32 %v2661, %v2787
          %v2822 = vadd.f32 %v2662, %v2789
          %v2823 = vadd.f32 %v2663, %v2791
          %v2824 = vld [vmem:[#allocation2] sm:$0xff]
          %v2825 = vld [vmem:[#allocation2 + $0x8] sm:$0xff]
          %v2826 = vld [vmem:[#allocation2 + $0x10] sm:$0xff]
          %v2827 = vld [vmem:[#allocation2 + $0x18] sm:$0xff]
          %v2828 = vld [vmem:[#allocation2 + $0x20] sm:$0xff]
          %v2829 = vld [vmem:[#allocation2 + $0x28] sm:$0xff]
          %v2830 = vld [vmem:[#allocation2 + $0x30] sm:$0xff]
          %v2831 = vld [vmem:[#allocation2 + $0x38] sm:$0xff]
          %v2832 = vld [vmem:[#allocation2 + $0x40] sm:$0xff]
          %v2833 = vld [vmem:[#allocation2 + $0x48] sm:$0xff]
          %v2834 = vld [vmem:[#allocation2 + $0x50] sm:$0xff]
          %v2835 = vld [vmem:[#allocation2 + $0x58] sm:$0xff]
          %v2836 = vld [vmem:[#allocation2 + $0x60] sm:$0xff]
          %v2837 = vld [vmem:[#allocation2 + $0x68] sm:$0xff]
          %v2838 = vld [vmem:[#allocation2 + $0x70] sm:$0xff]
          %v2839 = vld [vmem:[#allocation2 + $0x78] sm:$0xff]
          %vm2840 = vcmp.gt.f32.partialorder %v2824, 0.0
          %vm2841 = vcmp.gt.f32.partialorder %v2825, 0.0
          %vm2842 = vcmp.gt.f32.partialorder %v2826, 0.0
          %vm2843 = vcmp.gt.f32.partialorder %v2827, 0.0
          %vm2844 = vcmp.gt.f32.partialorder %v2828, 0.0
          %vm2845 = vcmp.gt.f32.partialorder %v2829, 0.0
          %vm2846 = vcmp.gt.f32.partialorder %v2830, 0.0
          %vm2847 = vcmp.gt.f32.partialorder %v2831, 0.0
          %vm2848 = vcmp.gt.f32.partialorder %v2832, 0.0
          %vm2849 = vcmp.gt.f32.partialorder %v2833, 0.0
          %vm2850 = vcmp.gt.f32.partialorder %v2834, 0.0
          %vm2851 = vcmp.gt.f32.partialorder %v2835, 0.0
          %vm2852 = vcmp.gt.f32.partialorder %v2836, 0.0
          %vm2853 = vcmp.gt.f32.partialorder %v2837, 0.0
          %vm2854 = vcmp.gt.f32.partialorder %v2838, 0.0
          %vm2855 = vcmp.gt.f32.partialorder %v2839, 0.0
          %v2856 = vrcp.pop %v2824
          %v2857 = vmul.f32 1.0, %v2856
          %v2858 = vrcp.pop %v2825
          %v2859 = vmul.f32 1.0, %v2858
          %v2860 = vrcp.pop %v2826
          %v2861 = vmul.f32 1.0, %v2860
          %v2862 = vrcp.pop %v2827
          %v2863 = vmul.f32 1.0, %v2862
          %v2864 = vrcp.pop %v2828
          %v2865 = vmul.f32 1.0, %v2864
          %v2866 = vrcp.pop %v2829
          %v2867 = vmul.f32 1.0, %v2866
          %v2868 = vrcp.pop %v2830
          %v2869 = vmul.f32 1.0, %v2868
          %v2870 = vrcp.pop %v2831
          %v2871 = vmul.f32 1.0, %v2870
          %v2872 = vrcp.pop %v2832
          %v2873 = vmul.f32 1.0, %v2872
          %v2874 = vrcp.pop %v2833
          %v2875 = vmul.f32 1.0, %v2874
          %v2876 = vrcp.pop %v2834
          %v2877 = vmul.f32 1.0, %v2876
          %v2878 = vrcp.pop %v2835
          %v2879 = vmul.f32 1.0, %v2878
          %v2880 = vrcp.pop %v2836
          %v2881 = vmul.f32 1.0, %v2880
          %v2882 = vrcp.pop %v2837
          %v2883 = vmul.f32 1.0, %v2882
          %v2884 = vrcp.pop %v2838
          %v2885 = vmul.f32 1.0, %v2884
          %v2886 = vrcp.pop %v2839
          %v2887 = vmul.f32 1.0, %v2886
          %v2888 = vsel %vm2840, %v2857, 0.0
          %v2889 = vsel %vm2841, %v2859, 0.0
          %v2890 = vsel %vm2842, %v2861, 0.0
          %v2891 = vsel %vm2843, %v2863, 0.0
          %v2892 = vsel %vm2844, %v2865, 0.0
          %v2893 = vsel %vm2845, %v2867, 0.0
          %v2894 = vsel %vm2846, %v2869, 0.0
          %v2895 = vsel %vm2847, %v2871, 0.0
          %v2896 = vsel %vm2848, %v2873, 0.0
          %v2897 = vsel %vm2849, %v2875, 0.0
          %v2898 = vsel %vm2850, %v2877, 0.0
          %v2899 = vsel %vm2851, %v2879, 0.0
          %v2900 = vsel %vm2852, %v2881, 0.0
          %v2901 = vsel %vm2853, %v2883, 0.0
          %v2902 = vsel %vm2854, %v2885, 0.0
          %v2903 = vsel %vm2855, %v2887, 0.0
          %2905 = vset.pattern.permute.xlu0 15
          %2906 = vperm.xlu0 %2905, %v2888
          %v2907 = vpop.permute.xlu0 %2906
          %2910 = vset.pattern.permute.xlu0 15
          %2911 = vperm.xlu0 %2910, %v2889
          %v2912 = vpop.permute.xlu0 %2911
          %2915 = vset.pattern.permute.xlu0 15
          %2916 = vperm.xlu0 %2915, %v2890
          %v2917 = vpop.permute.xlu0 %2916
          %2920 = vset.pattern.permute.xlu0 15
          %2921 = vperm.xlu0 %2920, %v2891
          %v2922 = vpop.permute.xlu0 %2921
          %2925 = vset.pattern.permute.xlu0 15
          %2926 = vperm.xlu0 %2925, %v2892
          %v2927 = vpop.permute.xlu0 %2926
          %2930 = vset.pattern.permute.xlu0 15
          %2931 = vperm.xlu0 %2930, %v2893
          %v2932 = vpop.permute.xlu0 %2931
          %2935 = vset.pattern.permute.xlu0 15
          %2936 = vperm.xlu0 %2935, %v2894
          %v2937 = vpop.permute.xlu0 %2936
          %2940 = vset.pattern.permute.xlu0 15
          %2941 = vperm.xlu0 %2940, %v2895
          %v2942 = vpop.permute.xlu0 %2941
          %2945 = vset.pattern.permute.xlu0 15
          %2946 = vperm.xlu0 %2945, %v2896
          %v2947 = vpop.permute.xlu0 %2946
          %2950 = vset.pattern.permute.xlu0 15
          %2951 = vperm.xlu0 %2950, %v2897
          %v2952 = vpop.permute.xlu0 %2951
          %2955 = vset.pattern.permute.xlu0 15
          %2956 = vperm.xlu0 %2955, %v2898
          %v2957 = vpop.permute.xlu0 %2956
          %2960 = vset.pattern.permute.xlu0 15
          %2961 = vperm.xlu0 %2960, %v2899
          %v2962 = vpop.permute.xlu0 %2961
          %2965 = vset.pattern.permute.xlu0 15
          %2966 = vperm.xlu0 %2965, %v2900
          %v2967 = vpop.permute.xlu0 %2966
          %2970 = vset.pattern.permute.xlu0 15
          %2971 = vperm.xlu0 %2970, %v2901
          %v2972 = vpop.permute.xlu0 %2971
          %2975 = vset.pattern.permute.xlu0 15
          %2976 = vperm.xlu0 %2975, %v2902
          %v2977 = vpop.permute.xlu0 %2976
          %2980 = vset.pattern.permute.xlu0 15
          %2981 = vperm.xlu0 %2980, %v2903
          %v2982 = vpop.permute.xlu0 %2981
          %v2984 = vmul.f32 %v2824, %v2907
          %v2985 = vmul.f32 %v2825, %v2912
          %v2986 = vmul.f32 %v2826, %v2917
          %v2987 = vmul.f32 %v2827, %v2922
          %v2988 = vmul.f32 %v2828, %v2927
          %v2989 = vmul.f32 %v2829, %v2932
          %v2990 = vmul.f32 %v2830, %v2937
          %v2991 = vmul.f32 %v2831, %v2942
          %v2992 = vmul.f32 %v2832, %v2947
          %v2993 = vmul.f32 %v2833, %v2952
          %v2994 = vmul.f32 %v2834, %v2957
          %v2995 = vmul.f32 %v2835, %v2962
          %v2996 = vmul.f32 %v2836, %v2967
          %v2997 = vmul.f32 %v2837, %v2972
          %v2998 = vmul.f32 %v2838, %v2977
          %v2999 = vmul.f32 %v2839, %v2982
          %v3000 = vlaneseq
          %v3001 = vand.u32 %v3000, 127
          %vm3002 = vcmp.eq.s32.totalorder %v3001, 0
          %v3003 = vsel %vm3002, %v1672, %v2984
          %v3004 = vsel %vm3002, %v1673, %v2985
          %v3005 = vsel %vm3002, %v1674, %v2986
          %v3006 = vsel %vm3002, %v1675, %v2987
          %v3007 = vsel %vm3002, %v1676, %v2988
          %v3008 = vsel %vm3002, %v1677, %v2989
          %v3009 = vsel %vm3002, %v1678, %v2990
          %v3010 = vsel %vm3002, %v1679, %v2991
          %v3011 = vsel %vm3002, %v1680, %v2992
          %v3012 = vsel %vm3002, %v1681, %v2993
          %v3013 = vsel %vm3002, %v1682, %v2994
          %v3014 = vsel %vm3002, %v1683, %v2995
          %v3015 = vsel %vm3002, %v1684, %v2996
          %v3016 = vsel %vm3002, %v1685, %v2997
          %v3017 = vsel %vm3002, %v1686, %v2998
          %v3018 = vsel %vm3002, %v1687, %v2999
          %vm3019 = vcmp.eq.s32.totalorder %v3001, 1
          %v3020 = vsel %vm3019, %v1982, %v3003
          %v3021 = vsel %vm3019, %v1989, %v3004
          %v3022 = vsel %vm3019, %v1996, %v3005
          %v3023 = vsel %vm3019, %v2003, %v3006
          %v3024 = vsel %vm3019, %v2010, %v3007
          %v3025 = vsel %vm3019, %v2017, %v3008
          %v3026 = vsel %vm3019, %v2024, %v3009
          %v3027 = vsel %vm3019, %v2031, %v3010
          %v3028 = vsel %vm3019, %v2038, %v3011
          %v3029 = vsel %vm3019, %v2045, %v3012
          %v3030 = vsel %vm3019, %v2052, %v3013
          %v3031 = vsel %vm3019, %v2059, %v3014
          %v3032 = vsel %vm3019, %v2066, %v3015
          %v3033 = vsel %vm3019, %v2073, %v3016
          %v3034 = vsel %vm3019, %v2080, %v3017
          %v3035 = vsel %vm3019, %v2087, %v3018
          %vm3036 = vcmp.eq.s32.totalorder %v3001, 2
          %v3037 = vsel %vm3036, %v2200, %v3020
          %v3038 = vsel %vm3036, %v2201, %v3021
          %v3039 = vsel %vm3036, %v2202, %v3022
          %v3040 = vsel %vm3036, %v2203, %v3023
          %v3041 = vsel %vm3036, %v2204, %v3024
          %v3042 = vsel %vm3036, %v2205, %v3025
          %v3043 = vsel %vm3036, %v2206, %v3026
          %v3044 = vsel %vm3036, %v2207, %v3027
          %v3045 = vsel %vm3036, %v2208, %v3028
          %v3046 = vsel %vm3036, %v2209, %v3029
          %v3047 = vsel %vm3036, %v2210, %v3030
          %v3048 = vsel %vm3036, %v2211, %v3031
          %v3049 = vsel %vm3036, %v2212, %v3032
          %v3050 = vsel %vm3036, %v2213, %v3033
          %v3051 = vsel %vm3036, %v2214, %v3034
          %v3052 = vsel %vm3036, %v2215, %v3035
          %vm3053 = vcmp.eq.s32.totalorder %v3001, 3
          %v3054 = vsel %vm3053, %v2264, %v3037
          %v3055 = vsel %vm3053, %v2265, %v3038
          %v3056 = vsel %vm3053, %v2266, %v3039
          %v3057 = vsel %vm3053, %v2267, %v3040
          %v3058 = vsel %vm3053, %v2268, %v3041
          %v3059 = vsel %vm3053, %v2269, %v3042
          %v3060 = vsel %vm3053, %v2270, %v3043
          %v3061 = vsel %vm3053, %v2271, %v3044
          %v3062 = vsel %vm3053, %v2272, %v3045
          %v3063 = vsel %vm3053, %v2273, %v3046
          %v3064 = vsel %vm3053, %v2274, %v3047
          %v3065 = vsel %vm3053, %v2275, %v3048
          %v3066 = vsel %vm3053, %v2276, %v3049
          %v3067 = vsel %vm3053, %v2277, %v3050
          %v3068 = vsel %vm3053, %v2278, %v3051
          %v3069 = vsel %vm3053, %v2279, %v3052
          %vm3070 = vcmp.eq.s32.totalorder %v3001, 4
          %3072 = vset.pattern.permute.xlu0 0
          %3073 = vperm.xlu0 %3072, %v2616
          %v3074 = vpop.permute.xlu0 %3073
          %3077 = vset.pattern.permute.xlu0 0
          %3078 = vperm.xlu0 %3077, %v2617
          %v3079 = vpop.permute.xlu0 %3078
          %3082 = vset.pattern.permute.xlu0 0
          %3083 = vperm.xlu0 %3082, %v2618
          %v3084 = vpop.permute.xlu0 %3083
          %3087 = vset.pattern.permute.xlu0 0
          %3088 = vperm.xlu0 %3087, %v2619
          %v3089 = vpop.permute.xlu0 %3088
          %3092 = vset.pattern.permute.xlu0 0
          %3093 = vperm.xlu0 %3092, %v2620
          %v3094 = vpop.permute.xlu0 %3093
          %3097 = vset.pattern.permute.xlu0 0
          %3098 = vperm.xlu0 %3097, %v2621
          %v3099 = vpop.permute.xlu0 %3098
          %3102 = vset.pattern.permute.xlu0 0
          %3103 = vperm.xlu0 %3102, %v2622
          %v3104 = vpop.permute.xlu0 %3103
          %3107 = vset.pattern.permute.xlu0 0
          %3108 = vperm.xlu0 %3107, %v2623
          %v3109 = vpop.permute.xlu0 %3108
          %3112 = vset.pattern.permute.xlu0 0
          %3113 = vperm.xlu0 %3112, %v2624
          %v3114 = vpop.permute.xlu0 %3113
          %3117 = vset.pattern.permute.xlu0 0
          %3118 = vperm.xlu0 %3117, %v2625
          %v3119 = vpop.permute.xlu0 %3118
          %3122 = vset.pattern.permute.xlu0 0
          %3123 = vperm.xlu0 %3122, %v2626
          %v3124 = vpop.permute.xlu0 %3123
          %3127 = vset.pattern.permute.xlu0 0
          %3128 = vperm.xlu0 %3127, %v2627
          %v3129 = vpop.permute.xlu0 %3128
          %3132 = vset.pattern.permute.xlu0 0
          %3133 = vperm.xlu0 %3132, %v2628
          %v3134 = vpop.permute.xlu0 %3133
          %3137 = vset.pattern.permute.xlu0 0
          %3138 = vperm.xlu0 %3137, %v2629
          %v3139 = vpop.permute.xlu0 %3138
          %3142 = vset.pattern.permute.xlu0 0
          %3143 = vperm.xlu0 %3142, %v2630
          %v3144 = vpop.permute.xlu0 %3143
          %3147 = vset.pattern.permute.xlu0 0
          %3148 = vperm.xlu0 %3147, %v2631
          %v3149 = vpop.permute.xlu0 %3148
          %v3151 = vsel %vm3070, %v3074, %v3054
          %v3152 = vsel %vm3070, %v3079, %v3055
          %v3153 = vsel %vm3070, %v3084, %v3056
          %v3154 = vsel %vm3070, %v3089, %v3057
          %v3155 = vsel %vm3070, %v3094, %v3058
          %v3156 = vsel %vm3070, %v3099, %v3059
          %v3157 = vsel %vm3070, %v3104, %v3060
          %v3158 = vsel %vm3070, %v3109, %v3061
          %v3159 = vsel %vm3070, %v3114, %v3062
          %v3160 = vsel %vm3070, %v3119, %v3063
          %v3161 = vsel %vm3070, %v3124, %v3064
          %v3162 = vsel %vm3070, %v3129, %v3065
          %v3163 = vsel %vm3070, %v3134, %v3066
          %v3164 = vsel %vm3070, %v3139, %v3067
          %v3165 = vsel %vm3070, %v3144, %v3068
          %v3166 = vsel %vm3070, %v3149, %v3069
          %vm3167 = vcmp.eq.s32.totalorder %v3001, 5
          %3169 = vset.pattern.permute.xlu0 1
          %3170 = vperm.xlu0 %3169, %v2728
          %v3171 = vpop.permute.xlu0 %3170
          %3174 = vset.pattern.permute.xlu0 1
          %3175 = vperm.xlu0 %3174, %v2729
          %v3176 = vpop.permute.xlu0 %3175
          %3179 = vset.pattern.permute.xlu0 1
          %3180 = vperm.xlu0 %3179, %v2730
          %v3181 = vpop.permute.xlu0 %3180
          %3184 = vset.pattern.permute.xlu0 1
          %3185 = vperm.xlu0 %3184, %v2731
          %v3186 = vpop.permute.xlu0 %3185
          %3189 = vset.pattern.permute.xlu0 1
          %3190 = vperm.xlu0 %3189, %v2732
          %v3191 = vpop.permute.xlu0 %3190
          %3194 = vset.pattern.permute.xlu0 1
          %3195 = vperm.xlu0 %3194, %v2733
          %v3196 = vpop.permute.xlu0 %3195
          %3199 = vset.pattern.permute.xlu0 1
          %3200 = vperm.xlu0 %3199, %v2734
          %v3201 = vpop.permute.xlu0 %3200
          %3204 = vset.pattern.permute.xlu0 1
          %3205 = vperm.xlu0 %3204, %v2735
          %v3206 = vpop.permute.xlu0 %3205
          %3209 = vset.pattern.permute.xlu0 1
          %3210 = vperm.xlu0 %3209, %v2736
          %v3211 = vpop.permute.xlu0 %3210
          %3214 = vset.pattern.permute.xlu0 1
          %3215 = vperm.xlu0 %3214, %v2737
          %v3216 = vpop.permute.xlu0 %3215
          %3219 = vset.pattern.permute.xlu0 1
          %3220 = vperm.xlu0 %3219, %v2738
          %v3221 = vpop.permute.xlu0 %3220
          %3224 = vset.pattern.permute.xlu0 1
          %3225 = vperm.xlu0 %3224, %v2739
          %v3226 = vpop.permute.xlu0 %3225
          %3229 = vset.pattern.permute.xlu0 1
          %3230 = vperm.xlu0 %3229, %v2740
          %v3231 = vpop.permute.xlu0 %3230
          %3234 = vset.pattern.permute.xlu0 1
          %3235 = vperm.xlu0 %3234, %v2741
          %v3236 = vpop.permute.xlu0 %3235
          %3239 = vset.pattern.permute.xlu0 1
          %3240 = vperm.xlu0 %3239, %v2742
          %v3241 = vpop.permute.xlu0 %3240
          %3244 = vset.pattern.permute.xlu0 1
          %3245 = vperm.xlu0 %3244, %v2743
          %v3246 = vpop.permute.xlu0 %3245
          %v3248 = vsel %vm3167, %v3171, %v3151
          %v3249 = vsel %vm3167, %v3176, %v3152
          %v3250 = vsel %vm3167, %v3181, %v3153
          %v3251 = vsel %vm3167, %v3186, %v3154
          %v3252 = vsel %vm3167, %v3191, %v3155
          %v3253 = vsel %vm3167, %v3196, %v3156
          %v3254 = vsel %vm3167, %v3201, %v3157
          %v3255 = vsel %vm3167, %v3206, %v3158
          %v3256 = vsel %vm3167, %v3211, %v3159
          %v3257 = vsel %vm3167, %v3216, %v3160
          %v3258 = vsel %vm3167, %v3221, %v3161
          %v3259 = vsel %vm3167, %v3226, %v3162
          %v3260 = vsel %vm3167, %v3231, %v3163
          %v3261 = vsel %vm3167, %v3236, %v3164
          %v3262 = vsel %vm3167, %v3241, %v3165
          %v3263 = vsel %vm3167, %v3246, %v3166
          %vm3264 = vcmp.eq.s32.totalorder %v3001, 6
          %3266 = vset.pattern.permute.xlu0 3
          %3267 = vperm.xlu0 %3266, %v2808
          %v3268 = vpop.permute.xlu0 %3267
          %3271 = vset.pattern.permute.xlu0 3
          %3272 = vperm.xlu0 %3271, %v2809
          %v3273 = vpop.permute.xlu0 %3272
          %3276 = vset.pattern.permute.xlu0 3
          %3277 = vperm.xlu0 %3276, %v2810
          %v3278 = vpop.permute.xlu0 %3277
          %3281 = vset.pattern.permute.xlu0 3
          %3282 = vperm.xlu0 %3281, %v2811
          %v3283 = vpop.permute.xlu0 %3282
          %3286 = vset.pattern.permute.xlu0 3
          %3287 = vperm.xlu0 %3286, %v2812
          %v3288 = vpop.permute.xlu0 %3287
          %3291 = vset.pattern.permute.xlu0 3
          %3292 = vperm.xlu0 %3291, %v2813
          %v3293 = vpop.permute.xlu0 %3292
          %3296 = vset.pattern.permute.xlu0 3
          %3297 = vperm.xlu0 %3296, %v2814
          %v3298 = vpop.permute.xlu0 %3297
          %3301 = vset.pattern.permute.xlu0 3
          %3302 = vperm.xlu0 %3301, %v2815
          %v3303 = vpop.permute.xlu0 %3302
          %3306 = vset.pattern.permute.xlu0 3
          %3307 = vperm.xlu0 %3306, %v2816
          %v3308 = vpop.permute.xlu0 %3307
          %3311 = vset.pattern.permute.xlu0 3
          %3312 = vperm.xlu0 %3311, %v2817
          %v3313 = vpop.permute.xlu0 %3312
          %3316 = vset.pattern.permute.xlu0 3
          %3317 = vperm.xlu0 %3316, %v2818
          %v3318 = vpop.permute.xlu0 %3317
          %3321 = vset.pattern.permute.xlu0 3
          %3322 = vperm.xlu0 %3321, %v2819
          %v3323 = vpop.permute.xlu0 %3322
          %3326 = vset.pattern.permute.xlu0 3
          %3327 = vperm.xlu0 %3326, %v2820
          %v3328 = vpop.permute.xlu0 %3327
          %3331 = vset.pattern.permute.xlu0 3
          %3332 = vperm.xlu0 %3331, %v2821
          %v3333 = vpop.permute.xlu0 %3332
          %3336 = vset.pattern.permute.xlu0 3
          %3337 = vperm.xlu0 %3336, %v2822
          %v3338 = vpop.permute.xlu0 %3337
          %3341 = vset.pattern.permute.xlu0 3
          %3342 = vperm.xlu0 %3341, %v2823
          %v3343 = vpop.permute.xlu0 %3342
          %v3345 = vsel %vm3264, %v3268, %v3248
          %v3346 = vsel %vm3264, %v3273, %v3249
          %v3347 = vsel %vm3264, %v3278, %v3250
          %v3348 = vsel %vm3264, %v3283, %v3251
          %v3349 = vsel %vm3264, %v3288, %v3252
          %v3350 = vsel %vm3264, %v3293, %v3253
          %v3351 = vsel %vm3264, %v3298, %v3254
          %v3352 = vsel %vm3264, %v3303, %v3255
          %v3353 = vsel %vm3264, %v3308, %v3256
          %v3354 = vsel %vm3264, %v3313, %v3257
          %v3355 = vsel %vm3264, %v3318, %v3258
          %v3356 = vsel %vm3264, %v3323, %v3259
          %v3357 = vsel %vm3264, %v3328, %v3260
          %v3358 = vsel %vm3264, %v3333, %v3261
          %v3359 = vsel %vm3264, %v3338, %v3262
          %v3360 = vsel %vm3264, %v3343, %v3263
          %vm3361 = vcmp.eq.s32.totalorder %v3001, 7
          %v3362 = vsel %vm3361, %v2334, %v3345
          %v3363 = vsel %vm3361, %v2341, %v3346
          %v3364 = vsel %vm3361, %v2348, %v3347
          %v3365 = vsel %vm3361, %v2355, %v3348
          %v3366 = vsel %vm3361, %v2362, %v3349
          %v3367 = vsel %vm3361, %v2369, %v3350
          %v3368 = vsel %vm3361, %v2376, %v3351
          %v3369 = vsel %vm3361, %v2383, %v3352
          %v3370 = vsel %vm3361, %v2390, %v3353
          %v3371 = vsel %vm3361, %v2397, %v3354
          %v3372 = vsel %vm3361, %v2404, %v3355
          %v3373 = vsel %vm3361, %v2411, %v3356
          %v3374 = vsel %vm3361, %v2418, %v3357
          %v3375 = vsel %vm3361, %v2425, %v3358
          %v3376 = vsel %vm3361, %v2432, %v3359
          %v3377 = vsel %vm3361, %v2439, %v3360
          %vm3378 = vcmp.eq.s32.totalorder %v3001, 14
          %v3379 = vsel %vm3378, %v2600, %v3362
          %v3380 = vsel %vm3378, %v2601, %v3363
          %v3381 = vsel %vm3378, %v2602, %v3364
          %v3382 = vsel %vm3378, %v2603, %v3365
          %v3383 = vsel %vm3378, %v2604, %v3366
          %v3384 = vsel %vm3378, %v2605, %v3367
          %v3385 = vsel %vm3378, %v2606, %v3368
          %v3386 = vsel %vm3378, %v2607, %v3369
          %v3387 = vsel %vm3378, %v2608, %v3370
          %v3388 = vsel %vm3378, %v2609, %v3371
          %v3389 = vsel %vm3378, %v2610, %v3372
          %v3390 = vsel %vm3378, %v2611, %v3373
          %v3391 = vsel %vm3378, %v2612, %v3374
          %v3392 = vsel %vm3378, %v2613, %v3375
          %v3393 = vsel %vm3378, %v2614, %v3376
          %v3394 = vsel %vm3378, %v2615, %v3377
          %3395 = vst [vmem:[%s297] sm:$0xff] %v3379
          %3396 = vst [vmem:[%s297 + $0x8] sm:$0xff] %v3380
          %3397 = vst [vmem:[%s297 + $0x10] sm:$0xff] %v3381
          %3398 = vst [vmem:[%s297 + $0x18] sm:$0xff] %v3382
          %3399 = vst [vmem:[%s297 + $0x20] sm:$0xff] %v3383
          %3400 = vst [vmem:[%s297 + $0x28] sm:$0xff] %v3384
          %3401 = vst [vmem:[%s297 + $0x30] sm:$0xff] %v3385
          %3402 = vst [vmem:[%s297 + $0x38] sm:$0xff] %v3386
          %3403 = vst [vmem:[%s297 + $0x40] sm:$0xff] %v3387
          %3404 = vst [vmem:[%s297 + $0x48] sm:$0xff] %v3388
          %3405 = vst [vmem:[%s297 + $0x50] sm:$0xff] %v3389
          %3406 = vst [vmem:[%s297 + $0x58] sm:$0xff] %v3390
          %3407 = vst [vmem:[%s297 + $0x60] sm:$0xff] %v3391
          %3408 = vst [vmem:[%s297 + $0x68] sm:$0xff] %v3392
          %3409 = vst [vmem:[%s297 + $0x70] sm:$0xff] %v3393
          %3410 = vst [vmem:[%s297 + $0x78] sm:$0xff] %v3394
        $region60: #{tpu_custom_call.1} parent=35 // pred_fallthru
          _
        %s3411 = sand.u32 %s139, 1
        %s3412 = scalar_lea.sflag [#allocation5], %s3411
        %s3413 = sand.u32 %s139, 1
        %s3414 = smul.addr %s3413, 128
        %s3415 = scalar_lea.vmem [#allocation11], %s3414
        // Predicated region
        $region61: #{tpu_custom_call.1} parent=35 // pred_check
          %p3416 = pneg %p149
        $region62: #{tpu_custom_call.1} parent=35 // pred_check_branch
          %3418 = sbr.rel (%p3416) target = $region64
        $region63: #{tpu_custom_call.1} parent=35 // pred_region
          %s3419 = smul.u32 16, %s29
          %s3421 = ssub.s32 2048, 2048
          %3422 = vsyncadd %s3412, %s3421
          %s3423 = smul.addr %s3419, 128
          %s3424 = scalar_lea.hbm %s4, %s3423
          %s3425 = sshll.u32 %s3415, 4
          %s3426 = int_to_ptr.vmem [resolvable:$true] %s3425
          %3431 = dma.vmem_to_hbm [thread:$0]  %s3426, 2048, %s3424, %s3412, 128, 128, 8
        $region64: #{tpu_custom_call.1} parent=35 // pred_fallthru
          _
      $region36: #{tpu_custom_call.1} parent=5 // pred_fallthru
        _
      %p3432 = scmp.le.s32.totalorder 2, %s20
      // Predicated region
      $region65: #{tpu_custom_call.1} parent=5 // pred_check
        %p3433 = pneg %p3432
      $region66: #{tpu_custom_call.1} parent=5 // pred_check_branch
        %3435 = sbr.rel (%p3433) target = $region68
      $region67: #{tpu_custom_call.1} parent=5 // pred_region
        %s3436 = ssub.s32 %s20, 2
        // Predicated region
        $region69: #{tpu_custom_call.1} parent=67 // pred_check
          %p3437 = pneg %p155
        $region70: #{tpu_custom_call.1} parent=67 // pred_check_branch
          %3439 = sbr.rel (%p3437) target = $region72
        $region71: #{tpu_custom_call.1} parent=67 // pred_region
          %s3440 = sand.u32 %s140, 1
          %s3441 = scalar_lea.sflag [#allocation5], %s3440
          %s3442 = sand.u32 %s140, 1
          %s3443 = smul.addr %s3442, 128
          %s3444 = scalar_lea.vmem [#allocation11], %s3443
          %3445 = dma.done %s3441, 2048
        $region72: #{tpu_custom_call.1} parent=67 // pred_fallthru
          _
      $region68: #{tpu_custom_call.1} parent=5 // pred_fallthru
        _
    $region6: #{tpu_custom_call.1} parent=1 // loop_footer
      %s24 = sadd.s32 1, %s20
    $region7: #{tpu_custom_call.1} parent=1 // loop_footer_branch
      %19 = sbr.rel target = $region3
    $region8: #{tpu_custom_call.1} parent=1 // loop_exit
      _
    %3446 = vsyncpa [#allocation4], 1
    %s3447 = scalar_lea.sflag [#allocation4], 1
    %3448 = vsyncpa %s3447, 1
    %3449 = vsyncpa [#allocation7], 1
    %s3450 = scalar_lea.sflag [#allocation7], 1
    %3451 = vsyncpa %s3450, 1
    %3452 = vsyncpa [#allocation10], 1
    %3453 = vsyncpa [#allocation5], 1
    %s3454 = scalar_lea.sflag [#allocation5], 1
    %3455 = vsyncpa %s3454, 1

</llo_original>
